<compile_context>
chip_gen: v6e
topology: v6e:2x2x1
jax: 0.10.0
libtpu: 0.0.40
codegen_flags: <defaults>
</compile_context>

<pallas_src>
import functools

import jax
import jax.numpy as jnp
from jax import lax
from jax.experimental import pallas as pl
from jax.experimental.pallas import tpu as pltpu


def _d_adv_kernel(x_ref, w_ref, b_ref, o_ref, *, H, W, OH, OW, KH, KW):
    # x_ref: (1, C, H*W) bf16  -- one batch element, channel-major, lane-dense
    # w_ref: (KH*KW, C)  bf16  -- row j = ky*KW + kx holds w[0, :, ky, kx]
    # b_ref: (1, 1)      f32   -- conv bias (single output channel)
    # o_ref: (1, OH, OW) f32   -- valid-conv output map for this batch element
    KJ = KH * KW
    w = w_ref[...]

    # Phase 1 (MXU): per input row h, all 16 tap responses in one matmul:
    #   taps[h] = Wmat (KJ, C) @ x[:, h, :] (C, W)  -> (KJ, W), f32 accumulate.
    # Computed lazily (memoized) so only ~KH row-responses are live at a time.
    taps = [None] * H

    def tap(h):
        if taps[h] is None:
            xrow = x_ref[0, :, h * W:(h + 1) * W]          # (C, W)
            taps[h] = jnp.dot(w, xrow, preferred_element_type=jnp.float32)
        return taps[h]

    # Phase 2 (VPU): valid 4x4 window accumulation, one output row at a time.
    # OH*KH*KW tiny slice-adds; negligible next to the matmuls at these sizes.
    rows = []
    for oh in range(OH):
        row = None
        for ky in range(KH):
            rk = tap(oh + ky)                              # (KJ, W) f32
            for kx in range(KW):
                j = ky * KW + kx
                contrib = rk[j:j + 1, kx:kx + OW]          # (1, OW)
                row = contrib if row is None else row + contrib
        rows.append(row)

    o_ref[0, :, :] = jnp.concatenate(rows, axis=0) + b_ref[...]


def d_adv_forward(img_feature, weight, bias, *, use_bf16=True):
    """Conv2d(C -> 1, 4x4, stride 1, valid padding) + bias, then squeeze(1)."""
    B, C, H, W = img_feature.shape
    Cout, Cin, KH, KW = weight.shape
    assert Cout == 1 and Cin == C and H >= KH and W >= KW
    OH, OW = H - KH + 1, W - KW + 1

    # Free, contiguous reshape: NCHW -> (B, C, H*W); H*W becomes the lane axis.
    xf = img_feature.reshape(B, C, H * W)
    # (1, C, KH, KW) -> (KH, KW, C) -> (KH*KW, C); row j=ky*KW+kx, column c.
    wmat = jnp.transpose(weight[0], (1, 2, 0)).reshape(KH * KW, C)
    if use_bf16:  # bf16 MXU operands, f32 accumulation inside the kernel.
        xf = xf.astype(jnp.bfloat16)
        wmat = wmat.astype(jnp.bfloat16)
    b2 = bias.reshape(1, 1).astype(jnp.float32)

    kern = functools.partial(_d_adv_kernel, H=H, W=W, OH=OH, OW=OW, KH=KH, KW=KW)
    return pl.pallas_call(
        kern,
        out_shape=jax.ShapeDtypeStruct((B, OH, OW), jnp.float32),
        grid_spec=pltpu.PrefetchScalarGridSpec(
            num_scalar_prefetch=0,
            grid=(B,),
            in_specs=[
                pl.BlockSpec((1, C, H * W), lambda b: (b, 0, 0)),
                pl.BlockSpec((KH * KW, C), lambda b: (0, 0)),   # tiny, resident
                pl.BlockSpec((1, 1), lambda b: (0, 0)),
            ],
            out_specs=pl.BlockSpec((1, OH, OW), lambda b: (b, 0, 0)),
        ),
        compiler_params=pltpu.CompilerParams(
            dimension_semantics=("parallel",)),
    )(xf, wmat, b2)


def reference(img_feature, weight, bias):
    y = lax.conv_general_dilated(
        img_feature, weight, window_strides=(1, 1), padding="VALID",
        dimension_numbers=("NCHW", "OIHW", "NCHW"),
        precision=lax.Precision.HIGHEST)
    return y[:, 0, :, :] + bias[0]


if __name__ == "__main__":
    key = jax.random.PRNGKey(0)
    kx, kw, kb = jax.random.split(key, 3)
    # Conv2d(512, 1, 4) fixes the channel count at 512; keep batch/spatial small.
    B, C, H, W = 2, 512, 16, 16
    x = jax.random.normal(kx, (B, C, H, W), jnp.float32)
    weight = 0.02 * jax.random.normal(kw, (1, C, 4, 4), jnp.float32)
    bias = 0.1 * jax.random.normal(kb, (1,), jnp.float32)

    out = d_adv_forward(x, weight, bias)
    out = jax.block_until_ready(out)
    assert out.shape == (B, H - 3, W - 3), out.shape

    ref = reference(x, weight, bias)
    max_err = float(jnp.max(jnp.abs(out - ref)))
    assert jnp.allclose(out, ref, rtol=3e-2, atol=3e-2), max_err
    print("KERNEL_OK")
</pallas_src>

<mosaic_0001>
module attributes {stable_mosaic.version = 11 : i64} {
  func.func @_d_adv_kernel(%arg0: i32, %arg1: memref<1x512x256xbf16, #tpu.memory_space<vmem>>, %arg2: memref<16x512xbf16, #tpu.memory_space<vmem>>, %arg3: memref<1x1xf32, #tpu.memory_space<vmem>>, %arg4: memref<1x13x13xf32, #tpu.memory_space<vmem>>) attributes {dimension_semantics = [#tpu.dimension_semantics<parallel>], iteration_bounds = array<i64: 2>, scalar_prefetch = 0 : i64, scratch_operands = 0 : i64, tpu.core_type = #tpu.core_type<tc>, window_params = [{transform_indices = @transform_0, window_bounds = array<i64: 1, 512, 256>}, {pipeline_mode = #tpu.pipeline_mode<synchronous>, transform_indices = @transform_1, window_bounds = array<i64: 16, 512>}, {pipeline_mode = #tpu.pipeline_mode<synchronous>, transform_indices = @transform_2, window_bounds = array<i64: 1, 1>}, {transform_indices = @transform_3, window_bounds = array<i64: 1, 13, 13>}]} {
    %c0 = arith.constant 0 : index
    %c0_0 = arith.constant 0 : index
    %0 = vector.load %arg2[%c0, %c0_0] : memref<16x512xbf16, #tpu.memory_space<vmem>>, vector<16x512xbf16>
    %c0_1 = arith.constant 0 : index
    %c0_2 = arith.constant 0 : index
    %c0_3 = arith.constant 0 : index
    %1 = vector.load %arg1[%c0_1, %c0_2, %c0_3] : memref<1x512x256xbf16, #tpu.memory_space<vmem>>, vector<1x512x16xbf16>
    %2 = vector.shape_cast %1 : vector<1x512x16xbf16> to vector<512x16xbf16>
    %cst = arith.constant dense<0.000000e+00> : vector<16x16xf32>
    %3 = tpu.matmul %0, %2, %cst {dimension_numbers = #tpu.dot_dimension_numbers<[1], [0], [0], [1], [0, 0, 1, 1], [], []>} : vector<16x512xbf16>, vector<512x16xbf16>, vector<16x16xf32> -> vector<16x16xf32>
    %4 = vector.extract_strided_slice %3 {offsets = [0, 0], sizes = [1, 13], strides = [1, 1]} : vector<16x16xf32> to vector<1x13xf32>
    %5 = vector.extract_strided_slice %3 {offsets = [1, 1], sizes = [1, 13], strides = [1, 1]} : vector<16x16xf32> to vector<1x13xf32>
    %6 = arith.addf %4, %5 : vector<1x13xf32>
    %7 = vector.extract_strided_slice %3 {offsets = [2, 2], sizes = [1, 13], strides = [1, 1]} : vector<16x16xf32> to vector<1x13xf32>
    %8 = arith.addf %6, %7 : vector<1x13xf32>
    %9 = vector.extract_strided_slice %3 {offsets = [3, 3], sizes = [1, 13], strides = [1, 1]} : vector<16x16xf32> to vector<1x13xf32>
    %10 = arith.addf %8, %9 : vector<1x13xf32>
    %c0_4 = arith.constant 0 : index
    %c0_5 = arith.constant 0 : index
    %c16 = arith.constant 16 : index
    %11 = vector.load %arg1[%c0_4, %c0_5, %c16] : memref<1x512x256xbf16, #tpu.memory_space<vmem>>, vector<1x512x16xbf16>
    %12 = vector.shape_cast %11 : vector<1x512x16xbf16> to vector<512x16xbf16>
    %cst_6 = arith.constant dense<0.000000e+00> : vector<16x16xf32>
    %13 = tpu.matmul %0, %12, %cst_6 {dimension_numbers = #tpu.dot_dimension_numbers<[1], [0], [0], [1], [0, 0, 1, 1], [], []>} : vector<16x512xbf16>, vector<512x16xbf16>, vector<16x16xf32> -> vector<16x16xf32>
    %14 = vector.extract_strided_slice %13 {offsets = [4, 0], sizes = [1, 13], strides = [1, 1]} : vector<16x16xf32> to vector<1x13xf32>
    %15 = arith.addf %10, %14 : vector<1x13xf32>
    %16 = vector.extract_strided_slice %13 {offsets = [5, 1], sizes = [1, 13], strides = [1, 1]} : vector<16x16xf32> to vector<1x13xf32>
    %17 = arith.addf %15, %16 : vector<1x13xf32>
    %18 = vector.extract_strided_slice %13 {offsets = [6, 2], sizes = [1, 13], strides = [1, 1]} : vector<16x16xf32> to vector<1x13xf32>
    %19 = arith.addf %17, %18 : vector<1x13xf32>
    %20 = vector.extract_strided_slice %13 {offsets = [7, 3], sizes = [1, 13], strides = [1, 1]} : vector<16x16xf32> to vector<1x13xf32>
    %21 = arith.addf %19, %20 : vector<1x13xf32>
    %c0_7 = arith.constant 0 : index
    %c0_8 = arith.constant 0 : index
    %c32 = arith.constant 32 : index
    %22 = vector.load %arg1[%c0_7, %c0_8, %c32] : memref<1x512x256xbf16, #tpu.memory_space<vmem>>, vector<1x512x16xbf16>
    %23 = vector.shape_cast %22 : vector<1x512x16xbf16> to vector<512x16xbf16>
    %cst_9 = arith.constant dense<0.000000e+00> : vector<16x16xf32>
    %24 = tpu.matmul %0, %23, %cst_9 {dimension_numbers = #tpu.dot_dimension_numbers<[1], [0], [0], [1], [0, 0, 1, 1], [], []>} : vector<16x512xbf16>, vector<512x16xbf16>, vector<16x16xf32> -> vector<16x16xf32>
    %25 = vector.extract_strided_slice %24 {offsets = [8, 0], sizes = [1, 13], strides = [1, 1]} : vector<16x16xf32> to vector<1x13xf32>
    %26 = arith.addf %21, %25 : vector<1x13xf32>
    %27 = vector.extract_strided_slice %24 {offsets = [9, 1], sizes = [1, 13], strides = [1, 1]} : vector<16x16xf32> to vector<1x13xf32>
    %28 = arith.addf %26, %27 : vector<1x13xf32>
    %29 = vector.extract_strided_slice %24 {offsets = [10, 2], sizes = [1, 13], strides = [1, 1]} : vector<16x16xf32> to vector<1x13xf32>
    %30 = arith.addf %28, %29 : vector<1x13xf32>
    %31 = vector.extract_strided_slice %24 {offsets = [11, 3], sizes = [1, 13], strides = [1, 1]} : vector<16x16xf32> to vector<1x13xf32>
    %32 = arith.addf %30, %31 : vector<1x13xf32>
    %c0_10 = arith.constant 0 : index
    %c0_11 = arith.constant 0 : index
    %c48 = arith.constant 48 : index
    %33 = vector.load %arg1[%c0_10, %c0_11, %c48] : memref<1x512x256xbf16, #tpu.memory_space<vmem>>, vector<1x512x16xbf16>
    %34 = vector.shape_cast %33 : vector<1x512x16xbf16> to vector<512x16xbf16>
    %cst_12 = arith.constant dense<0.000000e+00> : vector<16x16xf32>
    %35 = tpu.matmul %0, %34, %cst_12 {dimension_numbers = #tpu.dot_dimension_numbers<[1], [0], [0], [1], [0, 0, 1, 1], [], []>} : vector<16x512xbf16>, vector<512x16xbf16>, vector<16x16xf32> -> vector<16x16xf32>
    %36 = vector.extract_strided_slice %35 {offsets = [12, 0], sizes = [1, 13], strides = [1, 1]} : vector<16x16xf32> to vector<1x13xf32>
    %37 = arith.addf %32, %36 : vector<1x13xf32>
    %38 = vector.extract_strided_slice %35 {offsets = [13, 1], sizes = [1, 13], strides = [1, 1]} : vector<16x16xf32> to vector<1x13xf32>
    %39 = arith.addf %37, %38 : vector<1x13xf32>
    %40 = vector.extract_strided_slice %35 {offsets = [14, 2], sizes = [1, 13], strides = [1, 1]} : vector<16x16xf32> to vector<1x13xf32>
    %41 = arith.addf %39, %40 : vector<1x13xf32>
    %42 = vector.extract_strided_slice %35 {offsets = [15, 3], sizes = [1, 13], strides = [1, 1]} : vector<16x16xf32> to vector<1x13xf32>
    %43 = arith.addf %41, %42 : vector<1x13xf32>
    %44 = vector.extract_strided_slice %13 {offsets = [0, 0], sizes = [1, 13], strides = [1, 1]} : vector<16x16xf32> to vector<1x13xf32>
    %45 = vector.extract_strided_slice %13 {offsets = [1, 1], sizes = [1, 13], strides = [1, 1]} : vector<16x16xf32> to vector<1x13xf32>
    %46 = arith.addf %44, %45 : vector<1x13xf32>
    %47 = vector.extract_strided_slice %13 {offsets = [2, 2], sizes = [1, 13], strides = [1, 1]} : vector<16x16xf32> to vector<1x13xf32>
    %48 = arith.addf %46, %47 : vector<1x13xf32>
    %49 = vector.extract_strided_slice %13 {offsets = [3, 3], sizes = [1, 13], strides = [1, 1]} : vector<16x16xf32> to vector<1x13xf32>
    %50 = arith.addf %48, %49 : vector<1x13xf32>
    %51 = vector.extract_strided_slice %24 {offsets = [4, 0], sizes = [1, 13], strides = [1, 1]} : vector<16x16xf32> to vector<1x13xf32>
    %52 = arith.addf %50, %51 : vector<1x13xf32>
    %53 = vector.extract_strided_slice %24 {offsets = [5, 1], sizes = [1, 13], strides = [1, 1]} : vector<16x16xf32> to vector<1x13xf32>
    %54 = arith.addf %52, %53 : vector<1x13xf32>
    %55 = vector.extract_strided_slice %24 {offsets = [6, 2], sizes = [1, 13], strides = [1, 1]} : vector<16x16xf32> to vector<1x13xf32>
    %56 = arith.addf %54, %55 : vector<1x13xf32>
    %57 = vector.extract_strided_slice %24 {offsets = [7, 3], sizes = [1, 13], strides = [1, 1]} : vector<16x16xf32> to vector<1x13xf32>
    %58 = arith.addf %56, %57 : vector<1x13xf32>
    %59 = vector.extract_strided_slice %35 {offsets = [8, 0], sizes = [1, 13], strides = [1, 1]} : vector<16x16xf32> to vector<1x13xf32>
    %60 = arith.addf %58, %59 : vector<1x13xf32>
    %61 = vector.extract_strided_slice %35 {offsets = [9, 1], sizes = [1, 13], strides = [1, 1]} : vector<16x16xf32> to vector<1x13xf32>
    %62 = arith.addf %60, %61 : vector<1x13xf32>
    %63 = vector.extract_strided_slice %35 {offsets = [10, 2], sizes = [1, 13], strides = [1, 1]} : vector<16x16xf32> to vector<1x13xf32>
    %64 = arith.addf %62, %63 : vector<1x13xf32>
    %65 = vector.extract_strided_slice %35 {offsets = [11, 3], sizes = [1, 13], strides = [1, 1]} : vector<16x16xf32> to vector<1x13xf32>
    %66 = arith.addf %64, %65 : vector<1x13xf32>
    %c0_13 = arith.constant 0 : index
    %c0_14 = arith.constant 0 : index
    %c64 = arith.constant 64 : index
    %67 = vector.load %arg1[%c0_13, %c0_14, %c64] : memref<1x512x256xbf16, #tpu.memory_space<vmem>>, vector<1x512x16xbf16>
    %68 = vector.shape_cast %67 : vector<1x512x16xbf16> to vector<512x16xbf16>
    %cst_15 = arith.constant dense<0.000000e+00> : vector<16x16xf32>
    %69 = tpu.matmul %0, %68, %cst_15 {dimension_numbers = #tpu.dot_dimension_numbers<[1], [0], [0], [1], [0, 0, 1, 1], [], []>} : vector<16x512xbf16>, vector<512x16xbf16>, vector<16x16xf32> -> vector<16x16xf32>
    %70 = vector.extract_strided_slice %69 {offsets = [12, 0], sizes = [1, 13], strides = [1, 1]} : vector<16x16xf32> to vector<1x13xf32>
    %71 = arith.addf %66, %70 : vector<1x13xf32>
    %72 = vector.extract_strided_slice %69 {offsets = [13, 1], sizes = [1, 13], strides = [1, 1]} : vector<16x16xf32> to vector<1x13xf32>
    %73 = arith.addf %71, %72 : vector<1x13xf32>
    %74 = vector.extract_strided_slice %69 {offsets = [14, 2], sizes = [1, 13], strides = [1, 1]} : vector<16x16xf32> to vector<1x13xf32>
    %75 = arith.addf %73, %74 : vector<1x13xf32>
    %76 = vector.extract_strided_slice %69 {offsets = [15, 3], sizes = [1, 13], strides = [1, 1]} : vector<16x16xf32> to vector<1x13xf32>
    %77 = arith.addf %75, %76 : vector<1x13xf32>
    %78 = vector.extract_strided_slice %24 {offsets = [0, 0], sizes = [1, 13], strides = [1, 1]} : vector<16x16xf32> to vector<1x13xf32>
    %79 = vector.extract_strided_slice %24 {offsets = [1, 1], sizes = [1, 13], strides = [1, 1]} : vector<16x16xf32> to vector<1x13xf32>
    %80 = arith.addf %78, %79 : vector<1x13xf32>
    %81 = vector.extract_strided_slice %24 {offsets = [2, 2], sizes = [1, 13], strides = [1, 1]} : vector<16x16xf32> to vector<1x13xf32>
    %82 = arith.addf %80, %81 : vector<1x13xf32>
    %83 = vector.extract_strided_slice %24 {offsets = [3, 3], sizes = [1, 13], strides = [1, 1]} : vector<16x16xf32> to vector<1x13xf32>
    %84 = arith.addf %82, %83 : vector<1x13xf32>
    %85 = vector.extract_strided_slice %35 {offsets = [4, 0], sizes = [1, 13], strides = [1, 1]} : vector<16x16xf32> to vector<1x13xf32>
    %86 = arith.addf %84, %85 : vector<1x13xf32>
    %87 = vector.extract_strided_slice %35 {offsets = [5, 1], sizes = [1, 13], strides = [1, 1]} : vector<16x16xf32> to vector<1x13xf32>
    %88 = arith.addf %86, %87 : vector<1x13xf32>
    %89 = vector.extract_strided_slice %35 {offsets = [6, 2], sizes = [1, 13], strides = [1, 1]} : vector<16x16xf32> to vector<1x13xf32>
    %90 = arith.addf %88, %89 : vector<1x13xf32>
    %91 = vector.extract_strided_slice %35 {offsets = [7, 3], sizes = [1, 13], strides = [1, 1]} : vector<16x16xf32> to vector<1x13xf32>
    %92 = arith.addf %90, %91 : vector<1x13xf32>
    %93 = vector.extract_strided_slice %69 {offsets = [8, 0], sizes = [1, 13], strides = [1, 1]} : vector<16x16xf32> to vector<1x13xf32>
    %94 = arith.addf %92, %93 : vector<1x13xf32>
    %95 = vector.extract_strided_slice %69 {offsets = [9, 1], sizes = [1, 13], strides = [1, 1]} : vector<16x16xf32> to vector<1x13xf32>
    %96 = arith.addf %94, %95 : vector<1x13xf32>
    %97 = vector.extract_strided_slice %69 {offsets = [10, 2], sizes = [1, 13], strides = [1, 1]} : vector<16x16xf32> to vector<1x13xf32>
    %98 = arith.addf %96, %97 : vector<1x13xf32>
    %99 = vector.extract_strided_slice %69 {offsets = [11, 3], sizes = [1, 13], strides = [1, 1]} : vector<16x16xf32> to vector<1x13xf32>
    %100 = arith.addf %98, %99 : vector<1x13xf32>
    %c0_16 = arith.constant 0 : index
    %c0_17 = arith.constant 0 : index
    %c80 = arith.constant 80 : index
    %101 = vector.load %arg1[%c0_16, %c0_17, %c80] : memref<1x512x256xbf16, #tpu.memory_space<vmem>>, vector<1x512x16xbf16>
    %102 = vector.shape_cast %101 : vector<1x512x16xbf16> to vector<512x16xbf16>
    %cst_18 = arith.constant dense<0.000000e+00> : vector<16x16xf32>
    %103 = tpu.matmul %0, %102, %cst_18 {dimension_numbers = #tpu.dot_dimension_numbers<[1], [0], [0], [1], [0, 0, 1, 1], [], []>} : vector<16x512xbf16>, vector<512x16xbf16>, vector<16x16xf32> -> vector<16x16xf32>
    %104 = vector.extract_strided_slice %103 {offsets = [12, 0], sizes = [1, 13], strides = [1, 1]} : vector<16x16xf32> to vector<1x13xf32>
    %105 = arith.addf %100, %104 : vector<1x13xf32>
    %106 = vector.extract_strided_slice %103 {offsets = [13, 1], sizes = [1, 13], strides = [1, 1]} : vector<16x16xf32> to vector<1x13xf32>
    %107 = arith.addf %105, %106 : vector<1x13xf32>
    %108 = vector.extract_strided_slice %103 {offsets = [14, 2], sizes = [1, 13], strides = [1, 1]} : vector<16x16xf32> to vector<1x13xf32>
    %109 = arith.addf %107, %108 : vector<1x13xf32>
    %110 = vector.extract_strided_slice %103 {offsets = [15, 3], sizes = [1, 13], strides = [1, 1]} : vector<16x16xf32> to vector<1x13xf32>
    %111 = arith.addf %109, %110 : vector<1x13xf32>
    %112 = vector.extract_strided_slice %35 {offsets = [0, 0], sizes = [1, 13], strides = [1, 1]} : vector<16x16xf32> to vector<1x13xf32>
    %113 = vector.extract_strided_slice %35 {offsets = [1, 1], sizes = [1, 13], strides = [1, 1]} : vector<16x16xf32> to vector<1x13xf32>
    %114 = arith.addf %112, %113 : vector<1x13xf32>
    %115 = vector.extract_strided_slice %35 {offsets = [2, 2], sizes = [1, 13], strides = [1, 1]} : vector<16x16xf32> to vector<1x13xf32>
    %116 = arith.addf %114, %115 : vector<1x13xf32>
    %117 = vector.extract_strided_slice %35 {offsets = [3, 3], sizes = [1, 13], strides = [1, 1]} : vector<16x16xf32> to vector<1x13xf32>
    %118 = arith.addf %116, %117 : vector<1x13xf32>
    %119 = vector.extract_strided_slice %69 {offsets = [4, 0], sizes = [1, 13], strides = [1, 1]} : vector<16x16xf32> to vector<1x13xf32>
    %120 = arith.addf %118, %119 : vector<1x13xf32>
    %121 = vector.extract_strided_slice %69 {offsets = [5, 1], sizes = [1, 13], strides = [1, 1]} : vector<16x16xf32> to vector<1x13xf32>
    %122 = arith.addf %120, %121 : vector<1x13xf32>
    %123 = vector.extract_strided_slice %69 {offsets = [6, 2], sizes = [1, 13], strides = [1, 1]} : vector<16x16xf32> to vector<1x13xf32>
    %124 = arith.addf %122, %123 : vector<1x13xf32>
    %125 = vector.extract_strided_slice %69 {offsets = [7, 3], sizes = [1, 13], strides = [1, 1]} : vector<16x16xf32> to vector<1x13xf32>
    %126 = arith.addf %124, %125 : vector<1x13xf32>
    %127 = vector.extract_strided_slice %103 {offsets = [8, 0], sizes = [1, 13], strides = [1, 1]} : vector<16x16xf32> to vector<1x13xf32>
    %128 = arith.addf %126, %127 : vector<1x13xf32>
    %129 = vector.extract_strided_slice %103 {offsets = [9, 1], sizes = [1, 13], strides = [1, 1]} : vector<16x16xf32> to vector<1x13xf32>
    %130 = arith.addf %128, %129 : vector<1x13xf32>
    %131 = vector.extract_strided_slice %103 {offsets = [10, 2], sizes = [1, 13], strides = [1, 1]} : vector<16x16xf32> to vector<1x13xf32>
    %132 = arith.addf %130, %131 : vector<1x13xf32>
    %133 = vector.extract_strided_slice %103 {offsets = [11, 3], sizes = [1, 13], strides = [1, 1]} : vector<16x16xf32> to vector<1x13xf32>
    %134 = arith.addf %132, %133 : vector<1x13xf32>
    %c0_19 = arith.constant 0 : index
    %c0_20 = arith.constant 0 : index
    %c96 = arith.constant 96 : index
    %135 = vector.load %arg1[%c0_19, %c0_20, %c96] : memref<1x512x256xbf16, #tpu.memory_space<vmem>>, vector<1x512x16xbf16>
    %136 = vector.shape_cast %135 : vector<1x512x16xbf16> to vector<512x16xbf16>
    %cst_21 = arith.constant dense<0.000000e+00> : vector<16x16xf32>
    %137 = tpu.matmul %0, %136, %cst_21 {dimension_numbers = #tpu.dot_dimension_numbers<[1], [0], [0], [1], [0, 0, 1, 1], [], []>} : vector<16x512xbf16>, vector<512x16xbf16>, vector<16x16xf32> -> vector<16x16xf32>
    %138 = vector.extract_strided_slice %137 {offsets = [12, 0], sizes = [1, 13], strides = [1, 1]} : vector<16x16xf32> to vector<1x13xf32>
    %139 = arith.addf %134, %138 : vector<1x13xf32>
    %140 = vector.extract_strided_slice %137 {offsets = [13, 1], sizes = [1, 13], strides = [1, 1]} : vector<16x16xf32> to vector<1x13xf32>
    %141 = arith.addf %139, %140 : vector<1x13xf32>
    %142 = vector.extract_strided_slice %137 {offsets = [14, 2], sizes = [1, 13], strides = [1, 1]} : vector<16x16xf32> to vector<1x13xf32>
    %143 = arith.addf %141, %142 : vector<1x13xf32>
    %144 = vector.extract_strided_slice %137 {offsets = [15, 3], sizes = [1, 13], strides = [1, 1]} : vector<16x16xf32> to vector<1x13xf32>
    %145 = arith.addf %143, %144 : vector<1x13xf32>
    %146 = vector.extract_strided_slice %69 {offsets = [0, 0], sizes = [1, 13], strides = [1, 1]} : vector<16x16xf32> to vector<1x13xf32>
    %147 = vector.extract_strided_slice %69 {offsets = [1, 1], sizes = [1, 13], strides = [1, 1]} : vector<16x16xf32> to vector<1x13xf32>
    %148 = arith.addf %146, %147 : vector<1x13xf32>
    %149 = vector.extract_strided_slice %69 {offsets = [2, 2], sizes = [1, 13], strides = [1, 1]} : vector<16x16xf32> to vector<1x13xf32>
    %150 = arith.addf %148, %149 : vector<1x13xf32>
    %151 = vector.extract_strided_slice %69 {offsets = [3, 3], sizes = [1, 13], strides = [1, 1]} : vector<16x16xf32> to vector<1x13xf32>
    %152 = arith.addf %150, %151 : vector<1x13xf32>
    %153 = vector.extract_strided_slice %103 {offsets = [4, 0], sizes = [1, 13], strides = [1, 1]} : vector<16x16xf32> to vector<1x13xf32>
    %154 = arith.addf %152, %153 : vector<1x13xf32>
    %155 = vector.extract_strided_slice %103 {offsets = [5, 1], sizes = [1, 13], strides = [1, 1]} : vector<16x16xf32> to vector<1x13xf32>
    %156 = arith.addf %154, %155 : vector<1x13xf32>
    %157 = vector.extract_strided_slice %103 {offsets = [6, 2], sizes = [1, 13], strides = [1, 1]} : vector<16x16xf32> to vector<1x13xf32>
    %158 = arith.addf %156, %157 : vector<1x13xf32>
    %159 = vector.extract_strided_slice %103 {offsets = [7, 3], sizes = [1, 13], strides = [1, 1]} : vector<16x16xf32> to vector<1x13xf32>
    %160 = arith.addf %158, %159 : vector<1x13xf32>
    %161 = vector.extract_strided_slice %137 {offsets = [8, 0], sizes = [1, 13], strides = [1, 1]} : vector<16x16xf32> to vector<1x13xf32>
    %162 = arith.addf %160, %161 : vector<1x13xf32>
    %163 = vector.extract_strided_slice %137 {offsets = [9, 1], sizes = [1, 13], strides = [1, 1]} : vector<16x16xf32> to vector<1x13xf32>
    %164 = arith.addf %162, %163 : vector<1x13xf32>
    %165 = vector.extract_strided_slice %137 {offsets = [10, 2], sizes = [1, 13], strides = [1, 1]} : vector<16x16xf32> to vector<1x13xf32>
    %166 = arith.addf %164, %165 : vector<1x13xf32>
    %167 = vector.extract_strided_slice %137 {offsets = [11, 3], sizes = [1, 13], strides = [1, 1]} : vector<16x16xf32> to vector<1x13xf32>
    %168 = arith.addf %166, %167 : vector<1x13xf32>
    %c0_22 = arith.constant 0 : index
    %c0_23 = arith.constant 0 : index
    %c112 = arith.constant 112 : index
    %169 = vector.load %arg1[%c0_22, %c0_23, %c112] : memref<1x512x256xbf16, #tpu.memory_space<vmem>>, vector<1x512x16xbf16>
    %170 = vector.shape_cast %169 : vector<1x512x16xbf16> to vector<512x16xbf16>
    %cst_24 = arith.constant dense<0.000000e+00> : vector<16x16xf32>
    %171 = tpu.matmul %0, %170, %cst_24 {dimension_numbers = #tpu.dot_dimension_numbers<[1], [0], [0], [1], [0, 0, 1, 1], [], []>} : vector<16x512xbf16>, vector<512x16xbf16>, vector<16x16xf32> -> vector<16x16xf32>
    %172 = vector.extract_strided_slice %171 {offsets = [12, 0], sizes = [1, 13], strides = [1, 1]} : vector<16x16xf32> to vector<1x13xf32>
    %173 = arith.addf %168, %172 : vector<1x13xf32>
    %174 = vector.extract_strided_slice %171 {offsets = [13, 1], sizes = [1, 13], strides = [1, 1]} : vector<16x16xf32> to vector<1x13xf32>
    %175 = arith.addf %173, %174 : vector<1x13xf32>
    %176 = vector.extract_strided_slice %171 {offsets = [14, 2], sizes = [1, 13], strides = [1, 1]} : vector<16x16xf32> to vector<1x13xf32>
    %177 = arith.addf %175, %176 : vector<1x13xf32>
    %178 = vector.extract_strided_slice %171 {offsets = [15, 3], sizes = [1, 13], strides = [1, 1]} : vector<16x16xf32> to vector<1x13xf32>
    %179 = arith.addf %177, %178 : vector<1x13xf32>
    %180 = vector.extract_strided_slice %103 {offsets = [0, 0], sizes = [1, 13], strides = [1, 1]} : vector<16x16xf32> to vector<1x13xf32>
    %181 = vector.extract_strided_slice %103 {offsets = [1, 1], sizes = [1, 13], strides = [1, 1]} : vector<16x16xf32> to vector<1x13xf32>
    %182 = arith.addf %180, %181 : vector<1x13xf32>
    %183 = vector.extract_strided_slice %103 {offsets = [2, 2], sizes = [1, 13], strides = [1, 1]} : vector<16x16xf32> to vector<1x13xf32>
    %184 = arith.addf %182, %183 : vector<1x13xf32>
    %185 = vector.extract_strided_slice %103 {offsets = [3, 3], sizes = [1, 13], strides = [1, 1]} : vector<16x16xf32> to vector<1x13xf32>
    %186 = arith.addf %184, %185 : vector<1x13xf32>
    %187 = vector.extract_strided_slice %137 {offsets = [4, 0], sizes = [1, 13], strides = [1, 1]} : vector<16x16xf32> to vector<1x13xf32>
    %188 = arith.addf %186, %187 : vector<1x13xf32>
    %189 = vector.extract_strided_slice %137 {offsets = [5, 1], sizes = [1, 13], strides = [1, 1]} : vector<16x16xf32> to vector<1x13xf32>
    %190 = arith.addf %188, %189 : vector<1x13xf32>
    %191 = vector.extract_strided_slice %137 {offsets = [6, 2], sizes = [1, 13], strides = [1, 1]} : vector<16x16xf32> to vector<1x13xf32>
    %192 = arith.addf %190, %191 : vector<1x13xf32>
    %193 = vector.extract_strided_slice %137 {offsets = [7, 3], sizes = [1, 13], strides = [1, 1]} : vector<16x16xf32> to vector<1x13xf32>
    %194 = arith.addf %192, %193 : vector<1x13xf32>
    %195 = vector.extract_strided_slice %171 {offsets = [8, 0], sizes = [1, 13], strides = [1, 1]} : vector<16x16xf32> to vector<1x13xf32>
    %196 = arith.addf %194, %195 : vector<1x13xf32>
    %197 = vector.extract_strided_slice %171 {offsets = [9, 1], sizes = [1, 13], strides = [1, 1]} : vector<16x16xf32> to vector<1x13xf32>
    %198 = arith.addf %196, %197 : vector<1x13xf32>
    %199 = vector.extract_strided_slice %171 {offsets = [10, 2], sizes = [1, 13], strides = [1, 1]} : vector<16x16xf32> to vector<1x13xf32>
    %200 = arith.addf %198, %199 : vector<1x13xf32>
    %201 = vector.extract_strided_slice %171 {offsets = [11, 3], sizes = [1, 13], strides = [1, 1]} : vector<16x16xf32> to vector<1x13xf32>
    %202 = arith.addf %200, %201 : vector<1x13xf32>
    %c0_25 = arith.constant 0 : index
    %c0_26 = arith.constant 0 : index
    %c128 = arith.constant 128 : index
    %203 = vector.load %arg1[%c0_25, %c0_26, %c128] : memref<1x512x256xbf16, #tpu.memory_space<vmem>>, vector<1x512x16xbf16>
    %204 = vector.shape_cast %203 : vector<1x512x16xbf16> to vector<512x16xbf16>
    %cst_27 = arith.constant dense<0.000000e+00> : vector<16x16xf32>
    %205 = tpu.matmul %0, %204, %cst_27 {dimension_numbers = #tpu.dot_dimension_numbers<[1], [0], [0], [1], [0, 0, 1, 1], [], []>} : vector<16x512xbf16>, vector<512x16xbf16>, vector<16x16xf32> -> vector<16x16xf32>
    %206 = vector.extract_strided_slice %205 {offsets = [12, 0], sizes = [1, 13], strides = [1, 1]} : vector<16x16xf32> to vector<1x13xf32>
    %207 = arith.addf %202, %206 : vector<1x13xf32>
    %208 = vector.extract_strided_slice %205 {offsets = [13, 1], sizes = [1, 13], strides = [1, 1]} : vector<16x16xf32> to vector<1x13xf32>
    %209 = arith.addf %207, %208 : vector<1x13xf32>
    %210 = vector.extract_strided_slice %205 {offsets = [14, 2], sizes = [1, 13], strides = [1, 1]} : vector<16x16xf32> to vector<1x13xf32>
    %211 = arith.addf %209, %210 : vector<1x13xf32>
    %212 = vector.extract_strided_slice %205 {offsets = [15, 3], sizes = [1, 13], strides = [1, 1]} : vector<16x16xf32> to vector<1x13xf32>
    %213 = arith.addf %211, %212 : vector<1x13xf32>
    %214 = vector.extract_strided_slice %137 {offsets = [0, 0], sizes = [1, 13], strides = [1, 1]} : vector<16x16xf32> to vector<1x13xf32>
    %215 = vector.extract_strided_slice %137 {offsets = [1, 1], sizes = [1, 13], strides = [1, 1]} : vector<16x16xf32> to vector<1x13xf32>
    %216 = arith.addf %214, %215 : vector<1x13xf32>
    %217 = vector.extract_strided_slice %137 {offsets = [2, 2], sizes = [1, 13], strides = [1, 1]} : vector<16x16xf32> to vector<1x13xf32>
    %218 = arith.addf %216, %217 : vector<1x13xf32>
    %219 = vector.extract_strided_slice %137 {offsets = [3, 3], sizes = [1, 13], strides = [1, 1]} : vector<16x16xf32> to vector<1x13xf32>
    %220 = arith.addf %218, %219 : vector<1x13xf32>
    %221 = vector.extract_strided_slice %171 {offsets = [4, 0], sizes = [1, 13], strides = [1, 1]} : vector<16x16xf32> to vector<1x13xf32>
    %222 = arith.addf %220, %221 : vector<1x13xf32>
    %223 = vector.extract_strided_slice %171 {offsets = [5, 1], sizes = [1, 13], strides = [1, 1]} : vector<16x16xf32> to vector<1x13xf32>
    %224 = arith.addf %222, %223 : vector<1x13xf32>
    %225 = vector.extract_strided_slice %171 {offsets = [6, 2], sizes = [1, 13], strides = [1, 1]} : vector<16x16xf32> to vector<1x13xf32>
    %226 = arith.addf %224, %225 : vector<1x13xf32>
    %227 = vector.extract_strided_slice %171 {offsets = [7, 3], sizes = [1, 13], strides = [1, 1]} : vector<16x16xf32> to vector<1x13xf32>
    %228 = arith.addf %226, %227 : vector<1x13xf32>
    %229 = vector.extract_strided_slice %205 {offsets = [8, 0], sizes = [1, 13], strides = [1, 1]} : vector<16x16xf32> to vector<1x13xf32>
    %230 = arith.addf %228, %229 : vector<1x13xf32>
    %231 = vector.extract_strided_slice %205 {offsets = [9, 1], sizes = [1, 13], strides = [1, 1]} : vector<16x16xf32> to vector<1x13xf32>
    %232 = arith.addf %230, %231 : vector<1x13xf32>
    %233 = vector.extract_strided_slice %205 {offsets = [10, 2], sizes = [1, 13], strides = [1, 1]} : vector<16x16xf32> to vector<1x13xf32>
    %234 = arith.addf %232, %233 : vector<1x13xf32>
    %235 = vector.extract_strided_slice %205 {offsets = [11, 3], sizes = [1, 13], strides = [1, 1]} : vector<16x16xf32> to vector<1x13xf32>
    %236 = arith.addf %234, %235 : vector<1x13xf32>
    %c0_28 = arith.constant 0 : index
    %c0_29 = arith.constant 0 : index
    %c144 = arith.constant 144 : index
    %237 = vector.load %arg1[%c0_28, %c0_29, %c144] : memref<1x512x256xbf16, #tpu.memory_space<vmem>>, vector<1x512x16xbf16>
    %238 = vector.shape_cast %237 : vector<1x512x16xbf16> to vector<512x16xbf16>
    %cst_30 = arith.constant dense<0.000000e+00> : vector<16x16xf32>
    %239 = tpu.matmul %0, %238, %cst_30 {dimension_numbers = #tpu.dot_dimension_numbers<[1], [0], [0], [1], [0, 0, 1, 1], [], []>} : vector<16x512xbf16>, vector<512x16xbf16>, vector<16x16xf32> -> vector<16x16xf32>
    %240 = vector.extract_strided_slice %239 {offsets = [12, 0], sizes = [1, 13], strides = [1, 1]} : vector<16x16xf32> to vector<1x13xf32>
    %241 = arith.addf %236, %240 : vector<1x13xf32>
    %242 = vector.extract_strided_slice %239 {offsets = [13, 1], sizes = [1, 13], strides = [1, 1]} : vector<16x16xf32> to vector<1x13xf32>
    %243 = arith.addf %241, %242 : vector<1x13xf32>
    %244 = vector.extract_strided_slice %239 {offsets = [14, 2], sizes = [1, 13], strides = [1, 1]} : vector<16x16xf32> to vector<1x13xf32>
    %245 = arith.addf %243, %244 : vector<1x13xf32>
    %246 = vector.extract_strided_slice %239 {offsets = [15, 3], sizes = [1, 13], strides = [1, 1]} : vector<16x16xf32> to vector<1x13xf32>
    %247 = arith.addf %245, %246 : vector<1x13xf32>
    %248 = vector.extract_strided_slice %171 {offsets = [0, 0], sizes = [1, 13], strides = [1, 1]} : vector<16x16xf32> to vector<1x13xf32>
    %249 = vector.extract_strided_slice %171 {offsets = [1, 1], sizes = [1, 13], strides = [1, 1]} : vector<16x16xf32> to vector<1x13xf32>
    %250 = arith.addf %248, %249 : vector<1x13xf32>
    %251 = vector.extract_strided_slice %171 {offsets = [2, 2], sizes = [1, 13], strides = [1, 1]} : vector<16x16xf32> to vector<1x13xf32>
    %252 = arith.addf %250, %251 : vector<1x13xf32>
    %253 = vector.extract_strided_slice %171 {offsets = [3, 3], sizes = [1, 13], strides = [1, 1]} : vector<16x16xf32> to vector<1x13xf32>
    %254 = arith.addf %252, %253 : vector<1x13xf32>
    %255 = vector.extract_strided_slice %205 {offsets = [4, 0], sizes = [1, 13], strides = [1, 1]} : vector<16x16xf32> to vector<1x13xf32>
    %256 = arith.addf %254, %255 : vector<1x13xf32>
    %257 = vector.extract_strided_slice %205 {offsets = [5, 1], sizes = [1, 13], strides = [1, 1]} : vector<16x16xf32> to vector<1x13xf32>
    %258 = arith.addf %256, %257 : vector<1x13xf32>
    %259 = vector.extract_strided_slice %205 {offsets = [6, 2], sizes = [1, 13], strides = [1, 1]} : vector<16x16xf32> to vector<1x13xf32>
    %260 = arith.addf %258, %259 : vector<1x13xf32>
    %261 = vector.extract_strided_slice %205 {offsets = [7, 3], sizes = [1, 13], strides = [1, 1]} : vector<16x16xf32> to vector<1x13xf32>
    %262 = arith.addf %260, %261 : vector<1x13xf32>
    %263 = vector.extract_strided_slice %239 {offsets = [8, 0], sizes = [1, 13], strides = [1, 1]} : vector<16x16xf32> to vector<1x13xf32>
    %264 = arith.addf %262, %263 : vector<1x13xf32>
    %265 = vector.extract_strided_slice %239 {offsets = [9, 1], sizes = [1, 13], strides = [1, 1]} : vector<16x16xf32> to vector<1x13xf32>
    %266 = arith.addf %264, %265 : vector<1x13xf32>
    %267 = vector.extract_strided_slice %239 {offsets = [10, 2], sizes = [1, 13], strides = [1, 1]} : vector<16x16xf32> to vector<1x13xf32>
    %268 = arith.addf %266, %267 : vector<1x13xf32>
    %269 = vector.extract_strided_slice %239 {offsets = [11, 3], sizes = [1, 13], strides = [1, 1]} : vector<16x16xf32> to vector<1x13xf32>
    %270 = arith.addf %268, %269 : vector<1x13xf32>
    %c0_31 = arith.constant 0 : index
    %c0_32 = arith.constant 0 : index
    %c160 = arith.constant 160 : index
    %271 = vector.load %arg1[%c0_31, %c0_32, %c160] : memref<1x512x256xbf16, #tpu.memory_space<vmem>>, vector<1x512x16xbf16>
    %272 = vector.shape_cast %271 : vector<1x512x16xbf16> to vector<512x16xbf16>
    %cst_33 = arith.constant dense<0.000000e+00> : vector<16x16xf32>
    %273 = tpu.matmul %0, %272, %cst_33 {dimension_numbers = #tpu.dot_dimension_numbers<[1], [0], [0], [1], [0, 0, 1, 1], [], []>} : vector<16x512xbf16>, vector<512x16xbf16>, vector<16x16xf32> -> vector<16x16xf32>
    %274 = vector.extract_strided_slice %273 {offsets = [12, 0], sizes = [1, 13], strides = [1, 1]} : vector<16x16xf32> to vector<1x13xf32>
    %275 = arith.addf %270, %274 : vector<1x13xf32>
    %276 = vector.extract_strided_slice %273 {offsets = [13, 1], sizes = [1, 13], strides = [1, 1]} : vector<16x16xf32> to vector<1x13xf32>
    %277 = arith.addf %275, %276 : vector<1x13xf32>
    %278 = vector.extract_strided_slice %273 {offsets = [14, 2], sizes = [1, 13], strides = [1, 1]} : vector<16x16xf32> to vector<1x13xf32>
    %279 = arith.addf %277, %278 : vector<1x13xf32>
    %280 = vector.extract_strided_slice %273 {offsets = [15, 3], sizes = [1, 13], strides = [1, 1]} : vector<16x16xf32> to vector<1x13xf32>
    %281 = arith.addf %279, %280 : vector<1x13xf32>
    %282 = vector.extract_strided_slice %205 {offsets = [0, 0], sizes = [1, 13], strides = [1, 1]} : vector<16x16xf32> to vector<1x13xf32>
    %283 = vector.extract_strided_slice %205 {offsets = [1, 1], sizes = [1, 13], strides = [1, 1]} : vector<16x16xf32> to vector<1x13xf32>
    %284 = arith.addf %282, %283 : vector<1x13xf32>
    %285 = vector.extract_strided_slice %205 {offsets = [2, 2], sizes = [1, 13], strides = [1, 1]} : vector<16x16xf32> to vector<1x13xf32>
    %286 = arith.addf %284, %285 : vector<1x13xf32>
    %287 = vector.extract_strided_slice %205 {offsets = [3, 3], sizes = [1, 13], strides = [1, 1]} : vector<16x16xf32> to vector<1x13xf32>
    %288 = arith.addf %286, %287 : vector<1x13xf32>
    %289 = vector.extract_strided_slice %239 {offsets = [4, 0], sizes = [1, 13], strides = [1, 1]} : vector<16x16xf32> to vector<1x13xf32>
    %290 = arith.addf %288, %289 : vector<1x13xf32>
    %291 = vector.extract_strided_slice %239 {offsets = [5, 1], sizes = [1, 13], strides = [1, 1]} : vector<16x16xf32> to vector<1x13xf32>
    %292 = arith.addf %290, %291 : vector<1x13xf32>
    %293 = vector.extract_strided_slice %239 {offsets = [6, 2], sizes = [1, 13], strides = [1, 1]} : vector<16x16xf32> to vector<1x13xf32>
    %294 = arith.addf %292, %293 : vector<1x13xf32>
    %295 = vector.extract_strided_slice %239 {offsets = [7, 3], sizes = [1, 13], strides = [1, 1]} : vector<16x16xf32> to vector<1x13xf32>
    %296 = arith.addf %294, %295 : vector<1x13xf32>
    %297 = vector.extract_strided_slice %273 {offsets = [8, 0], sizes = [1, 13], strides = [1, 1]} : vector<16x16xf32> to vector<1x13xf32>
    %298 = arith.addf %296, %297 : vector<1x13xf32>
    %299 = vector.extract_strided_slice %273 {offsets = [9, 1], sizes = [1, 13], strides = [1, 1]} : vector<16x16xf32> to vector<1x13xf32>
    %300 = arith.addf %298, %299 : vector<1x13xf32>
    %301 = vector.extract_strided_slice %273 {offsets = [10, 2], sizes = [1, 13], strides = [1, 1]} : vector<16x16xf32> to vector<1x13xf32>
    %302 = arith.addf %300, %301 : vector<1x13xf32>
    %303 = vector.extract_strided_slice %273 {offsets = [11, 3], sizes = [1, 13], strides = [1, 1]} : vector<16x16xf32> to vector<1x13xf32>
    %304 = arith.addf %302, %303 : vector<1x13xf32>
    %c0_34 = arith.constant 0 : index
    %c0_35 = arith.constant 0 : index
    %c176 = arith.constant 176 : index
    %305 = vector.load %arg1[%c0_34, %c0_35, %c176] : memref<1x512x256xbf16, #tpu.memory_space<vmem>>, vector<1x512x16xbf16>
    %306 = vector.shape_cast %305 : vector<1x512x16xbf16> to vector<512x16xbf16>
    %cst_36 = arith.constant dense<0.000000e+00> : vector<16x16xf32>
    %307 = tpu.matmul %0, %306, %cst_36 {dimension_numbers = #tpu.dot_dimension_numbers<[1], [0], [0], [1], [0, 0, 1, 1], [], []>} : vector<16x512xbf16>, vector<512x16xbf16>, vector<16x16xf32> -> vector<16x16xf32>
    %308 = vector.extract_strided_slice %307 {offsets = [12, 0], sizes = [1, 13], strides = [1, 1]} : vector<16x16xf32> to vector<1x13xf32>
    %309 = arith.addf %304, %308 : vector<1x13xf32>
    %310 = vector.extract_strided_slice %307 {offsets = [13, 1], sizes = [1, 13], strides = [1, 1]} : vector<16x16xf32> to vector<1x13xf32>
    %311 = arith.addf %309, %310 : vector<1x13xf32>
    %312 = vector.extract_strided_slice %307 {offsets = [14, 2], sizes = [1, 13], strides = [1, 1]} : vector<16x16xf32> to vector<1x13xf32>
    %313 = arith.addf %311, %312 : vector<1x13xf32>
    %314 = vector.extract_strided_slice %307 {offsets = [15, 3], sizes = [1, 13], strides = [1, 1]} : vector<16x16xf32> to vector<1x13xf32>
    %315 = arith.addf %313, %314 : vector<1x13xf32>
    %316 = vector.extract_strided_slice %239 {offsets = [0, 0], sizes = [1, 13], strides = [1, 1]} : vector<16x16xf32> to vector<1x13xf32>
    %317 = vector.extract_strided_slice %239 {offsets = [1, 1], sizes = [1, 13], strides = [1, 1]} : vector<16x16xf32> to vector<1x13xf32>
    %318 = arith.addf %316, %317 : vector<1x13xf32>
    %319 = vector.extract_strided_slice %239 {offsets = [2, 2], sizes = [1, 13], strides = [1, 1]} : vector<16x16xf32> to vector<1x13xf32>
    %320 = arith.addf %318, %319 : vector<1x13xf32>
    %321 = vector.extract_strided_slice %239 {offsets = [3, 3], sizes = [1, 13], strides = [1, 1]} : vector<16x16xf32> to vector<1x13xf32>
    %322 = arith.addf %320, %321 : vector<1x13xf32>
    %323 = vector.extract_strided_slice %273 {offsets = [4, 0], sizes = [1, 13], strides = [1, 1]} : vector<16x16xf32> to vector<1x13xf32>
    %324 = arith.addf %322, %323 : vector<1x13xf32>
    %325 = vector.extract_strided_slice %273 {offsets = [5, 1], sizes = [1, 13], strides = [1, 1]} : vector<16x16xf32> to vector<1x13xf32>
    %326 = arith.addf %324, %325 : vector<1x13xf32>
    %327 = vector.extract_strided_slice %273 {offsets = [6, 2], sizes = [1, 13], strides = [1, 1]} : vector<16x16xf32> to vector<1x13xf32>
    %328 = arith.addf %326, %327 : vector<1x13xf32>
    %329 = vector.extract_strided_slice %273 {offsets = [7, 3], sizes = [1, 13], strides = [1, 1]} : vector<16x16xf32> to vector<1x13xf32>
    %330 = arith.addf %328, %329 : vector<1x13xf32>
    %331 = vector.extract_strided_slice %307 {offsets = [8, 0], sizes = [1, 13], strides = [1, 1]} : vector<16x16xf32> to vector<1x13xf32>
    %332 = arith.addf %330, %331 : vector<1x13xf32>
    %333 = vector.extract_strided_slice %307 {offsets = [9, 1], sizes = [1, 13], strides = [1, 1]} : vector<16x16xf32> to vector<1x13xf32>
    %334 = arith.addf %332, %333 : vector<1x13xf32>
    %335 = vector.extract_strided_slice %307 {offsets = [10, 2], sizes = [1, 13], strides = [1, 1]} : vector<16x16xf32> to vector<1x13xf32>
    %336 = arith.addf %334, %335 : vector<1x13xf32>
    %337 = vector.extract_strided_slice %307 {offsets = [11, 3], sizes = [1, 13], strides = [1, 1]} : vector<16x16xf32> to vector<1x13xf32>
    %338 = arith.addf %336, %337 : vector<1x13xf32>
    %c0_37 = arith.constant 0 : index
    %c0_38 = arith.constant 0 : index
    %c192 = arith.constant 192 : index
    %339 = vector.load %arg1[%c0_37, %c0_38, %c192] : memref<1x512x256xbf16, #tpu.memory_space<vmem>>, vector<1x512x16xbf16>
    %340 = vector.shape_cast %339 : vector<1x512x16xbf16> to vector<512x16xbf16>
    %cst_39 = arith.constant dense<0.000000e+00> : vector<16x16xf32>
    %341 = tpu.matmul %0, %340, %cst_39 {dimension_numbers = #tpu.dot_dimension_numbers<[1], [0], [0], [1], [0, 0, 1, 1], [], []>} : vector<16x512xbf16>, vector<512x16xbf16>, vector<16x16xf32> -> vector<16x16xf32>
    %342 = vector.extract_strided_slice %341 {offsets = [12, 0], sizes = [1, 13], strides = [1, 1]} : vector<16x16xf32> to vector<1x13xf32>
    %343 = arith.addf %338, %342 : vector<1x13xf32>
    %344 = vector.extract_strided_slice %341 {offsets = [13, 1], sizes = [1, 13], strides = [1, 1]} : vector<16x16xf32> to vector<1x13xf32>
    %345 = arith.addf %343, %344 : vector<1x13xf32>
    %346 = vector.extract_strided_slice %341 {offsets = [14, 2], sizes = [1, 13], strides = [1, 1]} : vector<16x16xf32> to vector<1x13xf32>
    %347 = arith.addf %345, %346 : vector<1x13xf32>
    %348 = vector.extract_strided_slice %341 {offsets = [15, 3], sizes = [1, 13], strides = [1, 1]} : vector<16x16xf32> to vector<1x13xf32>
    %349 = arith.addf %347, %348 : vector<1x13xf32>
    %350 = vector.extract_strided_slice %273 {offsets = [0, 0], sizes = [1, 13], strides = [1, 1]} : vector<16x16xf32> to vector<1x13xf32>
    %351 = vector.extract_strided_slice %273 {offsets = [1, 1], sizes = [1, 13], strides = [1, 1]} : vector<16x16xf32> to vector<1x13xf32>
    %352 = arith.addf %350, %351 : vector<1x13xf32>
    %353 = vector.extract_strided_slice %273 {offsets = [2, 2], sizes = [1, 13], strides = [1, 1]} : vector<16x16xf32> to vector<1x13xf32>
    %354 = arith.addf %352, %353 : vector<1x13xf32>
    %355 = vector.extract_strided_slice %273 {offsets = [3, 3], sizes = [1, 13], strides = [1, 1]} : vector<16x16xf32> to vector<1x13xf32>
    %356 = arith.addf %354, %355 : vector<1x13xf32>
    %357 = vector.extract_strided_slice %307 {offsets = [4, 0], sizes = [1, 13], strides = [1, 1]} : vector<16x16xf32> to vector<1x13xf32>
    %358 = arith.addf %356, %357 : vector<1x13xf32>
    %359 = vector.extract_strided_slice %307 {offsets = [5, 1], sizes = [1, 13], strides = [1, 1]} : vector<16x16xf32> to vector<1x13xf32>
    %360 = arith.addf %358, %359 : vector<1x13xf32>
    %361 = vector.extract_strided_slice %307 {offsets = [6, 2], sizes = [1, 13], strides = [1, 1]} : vector<16x16xf32> to vector<1x13xf32>
    %362 = arith.addf %360, %361 : vector<1x13xf32>
    %363 = vector.extract_strided_slice %307 {offsets = [7, 3], sizes = [1, 13], strides = [1, 1]} : vector<16x16xf32> to vector<1x13xf32>
    %364 = arith.addf %362, %363 : vector<1x13xf32>
    %365 = vector.extract_strided_slice %341 {offsets = [8, 0], sizes = [1, 13], strides = [1, 1]} : vector<16x16xf32> to vector<1x13xf32>
    %366 = arith.addf %364, %365 : vector<1x13xf32>
    %367 = vector.extract_strided_slice %341 {offsets = [9, 1], sizes = [1, 13], strides = [1, 1]} : vector<16x16xf32> to vector<1x13xf32>
    %368 = arith.addf %366, %367 : vector<1x13xf32>
    %369 = vector.extract_strided_slice %341 {offsets = [10, 2], sizes = [1, 13], strides = [1, 1]} : vector<16x16xf32> to vector<1x13xf32>
    %370 = arith.addf %368, %369 : vector<1x13xf32>
    %371 = vector.extract_strided_slice %341 {offsets = [11, 3], sizes = [1, 13], strides = [1, 1]} : vector<16x16xf32> to vector<1x13xf32>
    %372 = arith.addf %370, %371 : vector<1x13xf32>
    %c0_40 = arith.constant 0 : index
    %c0_41 = arith.constant 0 : index
    %c208 = arith.constant 208 : index
    %373 = vector.load %arg1[%c0_40, %c0_41, %c208] : memref<1x512x256xbf16, #tpu.memory_space<vmem>>, vector<1x512x16xbf16>
    %374 = vector.shape_cast %373 : vector<1x512x16xbf16> to vector<512x16xbf16>
    %cst_42 = arith.constant dense<0.000000e+00> : vector<16x16xf32>
    %375 = tpu.matmul %0, %374, %cst_42 {dimension_numbers = #tpu.dot_dimension_numbers<[1], [0], [0], [1], [0, 0, 1, 1], [], []>} : vector<16x512xbf16>, vector<512x16xbf16>, vector<16x16xf32> -> vector<16x16xf32>
    %376 = vector.extract_strided_slice %375 {offsets = [12, 0], sizes = [1, 13], strides = [1, 1]} : vector<16x16xf32> to vector<1x13xf32>
    %377 = arith.addf %372, %376 : vector<1x13xf32>
    %378 = vector.extract_strided_slice %375 {offsets = [13, 1], sizes = [1, 13], strides = [1, 1]} : vector<16x16xf32> to vector<1x13xf32>
    %379 = arith.addf %377, %378 : vector<1x13xf32>
    %380 = vector.extract_strided_slice %375 {offsets = [14, 2], sizes = [1, 13], strides = [1, 1]} : vector<16x16xf32> to vector<1x13xf32>
    %381 = arith.addf %379, %380 : vector<1x13xf32>
    %382 = vector.extract_strided_slice %375 {offsets = [15, 3], sizes = [1, 13], strides = [1, 1]} : vector<16x16xf32> to vector<1x13xf32>
    %383 = arith.addf %381, %382 : vector<1x13xf32>
    %384 = vector.extract_strided_slice %307 {offsets = [0, 0], sizes = [1, 13], strides = [1, 1]} : vector<16x16xf32> to vector<1x13xf32>
    %385 = vector.extract_strided_slice %307 {offsets = [1, 1], sizes = [1, 13], strides = [1, 1]} : vector<16x16xf32> to vector<1x13xf32>
    %386 = arith.addf %384, %385 : vector<1x13xf32>
    %387 = vector.extract_strided_slice %307 {offsets = [2, 2], sizes = [1, 13], strides = [1, 1]} : vector<16x16xf32> to vector<1x13xf32>
    %388 = arith.addf %386, %387 : vector<1x13xf32>
    %389 = vector.extract_strided_slice %307 {offsets = [3, 3], sizes = [1, 13], strides = [1, 1]} : vector<16x16xf32> to vector<1x13xf32>
    %390 = arith.addf %388, %389 : vector<1x13xf32>
    %391 = vector.extract_strided_slice %341 {offsets = [4, 0], sizes = [1, 13], strides = [1, 1]} : vector<16x16xf32> to vector<1x13xf32>
    %392 = arith.addf %390, %391 : vector<1x13xf32>
    %393 = vector.extract_strided_slice %341 {offsets = [5, 1], sizes = [1, 13], strides = [1, 1]} : vector<16x16xf32> to vector<1x13xf32>
    %394 = arith.addf %392, %393 : vector<1x13xf32>
    %395 = vector.extract_strided_slice %341 {offsets = [6, 2], sizes = [1, 13], strides = [1, 1]} : vector<16x16xf32> to vector<1x13xf32>
    %396 = arith.addf %394, %395 : vector<1x13xf32>
    %397 = vector.extract_strided_slice %341 {offsets = [7, 3], sizes = [1, 13], strides = [1, 1]} : vector<16x16xf32> to vector<1x13xf32>
    %398 = arith.addf %396, %397 : vector<1x13xf32>
    %399 = vector.extract_strided_slice %375 {offsets = [8, 0], sizes = [1, 13], strides = [1, 1]} : vector<16x16xf32> to vector<1x13xf32>
    %400 = arith.addf %398, %399 : vector<1x13xf32>
    %401 = vector.extract_strided_slice %375 {offsets = [9, 1], sizes = [1, 13], strides = [1, 1]} : vector<16x16xf32> to vector<1x13xf32>
    %402 = arith.addf %400, %401 : vector<1x13xf32>
    %403 = vector.extract_strided_slice %375 {offsets = [10, 2], sizes = [1, 13], strides = [1, 1]} : vector<16x16xf32> to vector<1x13xf32>
    %404 = arith.addf %402, %403 : vector<1x13xf32>
    %405 = vector.extract_strided_slice %375 {offsets = [11, 3], sizes = [1, 13], strides = [1, 1]} : vector<16x16xf32> to vector<1x13xf32>
    %406 = arith.addf %404, %405 : vector<1x13xf32>
    %c0_43 = arith.constant 0 : index
    %c0_44 = arith.constant 0 : index
    %c224 = arith.constant 224 : index
    %407 = vector.load %arg1[%c0_43, %c0_44, %c224] : memref<1x512x256xbf16, #tpu.memory_space<vmem>>, vector<1x512x16xbf16>
    %408 = vector.shape_cast %407 : vector<1x512x16xbf16> to vector<512x16xbf16>
    %cst_45 = arith.constant dense<0.000000e+00> : vector<16x16xf32>
    %409 = tpu.matmul %0, %408, %cst_45 {dimension_numbers = #tpu.dot_dimension_numbers<[1], [0], [0], [1], [0, 0, 1, 1], [], []>} : vector<16x512xbf16>, vector<512x16xbf16>, vector<16x16xf32> -> vector<16x16xf32>
    %410 = vector.extract_strided_slice %409 {offsets = [12, 0], sizes = [1, 13], strides = [1, 1]} : vector<16x16xf32> to vector<1x13xf32>
    %411 = arith.addf %406, %410 : vector<1x13xf32>
    %412 = vector.extract_strided_slice %409 {offsets = [13, 1], sizes = [1, 13], strides = [1, 1]} : vector<16x16xf32> to vector<1x13xf32>
    %413 = arith.addf %411, %412 : vector<1x13xf32>
    %414 = vector.extract_strided_slice %409 {offsets = [14, 2], sizes = [1, 13], strides = [1, 1]} : vector<16x16xf32> to vector<1x13xf32>
    %415 = arith.addf %413, %414 : vector<1x13xf32>
    %416 = vector.extract_strided_slice %409 {offsets = [15, 3], sizes = [1, 13], strides = [1, 1]} : vector<16x16xf32> to vector<1x13xf32>
    %417 = arith.addf %415, %416 : vector<1x13xf32>
    %418 = vector.extract_strided_slice %341 {offsets = [0, 0], sizes = [1, 13], strides = [1, 1]} : vector<16x16xf32> to vector<1x13xf32>
    %419 = vector.extract_strided_slice %341 {offsets = [1, 1], sizes = [1, 13], strides = [1, 1]} : vector<16x16xf32> to vector<1x13xf32>
    %420 = arith.addf %418, %419 : vector<1x13xf32>
    %421 = vector.extract_strided_slice %341 {offsets = [2, 2], sizes = [1, 13], strides = [1, 1]} : vector<16x16xf32> to vector<1x13xf32>
    %422 = arith.addf %420, %421 : vector<1x13xf32>
    %423 = vector.extract_strided_slice %341 {offsets = [3, 3], sizes = [1, 13], strides = [1, 1]} : vector<16x16xf32> to vector<1x13xf32>
    %424 = arith.addf %422, %423 : vector<1x13xf32>
    %425 = vector.extract_strided_slice %375 {offsets = [4, 0], sizes = [1, 13], strides = [1, 1]} : vector<16x16xf32> to vector<1x13xf32>
    %426 = arith.addf %424, %425 : vector<1x13xf32>
    %427 = vector.extract_strided_slice %375 {offsets = [5, 1], sizes = [1, 13], strides = [1, 1]} : vector<16x16xf32> to vector<1x13xf32>
    %428 = arith.addf %426, %427 : vector<1x13xf32>
    %429 = vector.extract_strided_slice %375 {offsets = [6, 2], sizes = [1, 13], strides = [1, 1]} : vector<16x16xf32> to vector<1x13xf32>
    %430 = arith.addf %428, %429 : vector<1x13xf32>
    %431 = vector.extract_strided_slice %375 {offsets = [7, 3], sizes = [1, 13], strides = [1, 1]} : vector<16x16xf32> to vector<1x13xf32>
    %432 = arith.addf %430, %431 : vector<1x13xf32>
    %433 = vector.extract_strided_slice %409 {offsets = [8, 0], sizes = [1, 13], strides = [1, 1]} : vector<16x16xf32> to vector<1x13xf32>
    %434 = arith.addf %432, %433 : vector<1x13xf32>
    %435 = vector.extract_strided_slice %409 {offsets = [9, 1], sizes = [1, 13], strides = [1, 1]} : vector<16x16xf32> to vector<1x13xf32>
    %436 = arith.addf %434, %435 : vector<1x13xf32>
    %437 = vector.extract_strided_slice %409 {offsets = [10, 2], sizes = [1, 13], strides = [1, 1]} : vector<16x16xf32> to vector<1x13xf32>
    %438 = arith.addf %436, %437 : vector<1x13xf32>
    %439 = vector.extract_strided_slice %409 {offsets = [11, 3], sizes = [1, 13], strides = [1, 1]} : vector<16x16xf32> to vector<1x13xf32>
    %440 = arith.addf %438, %439 : vector<1x13xf32>
    %c0_46 = arith.constant 0 : index
    %c0_47 = arith.constant 0 : index
    %c240 = arith.constant 240 : index
    %441 = vector.load %arg1[%c0_46, %c0_47, %c240] : memref<1x512x256xbf16, #tpu.memory_space<vmem>>, vector<1x512x16xbf16>
    %442 = vector.shape_cast %441 : vector<1x512x16xbf16> to vector<512x16xbf16>
    %cst_48 = arith.constant dense<0.000000e+00> : vector<16x16xf32>
    %443 = tpu.matmul %0, %442, %cst_48 {dimension_numbers = #tpu.dot_dimension_numbers<[1], [0], [0], [1], [0, 0, 1, 1], [], []>} : vector<16x512xbf16>, vector<512x16xbf16>, vector<16x16xf32> -> vector<16x16xf32>
    %444 = vector.extract_strided_slice %443 {offsets = [12, 0], sizes = [1, 13], strides = [1, 1]} : vector<16x16xf32> to vector<1x13xf32>
    %445 = arith.addf %440, %444 : vector<1x13xf32>
    %446 = vector.extract_strided_slice %443 {offsets = [13, 1], sizes = [1, 13], strides = [1, 1]} : vector<16x16xf32> to vector<1x13xf32>
    %447 = arith.addf %445, %446 : vector<1x13xf32>
    %448 = vector.extract_strided_slice %443 {offsets = [14, 2], sizes = [1, 13], strides = [1, 1]} : vector<16x16xf32> to vector<1x13xf32>
    %449 = arith.addf %447, %448 : vector<1x13xf32>
    %450 = vector.extract_strided_slice %443 {offsets = [15, 3], sizes = [1, 13], strides = [1, 1]} : vector<16x16xf32> to vector<1x13xf32>
    %451 = arith.addf %449, %450 : vector<1x13xf32>
    %452 = tpu.concatenate %43, %77, %111, %145, %179, %213, %247, %281, %315, %349, %383, %417, %451 in 0 : vector<1x13xf32>, vector<1x13xf32>, vector<1x13xf32>, vector<1x13xf32>, vector<1x13xf32>, vector<1x13xf32>, vector<1x13xf32>, vector<1x13xf32>, vector<1x13xf32>, vector<1x13xf32>, vector<1x13xf32>, vector<1x13xf32>, vector<1x13xf32> -> vector<13x13xf32>
    %c0_49 = arith.constant 0 : index
    %c0_50 = arith.constant 0 : index
    %453 = vector.load %arg3[%c0_49, %c0_50] : memref<1x1xf32, #tpu.memory_space<vmem>>, vector<1x1xf32>
    %454 = vector.broadcast %453 : vector<1x1xf32> to vector<13x13xf32>
    %455 = arith.addf %452, %454 : vector<13x13xf32>
    %c0_51 = arith.constant 0 : index
    %c0_52 = arith.constant 0 : index
    %c0_53 = arith.constant 0 : index
    %456 = vector.load %arg4[%c0_51, %c0_52, %c0_53] : memref<1x13x13xf32, #tpu.memory_space<vmem>>, vector<1x13x13xf32>
    %457 = vector.shape_cast %456 : vector<1x13x13xf32> to vector<13x13xf32>
    %458 = vector.shape_cast %455 : vector<13x13xf32> to vector<1x13x13xf32>
    tpu.vector_store %arg4[%c0_51, %c0_52, %c0_53], %458 {strides = array<i32>} : memref<1x13x13xf32, #tpu.memory_space<vmem>>, vector<1x13x13xf32>,
    return
  }
  func.func @transform_0(%arg0: i32) -> (i32, i32, i32) {
    %c0_i32 = arith.constant 0 : i32
    %c0_i32_0 = arith.constant 0 : i32
    %c0_i32_1 = arith.constant 0 : i32
    return %arg0, %c0_i32, %c0_i32_0 : i32, i32, i32
  }
  func.func @transform_1(%arg0: i32) -> (i32, i32) {
    %c0_i32 = arith.constant 0 : i32
    %c0_i32_0 = arith.constant 0 : i32
    %c0_i32_1 = arith.constant 0 : i32
    return %c0_i32, %c0_i32_0 : i32, i32
  }
  func.func @transform_2(%arg0: i32) -> (i32, i32) {
    %c0_i32 = arith.constant 0 : i32
    %c0_i32_0 = arith.constant 0 : i32
    %c0_i32_1 = arith.constant 0 : i32
    return %c0_i32, %c0_i32_0 : i32, i32
  }
  func.func @transform_3(%arg0: i32) -> (i32, i32, i32) {
    %c0_i32 = arith.constant 0 : i32
    %c0_i32_0 = arith.constant 0 : i32
    %c0_i32_1 = arith.constant 0 : i32
    return %arg0, %c0_i32, %c0_i32_0 : i32, i32, i32
  }
}

</mosaic_0001>

<llo_original>
// kernel: tpu_custom_call.1
$region0: #{tpu_custom_call.1}
  #allocation0 [shape = 'u32[]', space=smem, size = 0x4, offset = 0x4, fixed_abs, tag = 'smem constant byte address 0x4 - core index']
  #allocation1 [shape = 'u32[144,128]{1,0:T(1,128)}', space=vmem, size = 0x12000, scoped, tag = 'internal scratch']
  #allocation2 [shape = 'f32[1,1]{1,0:T(1,128)S(1)}', space=vmem, size = 0x200, scoped, tag = 'scoped memory for tpu_custom_call.1']
  %s0 = inlined_call_operand.hbm [shape: bf16[2,512,256], index: 0, kind: input, shape index: {}]
  %s1 = inlined_call_operand.hbm [shape: bf16[16,512], index: 1, kind: input, shape index: {}]
  %s2 = inlined_call_operand.<no memory space> [shape: f32[1,1], index: 2, kind: input, shape index: {}]
  %s3 = inlined_call_operand.vmem [shape: f32[2,13,13], index: 3, kind: output, shape index: {}]
  %s4 = sld [smem:[#allocation0]]
  $region53: #{tpu_custom_call.1} parent=0
    _
  %s6 = ssub.s32 1, %s4
  %s7 = scalar_select 0, %s6, %s4
  %v8 = vstv %s2
  %9 = vst [vmem:[#allocation2] sm:$0x1] %v8
  $region1: #{tpu_custom_call.1} parent=0
    #allocation3 [shape = 'u8[524288]{0}', space=vmem, size = 0x80000, scoped, tag = 'input window, operand 0']
    #allocation4 [shape = 's32[2]{0}', space=sflag, size = 0x8, scoped, tag = 'scoped memory for tpu_custom_call.1']
    #allocation5 [shape = 'u8[16384]{0}', space=vmem, size = 0x4000, scoped, tag = 'input window, operand 1, single buffered']
    #allocation6 [shape = 's32[1]{0}', space=sflag, size = 0x4, scoped, tag = 'scoped memory for tpu_custom_call.1']
    %10 = vsyncpa [#allocation4], 0
    %s11 = scalar_lea.sflag [#allocation4], 1
    %12 = vsyncpa %s11, 0
    %13 = vsyncpa [#allocation6], 0
    loop: start=0, step=1, limit=4
    $region2: #{tpu_custom_call.1} parent=1 // loop_pre_header
      _
    $region3: #{tpu_custom_call.1} parent=1 // loop_header
      %s15 = sphi 0, %s19
      %p16 = scmp.ge.s32.totalorder %s15, 4
      %s25 = sphi 0, %s27
      %s28 = sphi 0, %s25
      %s29 = sphi 0, %s28
      %s45 = sphi 0, %s29
      %s49 = sphi 0, %s49
      %s51 = sphi 0, %s49
      %s52 = sphi 0, %s51
      %s66 = sphi 0, %s52
      %s70 = sphi 0, %s70
      %s72 = sphi 0, %s70
      %s73 = sphi 0, %s72
      %s87 = sphi 0, %s73
      %s93 = sphi 0, %s95
      %s96 = sphi 0, %s93
      %s97 = sphi 0, %s96
      %s113 = sphi 0, %s97
    $region4: #{tpu_custom_call.1} parent=1 // loop_header_branch
      %18 = sbr.rel (%p16) target = $region8
    $region5: #{tpu_custom_call.1} parent=1 // loop_body
      %s20 = ssub.s32 %s15, 1
      %s21 = ssub.s32 %s15, 2
      %s22 = sadd.s32 %s15, 1
      %s23 = ssub.s32 %s15, %s22
      %p24 = scmp.eq.s32.totalorder %s23, 0
      %s26 = sadd.s32 %s25, 1
      %s27 = scalar_select %p24, %s25, %s26
      %p30 = pneg %p24
      %p31 = scmp.eq.s32.totalorder %s15, 1
      %p32 = por %p30, %p31
      %p33 = scmp.ne.s32.totalorder %s25, %s28
      %p34 = scmp.eq.s32.totalorder %s15, 0
      %p35 = por %p33, %p34
      %p36 = scmp.ne.s32.totalorder %s25, %s28
      %p37 = scmp.eq.s32.totalorder %s20, 1
      %p38 = por %p36, %p37
      %p39 = scmp.ne.s32.totalorder %s28, %s29
      %p40 = scmp.eq.s32.totalorder %s20, 0
      %p41 = por %p39, %p40
      %p42 = scmp.ne.s32.totalorder %s28, %s29
      %p43 = scmp.eq.s32.totalorder %s21, 1
      %p44 = por %p42, %p43
      %p46 = scmp.ne.s32.totalorder %s29, %s45
      %p47 = scmp.eq.s32.totalorder %s21, 0
      %p48 = por %p46, %p47
      %s50 = sadd.s32 %s49, 1
      %p53 = scmp.eq.s32.totalorder %s15, 1
      %p54 = scmp.ne.s32.totalorder %s49, %s51
      %p55 = scmp.eq.s32.totalorder %s15, 0
      %p56 = por %p54, %p55
      %p57 = scmp.ne.s32.totalorder %s49, %s51
      %p58 = scmp.eq.s32.totalorder %s20, 1
      %p59 = por %p57, %p58
      %p60 = scmp.ne.s32.totalorder %s51, %s52
      %p61 = scmp.eq.s32.totalorder %s20, 0
      %p62 = por %p60, %p61
      %p63 = scmp.ne.s32.totalorder %s51, %s52
      %p64 = scmp.eq.s32.totalorder %s21, 1
      %p65 = por %p63, %p64
      %p67 = scmp.ne.s32.totalorder %s52, %s66
      %p68 = scmp.eq.s32.totalorder %s21, 0
      %p69 = por %p67, %p68
      %s71 = sadd.s32 %s70, 1
      %p74 = scmp.eq.s32.totalorder %s15, 1
      %p75 = scmp.ne.s32.totalorder %s70, %s72
      %p76 = scmp.eq.s32.totalorder %s15, 0
      %p77 = por %p75, %p76
      %p78 = scmp.ne.s32.totalorder %s70, %s72
      %p79 = scmp.eq.s32.totalorder %s20, 1
      %p80 = por %p78, %p79
      %p81 = scmp.ne.s32.totalorder %s72, %s73
      %p82 = scmp.eq.s32.totalorder %s20, 0
      %p83 = por %p81, %p82
      %p84 = scmp.ne.s32.totalorder %s72, %s73
      %p85 = scmp.eq.s32.totalorder %s21, 1
      %p86 = por %p84, %p85
      %p88 = scmp.ne.s32.totalorder %s73, %s87
      %p89 = scmp.eq.s32.totalorder %s21, 0
      %p90 = por %p88, %p89
      %s91 = ssub.s32 %s15, %s22
      %p92 = scmp.eq.s32.totalorder %s91, 0
      %s94 = sadd.s32 %s93, 1
      %s95 = scalar_select %p92, %s93, %s94
      %p98 = pneg %p92
      %p99 = scmp.eq.s32.totalorder %s15, 1
      %p100 = por %p98, %p99
      %p101 = scmp.ne.s32.totalorder %s93, %s96
      %p102 = scmp.eq.s32.totalorder %s15, 0
      %p103 = por %p101, %p102
      %p104 = scmp.ne.s32.totalorder %s93, %s96
      %p105 = scmp.eq.s32.totalorder %s20, 1
      %p106 = por %p104, %p105
      %p107 = scmp.ne.s32.totalorder %s96, %s97
      %p108 = scmp.eq.s32.totalorder %s20, 0
      %p109 = por %p107, %p108
      %p110 = scmp.ne.s32.totalorder %s96, %s97
      %p111 = scmp.eq.s32.totalorder %s21, 1
      %p112 = por %p110, %p111
      %p114 = scmp.ne.s32.totalorder %s97, %s113
      %p115 = scmp.eq.s32.totalorder %s21, 0
      %p116 = por %p114, %p115
      %p117 = scmp.le.s32.totalorder 1, %s15
      %p118 = scmp.lt.s32.totalorder %s15, 3
      %p119 = pnand %p117, %p118
      %p120 = pneg %p119
      // Predicated region
      $region9: #{tpu_custom_call.1} parent=5 // pred_check
        _
      $region10: #{tpu_custom_call.1} parent=5 // pred_check_branch
        %122 = sbr.rel (%p119) target = $region12
      $region11: #{tpu_custom_call.1} parent=5 // pred_region
        %s123 = ssub.s32 %s15, 1
        // Predicated region
        $region13: #{tpu_custom_call.1} parent=11 // pred_check
          %p124 = pneg %p62
        $region14: #{tpu_custom_call.1} parent=11 // pred_check_branch
          %126 = sbr.rel (%p124) target = $region16
        $region15: #{tpu_custom_call.1} parent=11 // pred_region
          %s128 = ssub.s32 512, 512
          %129 = vsyncadd [#allocation6], %s128
          %s130 = sshll.u32 [#allocation5], 4
          %s131 = int_to_ptr.vmem [resolvable:$true] %s130
          %136 = dma.hbm_to_vmem [thread:$0]  %s1, 512, %s131, [#allocation6], 256, 256, 16
        $region16: #{tpu_custom_call.1} parent=11 // pred_fallthru
          _
        // Predicated region
        $region17: #{tpu_custom_call.1} parent=11 // pred_check
          %p137 = pneg %p83
        $region18: #{tpu_custom_call.1} parent=11 // pred_check_branch
          %139 = sbr.rel (%p137) target = $region20
        $region19: #{tpu_custom_call.1} parent=11 // pred_region
          _
        $region20: #{tpu_custom_call.1} parent=11 // pred_fallthru
          _
      $region12: #{tpu_custom_call.1} parent=5 // pred_fallthru
        _
      %p140 = scmp.lt.s32.totalorder %s15, 2
      // Predicated region
      $region21: #{tpu_custom_call.1} parent=5 // pred_check
        %p141 = pneg %p140
      $region22: #{tpu_custom_call.1} parent=5 // pred_check_branch
        %143 = sbr.rel (%p141) target = $region24
      $region23: #{tpu_custom_call.1} parent=5 // pred_region
        // Predicated region
        $region25: #{tpu_custom_call.1} parent=23 // pred_check
          %p144 = pneg %p35
        $region26: #{tpu_custom_call.1} parent=23 // pred_check_branch
          %146 = sbr.rel (%p144) target = $region28
        $region27: #{tpu_custom_call.1} parent=23 // pred_region
          %s147 = sand.u32 %s25, 1
          %s148 = scalar_lea.sflag [#allocation4], %s147
          %s149 = sand.u32 %s25, 1
          %s150 = smul.addr %s149, 512
          %s151 = scalar_lea.vmem [#allocation3], %s150
          %s153 = ssub.s32 8192, 8192
          %154 = vsyncadd %s148, %s153
          %s155 = smul.addr %s15, 128
          %s156 = smul.addr %s155, 64
          %s157 = scalar_lea.hbm %s0, %s156
          %s158 = sshll.u32 %s151, 4
          %s159 = int_to_ptr.vmem [resolvable:$true] %s158
          %164 = dma.hbm_to_vmem [thread:$0]  %s157, 8192, %s159, %s148, 128, 128, 8
        $region28: #{tpu_custom_call.1} parent=23 // pred_fallthru
          _
      $region24: #{tpu_custom_call.1} parent=5 // pred_fallthru
        _
      %p165 = scmp.le.s32.totalorder 1, %s15
      %p166 = scmp.lt.s32.totalorder %s15, 3
      %p167 = pnand %p165, %p166
      %p168 = pneg %p167
      // Predicated region
      $region29: #{tpu_custom_call.1} parent=5 // pred_check
        _
      $region30: #{tpu_custom_call.1} parent=5 // pred_check_branch
        %170 = sbr.rel (%p167) target = $region32
      $region31: #{tpu_custom_call.1} parent=5 // pred_region
        %s171 = ssub.s32 %s15, 1
        %s172 = sand.u32 %s28, 1
        %s173 = scalar_lea.sflag [#allocation4], %s172
        %s174 = sand.u32 %s28, 1
        %s175 = smul.addr %s174, 512
        %s176 = scalar_lea.vmem [#allocation3], %s175
        // Predicated region
        $region33: #{tpu_custom_call.1} parent=31 // pred_check
          %p177 = pneg %p41
        $region34: #{tpu_custom_call.1} parent=31 // pred_check_branch
          %179 = sbr.rel (%p177) target = $region36
        $region35: #{tpu_custom_call.1} parent=31 // pred_region
          %180 = dma.done %s173, 8192
        $region36: #{tpu_custom_call.1} parent=31 // pred_fallthru
          _
        // Predicated region
        $region37: #{tpu_custom_call.1} parent=31 // pred_check
          %p181 = pneg %p62
        $region38: #{tpu_custom_call.1} parent=31 // pred_check_branch
          %183 = sbr.rel (%p181) target = $region40
        $region39: #{tpu_custom_call.1} parent=31 // pred_region
          %184 = dma.done [#allocation6], 512
        $region40: #{tpu_custom_call.1} parent=31 // pred_fallthru
          _
        %s185 = sand.u32 %s28, 1
        %s186 = scalar_lea.sflag [#allocation4], %s185
        %s187 = sand.u32 %s28, 1
        %s188 = smul.addr %s187, 512
        %s189 = scalar_lea.vmem [#allocation3], %s188
        %p190 = pneg %p41
        %p191 = pneg %p38
        %p192 = pneg %p62
        %p193 = pneg %p59
        %p194 = pneg %p83
        %p195 = pneg %p80
        %p196 = pneg %p109
        %p197 = pneg %p106
        %p198 = scmp.lt.s32.totalorder %s20, 1
        %s199 = scalar_select %p198, %s20, 1
        %s200 = smul.addr %s199, 2
        %s201 = smul.addr %s200, 8
        %s202 = scalar_lea.vmem %s3, %s201
        %p203 = scmp.lt.s32.totalorder %s20, 1
        %s204 = scalar_select %p203, %s20, 1
        %s205 = smul.addr %s204, 2
        %s206 = smul.addr %s205, 8
        %s207 = scalar_lea.vmem %s3, %s206
        %v209 = vld [vmem:[#allocation5] sm:$0xff]
        %v210 = vld [vmem:[#allocation5 + $0x8] sm:$0xff]
        %v211 = vld [vmem:[#allocation5 + $0x10] sm:$0xff]
        %v212 = vld [vmem:[#allocation5 + $0x18] sm:$0xff]
        %v213 = vld [vmem:[%s176] sm:$0xf]
        %v214 = vld [vmem:[%s176 + $0x8] sm:$0xf]
        %v215 = vld [vmem:[%s176 + $0x10] sm:$0xf]
        %v216 = vld [vmem:[%s176 + $0x18] sm:$0xf]
        %v217 = vld [vmem:[%s176 + $0x20] sm:$0xf]
        %v218 = vld [vmem:[%s176 + $0x28] sm:$0xf]
        %v219 = vld [vmem:[%s176 + $0x30] sm:$0xf]
        %v220 = vld [vmem:[%s176 + $0x38] sm:$0xf]
        %v221 = vld [vmem:[%s176 + $0x40] sm:$0xf]
        %v222 = vld [vmem:[%s176 + $0x48] sm:$0xf]
        %v223 = vld [vmem:[%s176 + $0x50] sm:$0xf]
        %v224 = vld [vmem:[%s176 + $0x58] sm:$0xf]
        %v225 = vld [vmem:[%s176 + $0x60] sm:$0xf]
        %v226 = vld [vmem:[%s176 + $0x68] sm:$0xf]
        %v227 = vld [vmem:[%s176 + $0x70] sm:$0xf]
        %v228 = vld [vmem:[%s176 + $0x78] sm:$0xf]
        %v229 = vld [vmem:[%s176 + $0x80] sm:$0xf]
        %v230 = vld [vmem:[%s176 + $0x88] sm:$0xf]
        %v231 = vld [vmem:[%s176 + $0x90] sm:$0xf]
        %v232 = vld [vmem:[%s176 + $0x98] sm:$0xf]
        %v233 = vld [vmem:[%s176 + $0xa0] sm:$0xf]
        %v234 = vld [vmem:[%s176 + $0xa8] sm:$0xf]
        %v235 = vld [vmem:[%s176 + $0xb0] sm:$0xf]
        %v236 = vld [vmem:[%s176 + $0xb8] sm:$0xf]
        %v237 = vld [vmem:[%s176 + $0xc0] sm:$0xf]
        %v238 = vld [vmem:[%s176 + $0xc8] sm:$0xf]
        %v239 = vld [vmem:[%s176 + $0xd0] sm:$0xf]
        %v240 = vld [vmem:[%s176 + $0xd8] sm:$0xf]
        %v241 = vld [vmem:[%s176 + $0xe0] sm:$0xf]
        %v242 = vld [vmem:[%s176 + $0xe8] sm:$0xf]
        %v243 = vld [vmem:[%s176 + $0xf0] sm:$0xf]
        %v244 = vld [vmem:[%s176 + $0xf8] sm:$0xf]
        %v245 = vld [vmem:[%s176 + $0x100] sm:$0xf]
        %v246 = vld [vmem:[%s176 + $0x108] sm:$0xf]
        %v247 = vld [vmem:[%s176 + $0x110] sm:$0xf]
        %v248 = vld [vmem:[%s176 + $0x118] sm:$0xf]
        %v249 = vld [vmem:[%s176 + $0x120] sm:$0xf]
        %v250 = vld [vmem:[%s176 + $0x128] sm:$0xf]
        %v251 = vld [vmem:[%s176 + $0x130] sm:$0xf]
        %v252 = vld [vmem:[%s176 + $0x138] sm:$0xf]
        %v253 = vld [vmem:[%s176 + $0x140] sm:$0xf]
        %v254 = vld [vmem:[%s176 + $0x148] sm:$0xf]
        %v255 = vld [vmem:[%s176 + $0x150] sm:$0xf]
        %v256 = vld [vmem:[%s176 + $0x158] sm:$0xf]
        %v257 = vld [vmem:[%s176 + $0x160] sm:$0xf]
        %v258 = vld [vmem:[%s176 + $0x168] sm:$0xf]
        %v259 = vld [vmem:[%s176 + $0x170] sm:$0xf]
        %v260 = vld [vmem:[%s176 + $0x178] sm:$0xf]
        %v261 = vld [vmem:[%s176 + $0x180] sm:$0xf]
        %v262 = vld [vmem:[%s176 + $0x188] sm:$0xf]
        %v263 = vld [vmem:[%s176 + $0x190] sm:$0xf]
        %v264 = vld [vmem:[%s176 + $0x198] sm:$0xf]
        %v265 = vld [vmem:[%s176 + $0x1a0] sm:$0xf]
        %v266 = vld [vmem:[%s176 + $0x1a8] sm:$0xf]
        %v267 = vld [vmem:[%s176 + $0x1b0] sm:$0xf]
        %v268 = vld [vmem:[%s176 + $0x1b8] sm:$0xf]
        %v269 = vld [vmem:[%s176 + $0x1c0] sm:$0xf]
        %v270 = vld [vmem:[%s176 + $0x1c8] sm:$0xf]
        %v271 = vld [vmem:[%s176 + $0x1d0] sm:$0xf]
        %v272 = vld [vmem:[%s176 + $0x1d8] sm:$0xf]
        %v273 = vld [vmem:[%s176 + $0x1e0] sm:$0xf]
        %v274 = vld [vmem:[%s176 + $0x1e8] sm:$0xf]
        %v275 = vld [vmem:[%s176 + $0x1f0] sm:$0xf]
        %v276 = vld [vmem:[%s176 + $0x1f8] sm:$0xf]
        %v281 = vunpack.c.l.b16 %v209
        %v282 = vunpack.c.h.b16 %v209
        %v283 = vunpack.c.l.b16 %v210
        %v284 = vunpack.c.h.b16 %v210
        %v285 = vunpack.c.l.b16 %v211
        %v286 = vunpack.c.h.b16 %v211
        %v287 = vunpack.c.l.b16 %v212
        %v288 = vunpack.c.h.b16 %v212
        %v289 = vpack.c.b16 %v285, %v281
        %v290 = vpack.c.b16 %v286, %v282
        %v291 = vpack.c.b16 %v287, %v283
        %v292 = vpack.c.b16 %v288, %v284
        %v361 = vunpack.c.l.b16 %v213
        %v362 = vunpack.c.l.b16 %v214
        %v363 = vunpack.c.l.b16 %v215
        %v364 = vunpack.c.l.b16 %v216
        %v365 = vunpack.c.l.b16 %v217
        %v366 = vunpack.c.l.b16 %v218
        %v367 = vunpack.c.l.b16 %v219
        %v368 = vunpack.c.l.b16 %v220
        %v369 = vunpack.c.l.b16 %v221
        %v370 = vunpack.c.l.b16 %v222
        %v371 = vunpack.c.l.b16 %v223
        %v372 = vunpack.c.l.b16 %v224
        %v373 = vunpack.c.l.b16 %v225
        %v374 = vunpack.c.l.b16 %v226
        %v375 = vunpack.c.l.b16 %v227
        %v376 = vunpack.c.l.b16 %v228
        %v377 = vunpack.c.l.b16 %v229
        %v378 = vunpack.c.l.b16 %v230
        %v379 = vunpack.c.l.b16 %v231
        %v380 = vunpack.c.l.b16 %v232
        %v381 = vunpack.c.l.b16 %v233
        %v382 = vunpack.c.l.b16 %v234
        %v383 = vunpack.c.l.b16 %v235
        %v384 = vunpack.c.l.b16 %v236
        %v385 = vunpack.c.l.b16 %v237
        %v386 = vunpack.c.l.b16 %v238
        %v387 = vunpack.c.l.b16 %v239
        %v388 = vunpack.c.l.b16 %v240
        %v389 = vunpack.c.l.b16 %v241
        %v390 = vunpack.c.l.b16 %v242
        %v391 = vunpack.c.l.b16 %v243
        %v392 = vunpack.c.l.b16 %v244
        %v393 = vunpack.c.l.b16 %v245
        %v394 = vunpack.c.l.b16 %v246
        %v395 = vunpack.c.l.b16 %v247
        %v396 = vunpack.c.l.b16 %v248
        %v397 = vunpack.c.l.b16 %v249
        %v398 = vunpack.c.l.b16 %v250
        %v399 = vunpack.c.l.b16 %v251
        %v400 = vunpack.c.l.b16 %v252
        %v401 = vunpack.c.l.b16 %v253
        %v402 = vunpack.c.l.b16 %v254
        %v403 = vunpack.c.l.b16 %v255
        %v404 = vunpack.c.l.b16 %v256
        %v405 = vunpack.c.l.b16 %v257
        %v406 = vunpack.c.l.b16 %v258
        %v407 = vunpack.c.l.b16 %v259
        %v408 = vunpack.c.l.b16 %v260
        %v409 = vunpack.c.l.b16 %v261
        %v410 = vunpack.c.l.b16 %v262
        %v411 = vunpack.c.l.b16 %v263
        %v412 = vunpack.c.l.b16 %v264
        %v413 = vunpack.c.l.b16 %v265
        %v414 = vunpack.c.l.b16 %v266
        %v415 = vunpack.c.l.b16 %v267
        %v416 = vunpack.c.l.b16 %v268
        %v417 = vunpack.c.l.b16 %v269
        %v418 = vunpack.c.l.b16 %v270
        %v419 = vunpack.c.l.b16 %v271
        %v420 = vunpack.c.l.b16 %v272
        %v421 = vunpack.c.l.b16 %v273
        %v422 = vunpack.c.l.b16 %v274
        %v423 = vunpack.c.l.b16 %v275
        %v424 = vunpack.c.l.b16 %v276
        %v425 = vpack.c.b16 %v362, %v361
        %v426 = vpack.c.b16 %v364, %v363
        %v427 = vpack.c.b16 %v366, %v365
        %v428 = vpack.c.b16 %v368, %v367
        %v429 = vpack.c.b16 %v370, %v369
        %v430 = vpack.c.b16 %v372, %v371
        %v431 = vpack.c.b16 %v374, %v373
        %v432 = vpack.c.b16 %v376, %v375
        %v433 = vpack.c.b16 %v378, %v377
        %v434 = vpack.c.b16 %v380, %v379
        %v435 = vpack.c.b16 %v382, %v381
        %v436 = vpack.c.b16 %v384, %v383
        %v437 = vpack.c.b16 %v386, %v385
        %v438 = vpack.c.b16 %v388, %v387
        %v439 = vpack.c.b16 %v390, %v389
        %v440 = vpack.c.b16 %v392, %v391
        %v441 = vpack.c.b16 %v394, %v393
        %v442 = vpack.c.b16 %v396, %v395
        %v443 = vpack.c.b16 %v398, %v397
        %v444 = vpack.c.b16 %v400, %v399
        %v445 = vpack.c.b16 %v402, %v401
        %v446 = vpack.c.b16 %v404, %v403
        %v447 = vpack.c.b16 %v406, %v405
        %v448 = vpack.c.b16 %v408, %v407
        %v449 = vpack.c.b16 %v410, %v409
        %v450 = vpack.c.b16 %v412, %v411
        %v451 = vpack.c.b16 %v414, %v413
        %v452 = vpack.c.b16 %v416, %v415
        %v453 = vpack.c.b16 %v418, %v417
        %v454 = vpack.c.b16 %v420, %v419
        %v455 = vpack.c.b16 %v422, %v421
        %v456 = vpack.c.b16 %v424, %v423
        %489 = vmatprep.subr.bf16.mxu0 0
        %490 = vmatpush1.bf16.msra.mxu0 %v432
        %491 = vmatprep.subr.bf16.mxu0 0
        %492 = vmatpush1.bf16.msra.mxu0 %v431
        %493 = vmatprep.subr.bf16.mxu0 0
        %494 = vmatpush1.bf16.msra.mxu0 %v430
        %495 = vmatprep.subr.bf16.mxu0 0
        %496 = vmatpush1.bf16.msra.mxu0 %v429
        %497 = vmatprep.subr.bf16.mxu0 0
        %498 = vmatpush1.bf16.msra.mxu0 %v428
        %499 = vmatprep.subr.bf16.mxu0 0
        %500 = vmatpush1.bf16.msra.mxu0 %v427
        %501 = vmatprep.subr.bf16.mxu0 0
        %502 = vmatpush1.bf16.msra.mxu0 %v426
        %503 = vmatprep.subr.bf16.mxu0 0
        %504 = vmatpush1.bf16.msra.mxu0 %v425
        %505 = vmatprep.subr.bf16.mxu0 0
        %506 = vmatpush2.bf16.msra.mxu0 %v440
        %507 = vmatprep.subr.bf16.mxu0 0
        %508 = vmatpush2.bf16.msra.mxu0 %v439
        %509 = vmatprep.subr.bf16.mxu0 0
        %510 = vmatpush2.bf16.msra.mxu0 %v438
        %511 = vmatprep.subr.bf16.mxu0 0
        %512 = vmatpush2.bf16.msra.mxu0 %v437
        %513 = vmatprep.subr.bf16.mxu0 0
        %514 = vmatpush2.bf16.msra.mxu0 %v436
        %515 = vmatprep.subr.bf16.mxu0 0
        %516 = vmatpush2.bf16.msra.mxu0 %v435
        %517 = vmatprep.subr.bf16.mxu0 0
        %518 = vmatpush2.bf16.msra.mxu0 %v434
        %519 = vmatprep.subr.bf16.mxu0 0
        %520 = vmatpush2.bf16.msra.mxu0 %v433
        %521 = vmatprep.mubr.bf16.mxu0 %v290
        %522 = vmatmul.mubr.bf16.gmra.mxu0 %v289
        %v523 = vpop.f32.mrf.mxu0
        %v524 = vadd.f32 0.0, %v523
        %v525 = vpop.f32.mrf.mxu0
        %v526 = vpop.f32.mrf.mxu0
        %v527 = vpop.f32.mrf.mxu0
        %528 = vdwg.mxu0
        %529 = vmatprep.subr.bf16.mxu0 0
        %530 = vmatpush1.bf16.msra.mxu0 %v448
        %531 = vmatprep.subr.bf16.mxu0 0
        %532 = vmatpush1.bf16.msra.mxu0 %v447
        %533 = vmatprep.subr.bf16.mxu0 0
        %534 = vmatpush1.bf16.msra.mxu0 %v446
        %535 = vmatprep.subr.bf16.mxu0 0
        %536 = vmatpush1.bf16.msra.mxu0 %v445
        %537 = vmatprep.subr.bf16.mxu0 0
        %538 = vmatpush1.bf16.msra.mxu0 %v444
        %539 = vmatprep.subr.bf16.mxu0 0
        %540 = vmatpush1.bf16.msra.mxu0 %v443
        %541 = vmatprep.subr.bf16.mxu0 0
        %542 = vmatpush1.bf16.msra.mxu0 %v442
        %543 = vmatprep.subr.bf16.mxu0 0
        %544 = vmatpush1.bf16.msra.mxu0 %v441
        %545 = vmatprep.subr.bf16.mxu0 0
        %546 = vmatpush2.bf16.msra.mxu0 %v456
        %547 = vmatprep.subr.bf16.mxu0 0
        %548 = vmatpush2.bf16.msra.mxu0 %v455
        %549 = vmatprep.subr.bf16.mxu0 0
        %550 = vmatpush2.bf16.msra.mxu0 %v454
        %551 = vmatprep.subr.bf16.mxu0 0
        %552 = vmatpush2.bf16.msra.mxu0 %v453
        %553 = vmatprep.subr.bf16.mxu0 0
        %554 = vmatpush2.bf16.msra.mxu0 %v452
        %555 = vmatprep.subr.bf16.mxu0 0
        %556 = vmatpush2.bf16.msra.mxu0 %v451
        %557 = vmatprep.subr.bf16.mxu0 0
        %558 = vmatpush2.bf16.msra.mxu0 %v450
        %559 = vmatprep.subr.bf16.mxu0 0
        %560 = vmatpush2.bf16.msra.mxu0 %v449
        %561 = vmatprep.mubr.bf16.mxu0 %v292
        %562 = vmatmul.mubr.bf16.gmra.mxu0 %v291
        %v563 = vpop.f32.mrf.mxu0
        %v564 = vadd.f32 %v524, %v563
        %v565 = vpop.f32.mrf.mxu0
        %v566 = vpop.f32.mrf.mxu0
        %v567 = vpop.f32.mrf.mxu0
        %568 = vdwg.mxu0
        %v570 = vrot.slane %v564, 1
        %571 = vrot.lane.b32.xlu0 %v570, 127
        %v572 = vpop.permute.xlu0 %571
        %v574 = vadd.f32 %v564, %v572
        %v575 = vrot.slane %v564, 2
        %576 = vrot.lane.b32.xlu0 %v575, 126
        %v577 = vpop.permute.xlu0 %576
        %v579 = vadd.f32 %v574, %v577
        %v580 = vrot.slane %v564, 3
        %581 = vrot.lane.b32.xlu0 %v580, 125
        %v582 = vpop.permute.xlu0 %581
        %v584 = vadd.f32 %v579, %v582
        %585 = vrot.lane.b32.xlu0 %v425, 112
        %v586 = vpop.permute.xlu0 %585
        %587 = vrot.lane.b32.xlu0 %v426, 112
        %v588 = vpop.permute.xlu0 %587
        %589 = vrot.lane.b32.xlu0 %v427, 112
        %v590 = vpop.permute.xlu0 %589
        %591 = vrot.lane.b32.xlu0 %v428, 112
        %v592 = vpop.permute.xlu0 %591
        %593 = vrot.lane.b32.xlu0 %v429, 112
        %v594 = vpop.permute.xlu0 %593
        %595 = vrot.lane.b32.xlu0 %v430, 112
        %v596 = vpop.permute.xlu0 %595
        %597 = vrot.lane.b32.xlu0 %v431, 112
        %v598 = vpop.permute.xlu0 %597
        %599 = vrot.lane.b32.xlu0 %v432, 112
        %v600 = vpop.permute.xlu0 %599
        %601 = vrot.lane.b32.xlu0 %v433, 112
        %v602 = vpop.permute.xlu0 %601
        %603 = vrot.lane.b32.xlu0 %v434, 112
        %v604 = vpop.permute.xlu0 %603
        %605 = vrot.lane.b32.xlu0 %v435, 112
        %v606 = vpop.permute.xlu0 %605
        %607 = vrot.lane.b32.xlu0 %v436, 112
        %v608 = vpop.permute.xlu0 %607
        %609 = vrot.lane.b32.xlu0 %v437, 112
        %v610 = vpop.permute.xlu0 %609
        %611 = vrot.lane.b32.xlu0 %v438, 112
        %v612 = vpop.permute.xlu0 %611
        %613 = vrot.lane.b32.xlu0 %v439, 112
        %v614 = vpop.permute.xlu0 %613
        %615 = vrot.lane.b32.xlu0 %v440, 112
        %v616 = vpop.permute.xlu0 %615
        %617 = vrot.lane.b32.xlu0 %v441, 112
        %v618 = vpop.permute.xlu0 %617
        %619 = vrot.lane.b32.xlu0 %v442, 112
        %v620 = vpop.permute.xlu0 %619
        %621 = vrot.lane.b32.xlu0 %v443, 112
        %v622 = vpop.permute.xlu0 %621
        %623 = vrot.lane.b32.xlu0 %v444, 112
        %v624 = vpop.permute.xlu0 %623
        %625 = vrot.lane.b32.xlu0 %v445, 112
        %v626 = vpop.permute.xlu0 %625
        %627 = vrot.lane.b32.xlu0 %v446, 112
        %v628 = vpop.permute.xlu0 %627
        %629 = vrot.lane.b32.xlu0 %v447, 112
        %v630 = vpop.permute.xlu0 %629
        %631 = vrot.lane.b32.xlu0 %v448, 112
        %v632 = vpop.permute.xlu0 %631
        %633 = vrot.lane.b32.xlu0 %v449, 112
        %v634 = vpop.permute.xlu0 %633
        %635 = vrot.lane.b32.xlu0 %v450, 112
        %v636 = vpop.permute.xlu0 %635
        %637 = vrot.lane.b32.xlu0 %v451, 112
        %v638 = vpop.permute.xlu0 %637
        %639 = vrot.lane.b32.xlu0 %v452, 112
        %v640 = vpop.permute.xlu0 %639
        %641 = vrot.lane.b32.xlu0 %v453, 112
        %v642 = vpop.permute.xlu0 %641
        %643 = vrot.lane.b32.xlu0 %v454, 112
        %v644 = vpop.permute.xlu0 %643
        %645 = vrot.lane.b32.xlu0 %v455, 112
        %v646 = vpop.permute.xlu0 %645
        %647 = vrot.lane.b32.xlu0 %v456, 112
        %v648 = vpop.permute.xlu0 %647
        %681 = vmatprep.subr.bf16.mxu0 0
        %682 = vmatpush1.bf16.msra.mxu0 %v600
        %683 = vmatprep.subr.bf16.mxu0 0
        %684 = vmatpush1.bf16.msra.mxu0 %v598
        %685 = vmatprep.subr.bf16.mxu0 0
        %686 = vmatpush1.bf16.msra.mxu0 %v596
        %687 = vmatprep.subr.bf16.mxu0 0
        %688 = vmatpush1.bf16.msra.mxu0 %v594
        %689 = vmatprep.subr.bf16.mxu0 0
        %690 = vmatpush1.bf16.msra.mxu0 %v592
        %691 = vmatprep.subr.bf16.mxu0 0
        %692 = vmatpush1.bf16.msra.mxu0 %v590
        %693 = vmatprep.subr.bf16.mxu0 0
        %694 = vmatpush1.bf16.msra.mxu0 %v588
        %695 = vmatprep.subr.bf16.mxu0 0
        %696 = vmatpush1.bf16.msra.mxu0 %v586
        %697 = vmatprep.subr.bf16.mxu0 0
        %698 = vmatpush2.bf16.msra.mxu0 %v616
        %699 = vmatprep.subr.bf16.mxu0 0
        %700 = vmatpush2.bf16.msra.mxu0 %v614
        %701 = vmatprep.subr.bf16.mxu0 0
        %702 = vmatpush2.bf16.msra.mxu0 %v612
        %703 = vmatprep.subr.bf16.mxu0 0
        %704 = vmatpush2.bf16.msra.mxu0 %v610
        %705 = vmatprep.subr.bf16.mxu0 0
        %706 = vmatpush2.bf16.msra.mxu0 %v608
        %707 = vmatprep.subr.bf16.mxu0 0
        %708 = vmatpush2.bf16.msra.mxu0 %v606
        %709 = vmatprep.subr.bf16.mxu0 0
        %710 = vmatpush2.bf16.msra.mxu0 %v604
        %711 = vmatprep.subr.bf16.mxu0 0
        %712 = vmatpush2.bf16.msra.mxu0 %v602
        %713 = vmatprep.mubr.bf16.mxu0 %v290
        %714 = vmatmul.mubr.bf16.gmra.mxu0 %v289
        %v715 = vpop.f32.mrf.mxu0
        %v716 = vadd.f32 0.0, %v715
        %v717 = vpop.f32.mrf.mxu0
        %v718 = vpop.f32.mrf.mxu0
        %v719 = vpop.f32.mrf.mxu0
        %720 = vdwg.mxu0
        %721 = vmatprep.subr.bf16.mxu0 0
        %722 = vmatpush1.bf16.msra.mxu0 %v632
        %723 = vmatprep.subr.bf16.mxu0 0
        %724 = vmatpush1.bf16.msra.mxu0 %v630
        %725 = vmatprep.subr.bf16.mxu0 0
        %726 = vmatpush1.bf16.msra.mxu0 %v628
        %727 = vmatprep.subr.bf16.mxu0 0
        %728 = vmatpush1.bf16.msra.mxu0 %v626
        %729 = vmatprep.subr.bf16.mxu0 0
        %730 = vmatpush1.bf16.msra.mxu0 %v624
        %731 = vmatprep.subr.bf16.mxu0 0
        %732 = vmatpush1.bf16.msra.mxu0 %v622
        %733 = vmatprep.subr.bf16.mxu0 0
        %734 = vmatpush1.bf16.msra.mxu0 %v620
        %735 = vmatprep.subr.bf16.mxu0 0
        %736 = vmatpush1.bf16.msra.mxu0 %v618
        %737 = vmatprep.subr.bf16.mxu0 0
        %738 = vmatpush2.bf16.msra.mxu0 %v648
        %739 = vmatprep.subr.bf16.mxu0 0
        %740 = vmatpush2.bf16.msra.mxu0 %v646
        %741 = vmatprep.subr.bf16.mxu0 0
        %742 = vmatpush2.bf16.msra.mxu0 %v644
        %743 = vmatprep.subr.bf16.mxu0 0
        %744 = vmatpush2.bf16.msra.mxu0 %v642
        %745 = vmatprep.subr.bf16.mxu0 0
        %746 = vmatpush2.bf16.msra.mxu0 %v640
        %747 = vmatprep.subr.bf16.mxu0 0
        %748 = vmatpush2.bf16.msra.mxu0 %v638
        %749 = vmatprep.subr.bf16.mxu0 0
        %750 = vmatpush2.bf16.msra.mxu0 %v636
        %751 = vmatprep.subr.bf16.mxu0 0
        %752 = vmatpush2.bf16.msra.mxu0 %v634
        %753 = vmatprep.mubr.bf16.mxu0 %v292
        %754 = vmatmul.mubr.bf16.gmra.mxu0 %v291
        %v755 = vpop.f32.mrf.mxu0
        %v756 = vadd.f32 %v716, %v755
        %v757 = vpop.f32.mrf.mxu0
        %v758 = vpop.f32.mrf.mxu0
        %v759 = vpop.f32.mrf.mxu0
        %760 = vdwg.mxu0
        %v762 = vrot.slane %v756, 4
        %v764 = vadd.f32 %v584, %v762
        %v765 = vrot.slane %v756, 5
        %766 = vrot.lane.b32.xlu0 %v765, 127
        %v767 = vpop.permute.xlu0 %766
        %v769 = vadd.f32 %v764, %v767
        %v770 = vrot.slane %v756, 6
        %771 = vrot.lane.b32.xlu0 %v770, 126
        %v772 = vpop.permute.xlu0 %771
        %v774 = vadd.f32 %v769, %v772
        %v775 = vrot.slane %v756, 7
        %776 = vrot.lane.b32.xlu0 %v775, 125
        %v777 = vpop.permute.xlu0 %776
        %v779 = vadd.f32 %v774, %v777
        %780 = vrot.lane.b32.xlu0 %v425, 96
        %v781 = vpop.permute.xlu0 %780
        %782 = vrot.lane.b32.xlu0 %v426, 96
        %v783 = vpop.permute.xlu0 %782
        %784 = vrot.lane.b32.xlu0 %v427, 96
        %v785 = vpop.permute.xlu0 %784
        %786 = vrot.lane.b32.xlu0 %v428, 96
        %v787 = vpop.permute.xlu0 %786
        %788 = vrot.lane.b32.xlu0 %v429, 96
        %v789 = vpop.permute.xlu0 %788
        %790 = vrot.lane.b32.xlu0 %v430, 96
        %v791 = vpop.permute.xlu0 %790
        %792 = vrot.lane.b32.xlu0 %v431, 96
        %v793 = vpop.permute.xlu0 %792
        %794 = vrot.lane.b32.xlu0 %v432, 96
        %v795 = vpop.permute.xlu0 %794
        %796 = vrot.lane.b32.xlu0 %v433, 96
        %v797 = vpop.permute.xlu0 %796
        %798 = vrot.lane.b32.xlu0 %v434, 96
        %v799 = vpop.permute.xlu0 %798
        %800 = vrot.lane.b32.xlu0 %v435, 96
        %v801 = vpop.permute.xlu0 %800
        %802 = vrot.lane.b32.xlu0 %v436, 96
        %v803 = vpop.permute.xlu0 %802
        %804 = vrot.lane.b32.xlu0 %v437, 96
        %v805 = vpop.permute.xlu0 %804
        %806 = vrot.lane.b32.xlu0 %v438, 96
        %v807 = vpop.permute.xlu0 %806
        %808 = vrot.lane.b32.xlu0 %v439, 96
        %v809 = vpop.permute.xlu0 %808
        %810 = vrot.lane.b32.xlu0 %v440, 96
        %v811 = vpop.permute.xlu0 %810
        %812 = vrot.lane.b32.xlu0 %v441, 96
        %v813 = vpop.permute.xlu0 %812
        %814 = vrot.lane.b32.xlu0 %v442, 96
        %v815 = vpop.permute.xlu0 %814
        %816 = vrot.lane.b32.xlu0 %v443, 96
        %v817 = vpop.permute.xlu0 %816
        %818 = vrot.lane.b32.xlu0 %v444, 96
        %v819 = vpop.permute.xlu0 %818
        %820 = vrot.lane.b32.xlu0 %v445, 96
        %v821 = vpop.permute.xlu0 %820
        %822 = vrot.lane.b32.xlu0 %v446, 96
        %v823 = vpop.permute.xlu0 %822
        %824 = vrot.lane.b32.xlu0 %v447, 96
        %v825 = vpop.permute.xlu0 %824
        %826 = vrot.lane.b32.xlu0 %v448, 96
        %v827 = vpop.permute.xlu0 %826
        %828 = vrot.lane.b32.xlu0 %v449, 96
        %v829 = vpop.permute.xlu0 %828
        %830 = vrot.lane.b32.xlu0 %v450, 96
        %v831 = vpop.permute.xlu0 %830
        %832 = vrot.lane.b32.xlu0 %v451, 96
        %v833 = vpop.permute.xlu0 %832
        %834 = vrot.lane.b32.xlu0 %v452, 96
        %v835 = vpop.permute.xlu0 %834
        %836 = vrot.lane.b32.xlu0 %v453, 96
        %v837 = vpop.permute.xlu0 %836
        %838 = vrot.lane.b32.xlu0 %v454, 96
        %v839 = vpop.permute.xlu0 %838
        %840 = vrot.lane.b32.xlu0 %v455, 96
        %v841 = vpop.permute.xlu0 %840
        %842 = vrot.lane.b32.xlu0 %v456, 96
        %v843 = vpop.permute.xlu0 %842
        %876 = vmatprep.subr.bf16.mxu0 0
        %877 = vmatpush1.bf16.msra.mxu0 %v795
        %878 = vmatprep.subr.bf16.mxu0 0
        %879 = vmatpush1.bf16.msra.mxu0 %v793
        %880 = vmatprep.subr.bf16.mxu0 0
        %881 = vmatpush1.bf16.msra.mxu0 %v791
        %882 = vmatprep.subr.bf16.mxu0 0
        %883 = vmatpush1.bf16.msra.mxu0 %v789
        %884 = vmatprep.subr.bf16.mxu0 0
        %885 = vmatpush1.bf16.msra.mxu0 %v787
        %886 = vmatprep.subr.bf16.mxu0 0
        %887 = vmatpush1.bf16.msra.mxu0 %v785
        %888 = vmatprep.subr.bf16.mxu0 0
        %889 = vmatpush1.bf16.msra.mxu0 %v783
        %890 = vmatprep.subr.bf16.mxu0 0
        %891 = vmatpush1.bf16.msra.mxu0 %v781
        %892 = vmatprep.subr.bf16.mxu0 0
        %893 = vmatpush2.bf16.msra.mxu0 %v811
        %894 = vmatprep.subr.bf16.mxu0 0
        %895 = vmatpush2.bf16.msra.mxu0 %v809
        %896 = vmatprep.subr.bf16.mxu0 0
        %897 = vmatpush2.bf16.msra.mxu0 %v807
        %898 = vmatprep.subr.bf16.mxu0 0
        %899 = vmatpush2.bf16.msra.mxu0 %v805
        %900 = vmatprep.subr.bf16.mxu0 0
        %901 = vmatpush2.bf16.msra.mxu0 %v803
        %902 = vmatprep.subr.bf16.mxu0 0
        %903 = vmatpush2.bf16.msra.mxu0 %v801
        %904 = vmatprep.subr.bf16.mxu0 0
        %905 = vmatpush2.bf16.msra.mxu0 %v799
        %906 = vmatprep.subr.bf16.mxu0 0
        %907 = vmatpush2.bf16.msra.mxu0 %v797
        %908 = vmatprep.mubr.bf16.mxu0 %v290
        %909 = vmatmul.mubr.bf16.gmra.mxu0 %v289
        %v910 = vpop.f32.mrf.mxu0
        %v911 = vadd.f32 0.0, %v910
        %v912 = vpop.f32.mrf.mxu0
        %v913 = vpop.f32.mrf.mxu0
        %v914 = vadd.f32 0.0, %v913
        %v915 = vpop.f32.mrf.mxu0
        %916 = vdwg.mxu0
        %917 = vmatprep.subr.bf16.mxu0 0
        %918 = vmatpush1.bf16.msra.mxu0 %v827
        %919 = vmatprep.subr.bf16.mxu0 0
        %920 = vmatpush1.bf16.msra.mxu0 %v825
        %921 = vmatprep.subr.bf16.mxu0 0
        %922 = vmatpush1.bf16.msra.mxu0 %v823
        %923 = vmatprep.subr.bf16.mxu0 0
        %924 = vmatpush1.bf16.msra.mxu0 %v821
        %925 = vmatprep.subr.bf16.mxu0 0
        %926 = vmatpush1.bf16.msra.mxu0 %v819
        %927 = vmatprep.subr.bf16.mxu0 0
        %928 = vmatpush1.bf16.msra.mxu0 %v817
        %929 = vmatprep.subr.bf16.mxu0 0
        %930 = vmatpush1.bf16.msra.mxu0 %v815
        %931 = vmatprep.subr.bf16.mxu0 0
        %932 = vmatpush1.bf16.msra.mxu0 %v813
        %933 = vmatprep.subr.bf16.mxu0 0
        %934 = vmatpush2.bf16.msra.mxu0 %v843
        %935 = vmatprep.subr.bf16.mxu0 0
        %936 = vmatpush2.bf16.msra.mxu0 %v841
        %937 = vmatprep.subr.bf16.mxu0 0
        %938 = vmatpush2.bf16.msra.mxu0 %v839
        %939 = vmatprep.subr.bf16.mxu0 0
        %940 = vmatpush2.bf16.msra.mxu0 %v837
        %941 = vmatprep.subr.bf16.mxu0 0
        %942 = vmatpush2.bf16.msra.mxu0 %v835
        %943 = vmatprep.subr.bf16.mxu0 0
        %944 = vmatpush2.bf16.msra.mxu0 %v833
        %945 = vmatprep.subr.bf16.mxu0 0
        %946 = vmatpush2.bf16.msra.mxu0 %v831
        %947 = vmatprep.subr.bf16.mxu0 0
        %948 = vmatpush2.bf16.msra.mxu0 %v829
        %949 = vmatprep.mubr.bf16.mxu0 %v292
        %950 = vmatmul.mubr.bf16.gmra.mxu0 %v291
        %v951 = vpop.f32.mrf.mxu0
        %v952 = vadd.f32 %v911, %v951
        %v953 = vpop.f32.mrf.mxu0
        %v954 = vpop.f32.mrf.mxu0
        %v955 = vadd.f32 %v914, %v954
        %v956 = vpop.f32.mrf.mxu0
        %957 = vdwg.mxu0
        %v958 = vadd.f32 %v779, %v955
        %v960 = vrot.slane %v955, 1
        %961 = vrot.lane.b32.xlu0 %v960, 127
        %v962 = vpop.permute.xlu0 %961
        %v964 = vadd.f32 %v958, %v962
        %v965 = vrot.slane %v955, 2
        %966 = vrot.lane.b32.xlu0 %v965, 126
        %v967 = vpop.permute.xlu0 %966
        %v969 = vadd.f32 %v964, %v967
        %v970 = vrot.slane %v955, 3
        %971 = vrot.lane.b32.xlu0 %v970, 125
        %v972 = vpop.permute.xlu0 %971
        %v974 = vadd.f32 %v969, %v972
        %975 = vrot.lane.b32.xlu0 %v425, 80
        %v976 = vpop.permute.xlu0 %975
        %977 = vrot.lane.b32.xlu0 %v426, 80
        %v978 = vpop.permute.xlu0 %977
        %979 = vrot.lane.b32.xlu0 %v427, 80
        %v980 = vpop.permute.xlu0 %979
        %981 = vrot.lane.b32.xlu0 %v428, 80
        %v982 = vpop.permute.xlu0 %981
        %983 = vrot.lane.b32.xlu0 %v429, 80
        %v984 = vpop.permute.xlu0 %983
        %985 = vrot.lane.b32.xlu0 %v430, 80
        %v986 = vpop.permute.xlu0 %985
        %987 = vrot.lane.b32.xlu0 %v431, 80
        %v988 = vpop.permute.xlu0 %987
        %989 = vrot.lane.b32.xlu0 %v432, 80
        %v990 = vpop.permute.xlu0 %989
        %991 = vrot.lane.b32.xlu0 %v433, 80
        %v992 = vpop.permute.xlu0 %991
        %993 = vrot.lane.b32.xlu0 %v434, 80
        %v994 = vpop.permute.xlu0 %993
        %995 = vrot.lane.b32.xlu0 %v435, 80
        %v996 = vpop.permute.xlu0 %995
        %997 = vrot.lane.b32.xlu0 %v436, 80
        %v998 = vpop.permute.xlu0 %997
        %999 = vrot.lane.b32.xlu0 %v437, 80
        %v1000 = vpop.permute.xlu0 %999
        %1001 = vrot.lane.b32.xlu0 %v438, 80
        %v1002 = vpop.permute.xlu0 %1001
        %1003 = vrot.lane.b32.xlu0 %v439, 80
        %v1004 = vpop.permute.xlu0 %1003
        %1005 = vrot.lane.b32.xlu0 %v440, 80
        %v1006 = vpop.permute.xlu0 %1005
        %1007 = vrot.lane.b32.xlu0 %v441, 80
        %v1008 = vpop.permute.xlu0 %1007
        %1009 = vrot.lane.b32.xlu0 %v442, 80
        %v1010 = vpop.permute.xlu0 %1009
        %1011 = vrot.lane.b32.xlu0 %v443, 80
        %v1012 = vpop.permute.xlu0 %1011
        %1013 = vrot.lane.b32.xlu0 %v444, 80
        %v1014 = vpop.permute.xlu0 %1013
        %1015 = vrot.lane.b32.xlu0 %v445, 80
        %v1016 = vpop.permute.xlu0 %1015
        %1017 = vrot.lane.b32.xlu0 %v446, 80
        %v1018 = vpop.permute.xlu0 %1017
        %1019 = vrot.lane.b32.xlu0 %v447, 80
        %v1020 = vpop.permute.xlu0 %1019
        %1021 = vrot.lane.b32.xlu0 %v448, 80
        %v1022 = vpop.permute.xlu0 %1021
        %1023 = vrot.lane.b32.xlu0 %v449, 80
        %v1024 = vpop.permute.xlu0 %1023
        %1025 = vrot.lane.b32.xlu0 %v450, 80
        %v1026 = vpop.permute.xlu0 %1025
        %1027 = vrot.lane.b32.xlu0 %v451, 80
        %v1028 = vpop.permute.xlu0 %1027
        %1029 = vrot.lane.b32.xlu0 %v452, 80
        %v1030 = vpop.permute.xlu0 %1029
        %1031 = vrot.lane.b32.xlu0 %v453, 80
        %v1032 = vpop.permute.xlu0 %1031
        %1033 = vrot.lane.b32.xlu0 %v454, 80
        %v1034 = vpop.permute.xlu0 %1033
        %1035 = vrot.lane.b32.xlu0 %v455, 80
        %v1036 = vpop.permute.xlu0 %1035
        %1037 = vrot.lane.b32.xlu0 %v456, 80
        %v1038 = vpop.permute.xlu0 %1037
        %1071 = vmatprep.subr.bf16.mxu0 0
        %1072 = vmatpush1.bf16.msra.mxu0 %v990
        %1073 = vmatprep.subr.bf16.mxu0 0
        %1074 = vmatpush1.bf16.msra.mxu0 %v988
        %1075 = vmatprep.subr.bf16.mxu0 0
        %1076 = vmatpush1.bf16.msra.mxu0 %v986
        %1077 = vmatprep.subr.bf16.mxu0 0
        %1078 = vmatpush1.bf16.msra.mxu0 %v984
        %1079 = vmatprep.subr.bf16.mxu0 0
        %1080 = vmatpush1.bf16.msra.mxu0 %v982
        %1081 = vmatprep.subr.bf16.mxu0 0
        %1082 = vmatpush1.bf16.msra.mxu0 %v980
        %1083 = vmatprep.subr.bf16.mxu0 0
        %1084 = vmatpush1.bf16.msra.mxu0 %v978
        %1085 = vmatprep.subr.bf16.mxu0 0
        %1086 = vmatpush1.bf16.msra.mxu0 %v976
        %1087 = vmatprep.subr.bf16.mxu0 0
        %1088 = vmatpush2.bf16.msra.mxu0 %v1006
        %1089 = vmatprep.subr.bf16.mxu0 0
        %1090 = vmatpush2.bf16.msra.mxu0 %v1004
        %1091 = vmatprep.subr.bf16.mxu0 0
        %1092 = vmatpush2.bf16.msra.mxu0 %v1002
        %1093 = vmatprep.subr.bf16.mxu0 0
        %1094 = vmatpush2.bf16.msra.mxu0 %v1000
        %1095 = vmatprep.subr.bf16.mxu0 0
        %1096 = vmatpush2.bf16.msra.mxu0 %v998
        %1097 = vmatprep.subr.bf16.mxu0 0
        %1098 = vmatpush2.bf16.msra.mxu0 %v996
        %1099 = vmatprep.subr.bf16.mxu0 0
        %1100 = vmatpush2.bf16.msra.mxu0 %v994
        %1101 = vmatprep.subr.bf16.mxu0 0
        %1102 = vmatpush2.bf16.msra.mxu0 %v992
        %1103 = vmatprep.mubr.bf16.mxu0 %v290
        %1104 = vmatmul.mubr.bf16.gmra.mxu0 %v289
        %v1105 = vpop.f32.mrf.mxu0
        %v1106 = vadd.f32 0.0, %v1105
        %v1107 = vpop.f32.mrf.mxu0
        %v1108 = vpop.f32.mrf.mxu0
        %v1109 = vadd.f32 0.0, %v1108
        %v1110 = vpop.f32.mrf.mxu0
        %1111 = vdwg.mxu0
        %1112 = vmatprep.subr.bf16.mxu0 0
        %1113 = vmatpush1.bf16.msra.mxu0 %v1022
        %1114 = vmatprep.subr.bf16.mxu0 0
        %1115 = vmatpush1.bf16.msra.mxu0 %v1020
        %1116 = vmatprep.subr.bf16.mxu0 0
        %1117 = vmatpush1.bf16.msra.mxu0 %v1018
        %1118 = vmatprep.subr.bf16.mxu0 0
        %1119 = vmatpush1.bf16.msra.mxu0 %v1016
        %1120 = vmatprep.subr.bf16.mxu0 0
        %1121 = vmatpush1.bf16.msra.mxu0 %v1014
        %1122 = vmatprep.subr.bf16.mxu0 0
        %1123 = vmatpush1.bf16.msra.mxu0 %v1012
        %1124 = vmatprep.subr.bf16.mxu0 0
        %1125 = vmatpush1.bf16.msra.mxu0 %v1010
        %1126 = vmatprep.subr.bf16.mxu0 0
        %1127 = vmatpush1.bf16.msra.mxu0 %v1008
        %1128 = vmatprep.subr.bf16.mxu0 0
        %1129 = vmatpush2.bf16.msra.mxu0 %v1038
        %1130 = vmatprep.subr.bf16.mxu0 0
        %1131 = vmatpush2.bf16.msra.mxu0 %v1036
        %1132 = vmatprep.subr.bf16.mxu0 0
        %1133 = vmatpush2.bf16.msra.mxu0 %v1034
        %1134 = vmatprep.subr.bf16.mxu0 0
        %1135 = vmatpush2.bf16.msra.mxu0 %v1032
        %1136 = vmatprep.subr.bf16.mxu0 0
        %1137 = vmatpush2.bf16.msra.mxu0 %v1030
        %1138 = vmatprep.subr.bf16.mxu0 0
        %1139 = vmatpush2.bf16.msra.mxu0 %v1028
        %1140 = vmatprep.subr.bf16.mxu0 0
        %1141 = vmatpush2.bf16.msra.mxu0 %v1026
        %1142 = vmatprep.subr.bf16.mxu0 0
        %1143 = vmatpush2.bf16.msra.mxu0 %v1024
        %1144 = vmatprep.mubr.bf16.mxu0 %v292
        %1145 = vmatmul.mubr.bf16.gmra.mxu0 %v291
        %v1146 = vpop.f32.mrf.mxu0
        %v1147 = vadd.f32 %v1106, %v1146
        %v1148 = vpop.f32.mrf.mxu0
        %v1149 = vpop.f32.mrf.mxu0
        %v1150 = vadd.f32 %v1109, %v1149
        %v1151 = vpop.f32.mrf.mxu0
        %1152 = vdwg.mxu0
        %v1154 = vrot.slane %v1150, 4
        %v1156 = vadd.f32 %v974, %v1154
        %v1157 = vrot.slane %v1150, 5
        %1158 = vrot.lane.b32.xlu0 %v1157, 127
        %v1159 = vpop.permute.xlu0 %1158
        %v1161 = vadd.f32 %v1156, %v1159
        %v1162 = vrot.slane %v1150, 6
        %1163 = vrot.lane.b32.xlu0 %v1162, 126
        %v1164 = vpop.permute.xlu0 %1163
        %v1166 = vadd.f32 %v1161, %v1164
        %v1167 = vrot.slane %v1150, 7
        %1168 = vrot.lane.b32.xlu0 %v1167, 125
        %v1169 = vpop.permute.xlu0 %1168
        %v1171 = vadd.f32 %v1166, %v1169
        %v1172 = vrot.slane %v756, 1
        %1173 = vrot.lane.b32.xlu0 %v1172, 127
        %v1174 = vpop.permute.xlu0 %1173
        %v1176 = vadd.f32 %v756, %v1174
        %v1177 = vrot.slane %v756, 2
        %1178 = vrot.lane.b32.xlu0 %v1177, 126
        %v1179 = vpop.permute.xlu0 %1178
        %v1181 = vadd.f32 %v1176, %v1179
        %v1182 = vrot.slane %v756, 3
        %1183 = vrot.lane.b32.xlu0 %v1182, 125
        %v1184 = vpop.permute.xlu0 %1183
        %v1186 = vadd.f32 %v1181, %v1184
        %v1188 = vrot.slane %v952, 4
        %v1190 = vadd.f32 %v1186, %v1188
        %v1191 = vrot.slane %v952, 5
        %1192 = vrot.lane.b32.xlu0 %v1191, 127
        %v1193 = vpop.permute.xlu0 %1192
        %v1195 = vadd.f32 %v1190, %v1193
        %v1196 = vrot.slane %v952, 6
        %1197 = vrot.lane.b32.xlu0 %v1196, 126
        %v1198 = vpop.permute.xlu0 %1197
        %v1200 = vadd.f32 %v1195, %v1198
        %v1201 = vrot.slane %v952, 7
        %1202 = vrot.lane.b32.xlu0 %v1201, 125
        %v1203 = vpop.permute.xlu0 %1202
        %v1205 = vadd.f32 %v1200, %v1203
        %v1206 = vadd.f32 %v1205, %v1150
        %v1207 = vrot.slane %v1150, 1
        %1208 = vrot.lane.b32.xlu0 %v1207, 127
        %v1209 = vpop.permute.xlu0 %1208
        %v1211 = vadd.f32 %v1206, %v1209
        %v1212 = vrot.slane %v1150, 2
        %1213 = vrot.lane.b32.xlu0 %v1212, 126
        %v1214 = vpop.permute.xlu0 %1213
        %v1216 = vadd.f32 %v1211, %v1214
        %v1217 = vrot.slane %v1150, 3
        %1218 = vrot.lane.b32.xlu0 %v1217, 125
        %v1219 = vpop.permute.xlu0 %1218
        %v1221 = vadd.f32 %v1216, %v1219
        %1222 = vrot.lane.b32.xlu0 %v425, 64
        %v1223 = vpop.permute.xlu0 %1222
        %1224 = vrot.lane.b32.xlu0 %v426, 64
        %v1225 = vpop.permute.xlu0 %1224
        %1226 = vrot.lane.b32.xlu0 %v427, 64
        %v1227 = vpop.permute.xlu0 %1226
        %1228 = vrot.lane.b32.xlu0 %v428, 64
        %v1229 = vpop.permute.xlu0 %1228
        %1230 = vrot.lane.b32.xlu0 %v429, 64
        %v1231 = vpop.permute.xlu0 %1230
        %1232 = vrot.lane.b32.xlu0 %v430, 64
        %v1233 = vpop.permute.xlu0 %1232
        %1234 = vrot.lane.b32.xlu0 %v431, 64
        %v1235 = vpop.permute.xlu0 %1234
        %1236 = vrot.lane.b32.xlu0 %v432, 64
        %v1237 = vpop.permute.xlu0 %1236
        %1238 = vrot.lane.b32.xlu0 %v433, 64
        %v1239 = vpop.permute.xlu0 %1238
        %1240 = vrot.lane.b32.xlu0 %v434, 64
        %v1241 = vpop.permute.xlu0 %1240
        %1242 = vrot.lane.b32.xlu0 %v435, 64
        %v1243 = vpop.permute.xlu0 %1242
        %1244 = vrot.lane.b32.xlu0 %v436, 64
        %v1245 = vpop.permute.xlu0 %1244
        %1246 = vrot.lane.b32.xlu0 %v437, 64
        %v1247 = vpop.permute.xlu0 %1246
        %1248 = vrot.lane.b32.xlu0 %v438, 64
        %v1249 = vpop.permute.xlu0 %1248
        %1250 = vrot.lane.b32.xlu0 %v439, 64
        %v1251 = vpop.permute.xlu0 %1250
        %1252 = vrot.lane.b32.xlu0 %v440, 64
        %v1253 = vpop.permute.xlu0 %1252
        %1254 = vrot.lane.b32.xlu0 %v441, 64
        %v1255 = vpop.permute.xlu0 %1254
        %1256 = vrot.lane.b32.xlu0 %v442, 64
        %v1257 = vpop.permute.xlu0 %1256
        %1258 = vrot.lane.b32.xlu0 %v443, 64
        %v1259 = vpop.permute.xlu0 %1258
        %1260 = vrot.lane.b32.xlu0 %v444, 64
        %v1261 = vpop.permute.xlu0 %1260
        %1262 = vrot.lane.b32.xlu0 %v445, 64
        %v1263 = vpop.permute.xlu0 %1262
        %1264 = vrot.lane.b32.xlu0 %v446, 64
        %v1265 = vpop.permute.xlu0 %1264
        %1266 = vrot.lane.b32.xlu0 %v447, 64
        %v1267 = vpop.permute.xlu0 %1266
        %1268 = vrot.lane.b32.xlu0 %v448, 64
        %v1269 = vpop.permute.xlu0 %1268
        %1270 = vrot.lane.b32.xlu0 %v449, 64
        %v1271 = vpop.permute.xlu0 %1270
        %1272 = vrot.lane.b32.xlu0 %v450, 64
        %v1273 = vpop.permute.xlu0 %1272
        %1274 = vrot.lane.b32.xlu0 %v451, 64
        %v1275 = vpop.permute.xlu0 %1274
        %1276 = vrot.lane.b32.xlu0 %v452, 64
        %v1277 = vpop.permute.xlu0 %1276
        %1278 = vrot.lane.b32.xlu0 %v453, 64
        %v1279 = vpop.permute.xlu0 %1278
        %1280 = vrot.lane.b32.xlu0 %v454, 64
        %v1281 = vpop.permute.xlu0 %1280
        %1282 = vrot.lane.b32.xlu0 %v455, 64
        %v1283 = vpop.permute.xlu0 %1282
        %1284 = vrot.lane.b32.xlu0 %v456, 64
        %v1285 = vpop.permute.xlu0 %1284
        %1318 = vmatprep.subr.bf16.mxu0 0
        %1319 = vmatpush1.bf16.msra.mxu0 %v1237
        %1320 = vmatprep.subr.bf16.mxu0 0
        %1321 = vmatpush1.bf16.msra.mxu0 %v1235
        %1322 = vmatprep.subr.bf16.mxu0 0
        %1323 = vmatpush1.bf16.msra.mxu0 %v1233
        %1324 = vmatprep.subr.bf16.mxu0 0
        %1325 = vmatpush1.bf16.msra.mxu0 %v1231
        %1326 = vmatprep.subr.bf16.mxu0 0
        %1327 = vmatpush1.bf16.msra.mxu0 %v1229
        %1328 = vmatprep.subr.bf16.mxu0 0
        %1329 = vmatpush1.bf16.msra.mxu0 %v1227
        %1330 = vmatprep.subr.bf16.mxu0 0
        %1331 = vmatpush1.bf16.msra.mxu0 %v1225
        %1332 = vmatprep.subr.bf16.mxu0 0
        %1333 = vmatpush1.bf16.msra.mxu0 %v1223
        %1334 = vmatprep.subr.bf16.mxu0 0
        %1335 = vmatpush2.bf16.msra.mxu0 %v1253
        %1336 = vmatprep.subr.bf16.mxu0 0
        %1337 = vmatpush2.bf16.msra.mxu0 %v1251
        %1338 = vmatprep.subr.bf16.mxu0 0
        %1339 = vmatpush2.bf16.msra.mxu0 %v1249
        %1340 = vmatprep.subr.bf16.mxu0 0
        %1341 = vmatpush2.bf16.msra.mxu0 %v1247
        %1342 = vmatprep.subr.bf16.mxu0 0
        %1343 = vmatpush2.bf16.msra.mxu0 %v1245
        %1344 = vmatprep.subr.bf16.mxu0 0
        %1345 = vmatpush2.bf16.msra.mxu0 %v1243
        %1346 = vmatprep.subr.bf16.mxu0 0
        %1347 = vmatpush2.bf16.msra.mxu0 %v1241
        %1348 = vmatprep.subr.bf16.mxu0 0
        %1349 = vmatpush2.bf16.msra.mxu0 %v1239
        %1350 = vmatprep.mubr.bf16.mxu0 %v290
        %1351 = vmatmul.mubr.bf16.gmra.mxu0 %v289
        %v1352 = vpop.f32.mrf.mxu0
        %v1353 = vadd.f32 0.0, %v1352
        %v1354 = vpop.f32.mrf.mxu0
        %v1355 = vpop.f32.mrf.mxu0
        %v1356 = vadd.f32 0.0, %v1355
        %v1357 = vpop.f32.mrf.mxu0
        %1358 = vdwg.mxu0
        %1359 = vmatprep.subr.bf16.mxu0 0
        %1360 = vmatpush1.bf16.msra.mxu0 %v1269
        %1361 = vmatprep.subr.bf16.mxu0 0
        %1362 = vmatpush1.bf16.msra.mxu0 %v1267
        %1363 = vmatprep.subr.bf16.mxu0 0
        %1364 = vmatpush1.bf16.msra.mxu0 %v1265
        %1365 = vmatprep.subr.bf16.mxu0 0
        %1366 = vmatpush1.bf16.msra.mxu0 %v1263
        %1367 = vmatprep.subr.bf16.mxu0 0
        %1368 = vmatpush1.bf16.msra.mxu0 %v1261
        %1369 = vmatprep.subr.bf16.mxu0 0
        %1370 = vmatpush1.bf16.msra.mxu0 %v1259
        %1371 = vmatprep.subr.bf16.mxu0 0
        %1372 = vmatpush1.bf16.msra.mxu0 %v1257
        %1373 = vmatprep.subr.bf16.mxu0 0
        %1374 = vmatpush1.bf16.msra.mxu0 %v1255
        %1375 = vmatprep.subr.bf16.mxu0 0
        %1376 = vmatpush2.bf16.msra.mxu0 %v1285
        %1377 = vmatprep.subr.bf16.mxu0 0
        %1378 = vmatpush2.bf16.msra.mxu0 %v1283
        %1379 = vmatprep.subr.bf16.mxu0 0
        %1380 = vmatpush2.bf16.msra.mxu0 %v1281
        %1381 = vmatprep.subr.bf16.mxu0 0
        %1382 = vmatpush2.bf16.msra.mxu0 %v1279
        %1383 = vmatprep.subr.bf16.mxu0 0
        %1384 = vmatpush2.bf16.msra.mxu0 %v1277
        %1385 = vmatprep.subr.bf16.mxu0 0
        %1386 = vmatpush2.bf16.msra.mxu0 %v1275
        %1387 = vmatprep.subr.bf16.mxu0 0
        %1388 = vmatpush2.bf16.msra.mxu0 %v1273
        %1389 = vmatprep.subr.bf16.mxu0 0
        %1390 = vmatpush2.bf16.msra.mxu0 %v1271
        %1391 = vmatprep.mubr.bf16.mxu0 %v292
        %1392 = vmatmul.mubr.bf16.gmra.mxu0 %v291
        %v1393 = vpop.f32.mrf.mxu0
        %v1394 = vadd.f32 %v1353, %v1393
        %v1395 = vpop.f32.mrf.mxu0
        %v1396 = vpop.f32.mrf.mxu0
        %v1397 = vadd.f32 %v1356, %v1396
        %v1398 = vpop.f32.mrf.mxu0
        %1399 = vdwg.mxu0
        %v1401 = vrot.slane %v1397, 4
        %v1403 = vadd.f32 %v1221, %v1401
        %v1404 = vrot.slane %v1397, 5
        %1405 = vrot.lane.b32.xlu0 %v1404, 127
        %v1406 = vpop.permute.xlu0 %1405
        %v1408 = vadd.f32 %v1403, %v1406
        %v1409 = vrot.slane %v1397, 6
        %1410 = vrot.lane.b32.xlu0 %v1409, 126
        %v1411 = vpop.permute.xlu0 %1410
        %v1413 = vadd.f32 %v1408, %v1411
        %v1414 = vrot.slane %v1397, 7
        %1415 = vrot.lane.b32.xlu0 %v1414, 125
        %v1416 = vpop.permute.xlu0 %1415
        %v1418 = vadd.f32 %v1413, %v1416
        %v1419 = vrot.slane %v952, 1
        %1420 = vrot.lane.b32.xlu0 %v1419, 127
        %v1421 = vpop.permute.xlu0 %1420
        %v1423 = vadd.f32 %v952, %v1421
        %v1424 = vrot.slane %v952, 2
        %1425 = vrot.lane.b32.xlu0 %v1424, 126
        %v1426 = vpop.permute.xlu0 %1425
        %v1428 = vadd.f32 %v1423, %v1426
        %v1429 = vrot.slane %v952, 3
        %1430 = vrot.lane.b32.xlu0 %v1429, 125
        %v1431 = vpop.permute.xlu0 %1430
        %v1433 = vadd.f32 %v1428, %v1431
        %v1435 = vrot.slane %v1147, 4
        %v1437 = vadd.f32 %v1433, %v1435
        %v1438 = vrot.slane %v1147, 5
        %1439 = vrot.lane.b32.xlu0 %v1438, 127
        %v1440 = vpop.permute.xlu0 %1439
        %v1442 = vadd.f32 %v1437, %v1440
        %v1443 = vrot.slane %v1147, 6
        %1444 = vrot.lane.b32.xlu0 %v1443, 126
        %v1445 = vpop.permute.xlu0 %1444
        %v1447 = vadd.f32 %v1442, %v1445
        %v1448 = vrot.slane %v1147, 7
        %1449 = vrot.lane.b32.xlu0 %v1448, 125
        %v1450 = vpop.permute.xlu0 %1449
        %v1452 = vadd.f32 %v1447, %v1450
        %v1453 = vadd.f32 %v1452, %v1397
        %v1454 = vrot.slane %v1397, 1
        %1455 = vrot.lane.b32.xlu0 %v1454, 127
        %v1456 = vpop.permute.xlu0 %1455
        %v1458 = vadd.f32 %v1453, %v1456
        %v1459 = vrot.slane %v1397, 2
        %1460 = vrot.lane.b32.xlu0 %v1459, 126
        %v1461 = vpop.permute.xlu0 %1460
        %v1463 = vadd.f32 %v1458, %v1461
        %v1464 = vrot.slane %v1397, 3
        %1465 = vrot.lane.b32.xlu0 %v1464, 125
        %v1466 = vpop.permute.xlu0 %1465
        %v1468 = vadd.f32 %v1463, %v1466
        %1469 = vrot.lane.b32.xlu0 %v425, 48
        %v1470 = vpop.permute.xlu0 %1469
        %1471 = vrot.lane.b32.xlu0 %v426, 48
        %v1472 = vpop.permute.xlu0 %1471
        %1473 = vrot.lane.b32.xlu0 %v427, 48
        %v1474 = vpop.permute.xlu0 %1473
        %1475 = vrot.lane.b32.xlu0 %v428, 48
        %v1476 = vpop.permute.xlu0 %1475
        %1477 = vrot.lane.b32.xlu0 %v429, 48
        %v1478 = vpop.permute.xlu0 %1477
        %1479 = vrot.lane.b32.xlu0 %v430, 48
        %v1480 = vpop.permute.xlu0 %1479
        %1481 = vrot.lane.b32.xlu0 %v431, 48
        %v1482 = vpop.permute.xlu0 %1481
        %1483 = vrot.lane.b32.xlu0 %v432, 48
        %v1484 = vpop.permute.xlu0 %1483
        %1485 = vrot.lane.b32.xlu0 %v433, 48
        %v1486 = vpop.permute.xlu0 %1485
        %1487 = vrot.lane.b32.xlu0 %v434, 48
        %v1488 = vpop.permute.xlu0 %1487
        %1489 = vrot.lane.b32.xlu0 %v435, 48
        %v1490 = vpop.permute.xlu0 %1489
        %1491 = vrot.lane.b32.xlu0 %v436, 48
        %v1492 = vpop.permute.xlu0 %1491
        %1493 = vrot.lane.b32.xlu0 %v437, 48
        %v1494 = vpop.permute.xlu0 %1493
        %1495 = vrot.lane.b32.xlu0 %v438, 48
        %v1496 = vpop.permute.xlu0 %1495
        %1497 = vrot.lane.b32.xlu0 %v439, 48
        %v1498 = vpop.permute.xlu0 %1497
        %1499 = vrot.lane.b32.xlu0 %v440, 48
        %v1500 = vpop.permute.xlu0 %1499
        %1501 = vrot.lane.b32.xlu0 %v441, 48
        %v1502 = vpop.permute.xlu0 %1501
        %1503 = vrot.lane.b32.xlu0 %v442, 48
        %v1504 = vpop.permute.xlu0 %1503
        %1505 = vrot.lane.b32.xlu0 %v443, 48
        %v1506 = vpop.permute.xlu0 %1505
        %1507 = vrot.lane.b32.xlu0 %v444, 48
        %v1508 = vpop.permute.xlu0 %1507
        %1509 = vrot.lane.b32.xlu0 %v445, 48
        %v1510 = vpop.permute.xlu0 %1509
        %1511 = vrot.lane.b32.xlu0 %v446, 48
        %v1512 = vpop.permute.xlu0 %1511
        %1513 = vrot.lane.b32.xlu0 %v447, 48
        %v1514 = vpop.permute.xlu0 %1513
        %1515 = vrot.lane.b32.xlu0 %v448, 48
        %v1516 = vpop.permute.xlu0 %1515
        %1517 = vrot.lane.b32.xlu0 %v449, 48
        %v1518 = vpop.permute.xlu0 %1517
        %1519 = vrot.lane.b32.xlu0 %v450, 48
        %v1520 = vpop.permute.xlu0 %1519
        %1521 = vrot.lane.b32.xlu0 %v451, 48
        %v1522 = vpop.permute.xlu0 %1521
        %1523 = vrot.lane.b32.xlu0 %v452, 48
        %v1524 = vpop.permute.xlu0 %1523
        %1525 = vrot.lane.b32.xlu0 %v453, 48
        %v1526 = vpop.permute.xlu0 %1525
        %1527 = vrot.lane.b32.xlu0 %v454, 48
        %v1528 = vpop.permute.xlu0 %1527
        %1529 = vrot.lane.b32.xlu0 %v455, 48
        %v1530 = vpop.permute.xlu0 %1529
        %1531 = vrot.lane.b32.xlu0 %v456, 48
        %v1532 = vpop.permute.xlu0 %1531
        %1565 = vmatprep.subr.bf16.mxu0 0
        %1566 = vmatpush1.bf16.msra.mxu0 %v1484
        %1567 = vmatprep.subr.bf16.mxu0 0
        %1568 = vmatpush1.bf16.msra.mxu0 %v1482
        %1569 = vmatprep.subr.bf16.mxu0 0
        %1570 = vmatpush1.bf16.msra.mxu0 %v1480
        %1571 = vmatprep.subr.bf16.mxu0 0
        %1572 = vmatpush1.bf16.msra.mxu0 %v1478
        %1573 = vmatprep.subr.bf16.mxu0 0
        %1574 = vmatpush1.bf16.msra.mxu0 %v1476
        %1575 = vmatprep.subr.bf16.mxu0 0
        %1576 = vmatpush1.bf16.msra.mxu0 %v1474
        %1577 = vmatprep.subr.bf16.mxu0 0
        %1578 = vmatpush1.bf16.msra.mxu0 %v1472
        %1579 = vmatprep.subr.bf16.mxu0 0
        %1580 = vmatpush1.bf16.msra.mxu0 %v1470
        %1581 = vmatprep.subr.bf16.mxu0 0
        %1582 = vmatpush2.bf16.msra.mxu0 %v1500
        %1583 = vmatprep.subr.bf16.mxu0 0
        %1584 = vmatpush2.bf16.msra.mxu0 %v1498
        %1585 = vmatprep.subr.bf16.mxu0 0
        %1586 = vmatpush2.bf16.msra.mxu0 %v1496
        %1587 = vmatprep.subr.bf16.mxu0 0
        %1588 = vmatpush2.bf16.msra.mxu0 %v1494
        %1589 = vmatprep.subr.bf16.mxu0 0
        %1590 = vmatpush2.bf16.msra.mxu0 %v1492
        %1591 = vmatprep.subr.bf16.mxu0 0
        %1592 = vmatpush2.bf16.msra.mxu0 %v1490
        %1593 = vmatprep.subr.bf16.mxu0 0
        %1594 = vmatpush2.bf16.msra.mxu0 %v1488
        %1595 = vmatprep.subr.bf16.mxu0 0
        %1596 = vmatpush2.bf16.msra.mxu0 %v1486
        %1597 = vmatprep.mubr.bf16.mxu0 %v290
        %1598 = vmatmul.mubr.bf16.gmra.mxu0 %v289
        %v1599 = vpop.f32.mrf.mxu0
        %v1600 = vadd.f32 0.0, %v1599
        %v1601 = vpop.f32.mrf.mxu0
        %v1602 = vpop.f32.mrf.mxu0
        %v1603 = vadd.f32 0.0, %v1602
        %v1604 = vpop.f32.mrf.mxu0
        %1605 = vdwg.mxu0
        %1606 = vmatprep.subr.bf16.mxu0 0
        %1607 = vmatpush1.bf16.msra.mxu0 %v1516
        %1608 = vmatprep.subr.bf16.mxu0 0
        %1609 = vmatpush1.bf16.msra.mxu0 %v1514
        %1610 = vmatprep.subr.bf16.mxu0 0
        %1611 = vmatpush1.bf16.msra.mxu0 %v1512
        %1612 = vmatprep.subr.bf16.mxu0 0
        %1613 = vmatpush1.bf16.msra.mxu0 %v1510
        %1614 = vmatprep.subr.bf16.mxu0 0
        %1615 = vmatpush1.bf16.msra.mxu0 %v1508
        %1616 = vmatprep.subr.bf16.mxu0 0
        %1617 = vmatpush1.bf16.msra.mxu0 %v1506
        %1618 = vmatprep.subr.bf16.mxu0 0
        %1619 = vmatpush1.bf16.msra.mxu0 %v1504
        %1620 = vmatprep.subr.bf16.mxu0 0
        %1621 = vmatpush1.bf16.msra.mxu0 %v1502
        %1622 = vmatprep.subr.bf16.mxu0 0
        %1623 = vmatpush2.bf16.msra.mxu0 %v1532
        %1624 = vmatprep.subr.bf16.mxu0 0
        %1625 = vmatpush2.bf16.msra.mxu0 %v1530
        %1626 = vmatprep.subr.bf16.mxu0 0
        %1627 = vmatpush2.bf16.msra.mxu0 %v1528
        %1628 = vmatprep.subr.bf16.mxu0 0
        %1629 = vmatpush2.bf16.msra.mxu0 %v1526
        %1630 = vmatprep.subr.bf16.mxu0 0
        %1631 = vmatpush2.bf16.msra.mxu0 %v1524
        %1632 = vmatprep.subr.bf16.mxu0 0
        %1633 = vmatpush2.bf16.msra.mxu0 %v1522
        %1634 = vmatprep.subr.bf16.mxu0 0
        %1635 = vmatpush2.bf16.msra.mxu0 %v1520
        %1636 = vmatprep.subr.bf16.mxu0 0
        %1637 = vmatpush2.bf16.msra.mxu0 %v1518
        %1638 = vmatprep.mubr.bf16.mxu0 %v292
        %1639 = vmatmul.mubr.bf16.gmra.mxu0 %v291
        %v1640 = vpop.f32.mrf.mxu0
        %v1641 = vadd.f32 %v1600, %v1640
        %v1642 = vpop.f32.mrf.mxu0
        %v1643 = vpop.f32.mrf.mxu0
        %v1644 = vadd.f32 %v1603, %v1643
        %v1645 = vpop.f32.mrf.mxu0
        %1646 = vdwg.mxu0
        %v1648 = vrot.slane %v1644, 4
        %v1650 = vadd.f32 %v1468, %v1648
        %v1651 = vrot.slane %v1644, 5
        %1652 = vrot.lane.b32.xlu0 %v1651, 127
        %v1653 = vpop.permute.xlu0 %1652
        %v1655 = vadd.f32 %v1650, %v1653
        %v1656 = vrot.slane %v1644, 6
        %1657 = vrot.lane.b32.xlu0 %v1656, 126
        %v1658 = vpop.permute.xlu0 %1657
        %v1660 = vadd.f32 %v1655, %v1658
        %v1661 = vrot.slane %v1644, 7
        %1662 = vrot.lane.b32.xlu0 %v1661, 125
        %v1663 = vpop.permute.xlu0 %1662
        %v1665 = vadd.f32 %v1660, %v1663
        %v1666 = vrot.slane %v1147, 1
        %1667 = vrot.lane.b32.xlu0 %v1666, 127
        %v1668 = vpop.permute.xlu0 %1667
        %v1670 = vadd.f32 %v1147, %v1668
        %v1671 = vrot.slane %v1147, 2
        %1672 = vrot.lane.b32.xlu0 %v1671, 126
        %v1673 = vpop.permute.xlu0 %1672
        %v1675 = vadd.f32 %v1670, %v1673
        %v1676 = vrot.slane %v1147, 3
        %1677 = vrot.lane.b32.xlu0 %v1676, 125
        %v1678 = vpop.permute.xlu0 %1677
        %v1680 = vadd.f32 %v1675, %v1678
        %v1682 = vrot.slane %v1394, 4
        %v1684 = vadd.f32 %v1680, %v1682
        %v1685 = vrot.slane %v1394, 5
        %1686 = vrot.lane.b32.xlu0 %v1685, 127
        %v1687 = vpop.permute.xlu0 %1686
        %v1689 = vadd.f32 %v1684, %v1687
        %v1690 = vrot.slane %v1394, 6
        %1691 = vrot.lane.b32.xlu0 %v1690, 126
        %v1692 = vpop.permute.xlu0 %1691
        %v1694 = vadd.f32 %v1689, %v1692
        %v1695 = vrot.slane %v1394, 7
        %1696 = vrot.lane.b32.xlu0 %v1695, 125
        %v1697 = vpop.permute.xlu0 %1696
        %v1699 = vadd.f32 %v1694, %v1697
        %v1700 = vadd.f32 %v1699, %v1644
        %v1701 = vrot.slane %v1644, 1
        %1702 = vrot.lane.b32.xlu0 %v1701, 127
        %v1703 = vpop.permute.xlu0 %1702
        %v1705 = vadd.f32 %v1700, %v1703
        %v1706 = vrot.slane %v1644, 2
        %1707 = vrot.lane.b32.xlu0 %v1706, 126
        %v1708 = vpop.permute.xlu0 %1707
        %v1710 = vadd.f32 %v1705, %v1708
        %v1711 = vrot.slane %v1644, 3
        %1712 = vrot.lane.b32.xlu0 %v1711, 125
        %v1713 = vpop.permute.xlu0 %1712
        %v1715 = vadd.f32 %v1710, %v1713
        %1716 = vrot.lane.b32.xlu0 %v425, 32
        %v1717 = vpop.permute.xlu0 %1716
        %1718 = vrot.lane.b32.xlu0 %v426, 32
        %v1719 = vpop.permute.xlu0 %1718
        %1720 = vrot.lane.b32.xlu0 %v427, 32
        %v1721 = vpop.permute.xlu0 %1720
        %1722 = vrot.lane.b32.xlu0 %v428, 32
        %v1723 = vpop.permute.xlu0 %1722
        %1724 = vrot.lane.b32.xlu0 %v429, 32
        %v1725 = vpop.permute.xlu0 %1724
        %1726 = vrot.lane.b32.xlu0 %v430, 32
        %v1727 = vpop.permute.xlu0 %1726
        %1728 = vrot.lane.b32.xlu0 %v431, 32
        %v1729 = vpop.permute.xlu0 %1728
        %1730 = vrot.lane.b32.xlu0 %v432, 32
        %v1731 = vpop.permute.xlu0 %1730
        %1732 = vrot.lane.b32.xlu0 %v433, 32
        %v1733 = vpop.permute.xlu0 %1732
        %1734 = vrot.lane.b32.xlu0 %v434, 32
        %v1735 = vpop.permute.xlu0 %1734
        %1736 = vrot.lane.b32.xlu0 %v435, 32
        %v1737 = vpop.permute.xlu0 %1736
        %1738 = vrot.lane.b32.xlu0 %v436, 32
        %v1739 = vpop.permute.xlu0 %1738
        %1740 = vrot.lane.b32.xlu0 %v437, 32
        %v1741 = vpop.permute.xlu0 %1740
        %1742 = vrot.lane.b32.xlu0 %v438, 32
        %v1743 = vpop.permute.xlu0 %1742
        %1744 = vrot.lane.b32.xlu0 %v439, 32
        %v1745 = vpop.permute.xlu0 %1744
        %1746 = vrot.lane.b32.xlu0 %v440, 32
        %v1747 = vpop.permute.xlu0 %1746
        %1748 = vrot.lane.b32.xlu0 %v441, 32
        %v1749 = vpop.permute.xlu0 %1748
        %1750 = vrot.lane.b32.xlu0 %v442, 32
        %v1751 = vpop.permute.xlu0 %1750
        %1752 = vrot.lane.b32.xlu0 %v443, 32
        %v1753 = vpop.permute.xlu0 %1752
        %1754 = vrot.lane.b32.xlu0 %v444, 32
        %v1755 = vpop.permute.xlu0 %1754
        %1756 = vrot.lane.b32.xlu0 %v445, 32
        %v1757 = vpop.permute.xlu0 %1756
        %1758 = vrot.lane.b32.xlu0 %v446, 32
        %v1759 = vpop.permute.xlu0 %1758
        %1760 = vrot.lane.b32.xlu0 %v447, 32
        %v1761 = vpop.permute.xlu0 %1760
        %1762 = vrot.lane.b32.xlu0 %v448, 32
        %v1763 = vpop.permute.xlu0 %1762
        %1764 = vrot.lane.b32.xlu0 %v449, 32
        %v1765 = vpop.permute.xlu0 %1764
        %1766 = vrot.lane.b32.xlu0 %v450, 32
        %v1767 = vpop.permute.xlu0 %1766
        %1768 = vrot.lane.b32.xlu0 %v451, 32
        %v1769 = vpop.permute.xlu0 %1768
        %1770 = vrot.lane.b32.xlu0 %v452, 32
        %v1771 = vpop.permute.xlu0 %1770
        %1772 = vrot.lane.b32.xlu0 %v453, 32
        %v1773 = vpop.permute.xlu0 %1772
        %1774 = vrot.lane.b32.xlu0 %v454, 32
        %v1775 = vpop.permute.xlu0 %1774
        %1776 = vrot.lane.b32.xlu0 %v455, 32
        %v1777 = vpop.permute.xlu0 %1776
        %1778 = vrot.lane.b32.xlu0 %v456, 32
        %v1779 = vpop.permute.xlu0 %1778
        %1812 = vmatprep.subr.bf16.mxu0 0
        %1813 = vmatpush1.bf16.msra.mxu0 %v1731
        %1814 = vmatprep.subr.bf16.mxu0 0
        %1815 = vmatpush1.bf16.msra.mxu0 %v1729
        %1816 = vmatprep.subr.bf16.mxu0 0
        %1817 = vmatpush1.bf16.msra.mxu0 %v1727
        %1818 = vmatprep.subr.bf16.mxu0 0
        %1819 = vmatpush1.bf16.msra.mxu0 %v1725
        %1820 = vmatprep.subr.bf16.mxu0 0
        %1821 = vmatpush1.bf16.msra.mxu0 %v1723
        %1822 = vmatprep.subr.bf16.mxu0 0
        %1823 = vmatpush1.bf16.msra.mxu0 %v1721
        %1824 = vmatprep.subr.bf16.mxu0 0
        %1825 = vmatpush1.bf16.msra.mxu0 %v1719
        %1826 = vmatprep.subr.bf16.mxu0 0
        %1827 = vmatpush1.bf16.msra.mxu0 %v1717
        %1828 = vmatprep.subr.bf16.mxu0 0
        %1829 = vmatpush2.bf16.msra.mxu0 %v1747
        %1830 = vmatprep.subr.bf16.mxu0 0
        %1831 = vmatpush2.bf16.msra.mxu0 %v1745
        %1832 = vmatprep.subr.bf16.mxu0 0
        %1833 = vmatpush2.bf16.msra.mxu0 %v1743
        %1834 = vmatprep.subr.bf16.mxu0 0
        %1835 = vmatpush2.bf16.msra.mxu0 %v1741
        %1836 = vmatprep.subr.bf16.mxu0 0
        %1837 = vmatpush2.bf16.msra.mxu0 %v1739
        %1838 = vmatprep.subr.bf16.mxu0 0
        %1839 = vmatpush2.bf16.msra.mxu0 %v1737
        %1840 = vmatprep.subr.bf16.mxu0 0
        %1841 = vmatpush2.bf16.msra.mxu0 %v1735
        %1842 = vmatprep.subr.bf16.mxu0 0
        %1843 = vmatpush2.bf16.msra.mxu0 %v1733
        %1844 = vmatprep.mubr.bf16.mxu0 %v290
        %1845 = vmatmul.mubr.bf16.gmra.mxu0 %v289
        %v1846 = vpop.f32.mrf.mxu0
        %v1847 = vadd.f32 0.0, %v1846
        %v1848 = vpop.f32.mrf.mxu0
        %v1849 = vpop.f32.mrf.mxu0
        %v1850 = vadd.f32 0.0, %v1849
        %v1851 = vpop.f32.mrf.mxu0
        %1852 = vdwg.mxu0
        %1853 = vmatprep.subr.bf16.mxu0 0
        %1854 = vmatpush1.bf16.msra.mxu0 %v1763
        %1855 = vmatprep.subr.bf16.mxu0 0
        %1856 = vmatpush1.bf16.msra.mxu0 %v1761
        %1857 = vmatprep.subr.bf16.mxu0 0
        %1858 = vmatpush1.bf16.msra.mxu0 %v1759
        %1859 = vmatprep.subr.bf16.mxu0 0
        %1860 = vmatpush1.bf16.msra.mxu0 %v1757
        %1861 = vmatprep.subr.bf16.mxu0 0
        %1862 = vmatpush1.bf16.msra.mxu0 %v1755
        %1863 = vmatprep.subr.bf16.mxu0 0
        %1864 = vmatpush1.bf16.msra.mxu0 %v1753
        %1865 = vmatprep.subr.bf16.mxu0 0
        %1866 = vmatpush1.bf16.msra.mxu0 %v1751
        %1867 = vmatprep.subr.bf16.mxu0 0
        %1868 = vmatpush1.bf16.msra.mxu0 %v1749
        %1869 = vmatprep.subr.bf16.mxu0 0
        %1870 = vmatpush2.bf16.msra.mxu0 %v1779
        %1871 = vmatprep.subr.bf16.mxu0 0
        %1872 = vmatpush2.bf16.msra.mxu0 %v1777
        %1873 = vmatprep.subr.bf16.mxu0 0
        %1874 = vmatpush2.bf16.msra.mxu0 %v1775
        %1875 = vmatprep.subr.bf16.mxu0 0
        %1876 = vmatpush2.bf16.msra.mxu0 %v1773
        %1877 = vmatprep.subr.bf16.mxu0 0
        %1878 = vmatpush2.bf16.msra.mxu0 %v1771
        %1879 = vmatprep.subr.bf16.mxu0 0
        %1880 = vmatpush2.bf16.msra.mxu0 %v1769
        %1881 = vmatprep.subr.bf16.mxu0 0
        %1882 = vmatpush2.bf16.msra.mxu0 %v1767
        %1883 = vmatprep.subr.bf16.mxu0 0
        %1884 = vmatpush2.bf16.msra.mxu0 %v1765
        %1885 = vmatprep.mubr.bf16.mxu0 %v292
        %1886 = vmatmul.mubr.bf16.gmra.mxu0 %v291
        %v1887 = vpop.f32.mrf.mxu0
        %v1888 = vadd.f32 %v1847, %v1887
        %v1889 = vpop.f32.mrf.mxu0
        %v1890 = vpop.f32.mrf.mxu0
        %v1891 = vadd.f32 %v1850, %v1890
        %v1892 = vpop.f32.mrf.mxu0
        %1893 = vdwg.mxu0
        %v1895 = vrot.slane %v1891, 4
        %v1897 = vadd.f32 %v1715, %v1895
        %v1898 = vrot.slane %v1891, 5
        %1899 = vrot.lane.b32.xlu0 %v1898, 127
        %v1900 = vpop.permute.xlu0 %1899
        %v1902 = vadd.f32 %v1897, %v1900
        %v1903 = vrot.slane %v1891, 6
        %1904 = vrot.lane.b32.xlu0 %v1903, 126
        %v1905 = vpop.permute.xlu0 %1904
        %v1907 = vadd.f32 %v1902, %v1905
        %v1908 = vrot.slane %v1891, 7
        %1909 = vrot.lane.b32.xlu0 %v1908, 125
        %v1910 = vpop.permute.xlu0 %1909
        %v1912 = vadd.f32 %v1907, %v1910
        %v1913 = vrot.slane %v1394, 1
        %1914 = vrot.lane.b32.xlu0 %v1913, 127
        %v1915 = vpop.permute.xlu0 %1914
        %v1917 = vadd.f32 %v1394, %v1915
        %v1918 = vrot.slane %v1394, 2
        %1919 = vrot.lane.b32.xlu0 %v1918, 126
        %v1920 = vpop.permute.xlu0 %1919
        %v1922 = vadd.f32 %v1917, %v1920
        %v1923 = vrot.slane %v1394, 3
        %1924 = vrot.lane.b32.xlu0 %v1923, 125
        %v1925 = vpop.permute.xlu0 %1924
        %v1927 = vadd.f32 %v1922, %v1925
        %v1929 = vrot.slane %v1641, 4
        %v1931 = vadd.f32 %v1927, %v1929
        %v1932 = vrot.slane %v1641, 5
        %1933 = vrot.lane.b32.xlu0 %v1932, 127
        %v1934 = vpop.permute.xlu0 %1933
        %v1936 = vadd.f32 %v1931, %v1934
        %v1937 = vrot.slane %v1641, 6
        %1938 = vrot.lane.b32.xlu0 %v1937, 126
        %v1939 = vpop.permute.xlu0 %1938
        %v1941 = vadd.f32 %v1936, %v1939
        %v1942 = vrot.slane %v1641, 7
        %1943 = vrot.lane.b32.xlu0 %v1942, 125
        %v1944 = vpop.permute.xlu0 %1943
        %v1946 = vadd.f32 %v1941, %v1944
        %v1947 = vadd.f32 %v1946, %v1891
        %v1948 = vrot.slane %v1891, 1
        %1949 = vrot.lane.b32.xlu0 %v1948, 127
        %v1950 = vpop.permute.xlu0 %1949
        %v1952 = vadd.f32 %v1947, %v1950
        %v1953 = vrot.slane %v1891, 2
        %1954 = vrot.lane.b32.xlu0 %v1953, 126
        %v1955 = vpop.permute.xlu0 %1954
        %v1957 = vadd.f32 %v1952, %v1955
        %v1958 = vrot.slane %v1891, 3
        %1959 = vrot.lane.b32.xlu0 %v1958, 125
        %v1960 = vpop.permute.xlu0 %1959
        %v1962 = vadd.f32 %v1957, %v1960
        %1963 = vrot.lane.b32.xlu0 %v425, 16
        %v1964 = vpop.permute.xlu0 %1963
        %1965 = vrot.lane.b32.xlu0 %v426, 16
        %v1966 = vpop.permute.xlu0 %1965
        %1967 = vrot.lane.b32.xlu0 %v427, 16
        %v1968 = vpop.permute.xlu0 %1967
        %1969 = vrot.lane.b32.xlu0 %v428, 16
        %v1970 = vpop.permute.xlu0 %1969
        %1971 = vrot.lane.b32.xlu0 %v429, 16
        %v1972 = vpop.permute.xlu0 %1971
        %1973 = vrot.lane.b32.xlu0 %v430, 16
        %v1974 = vpop.permute.xlu0 %1973
        %1975 = vrot.lane.b32.xlu0 %v431, 16
        %v1976 = vpop.permute.xlu0 %1975
        %1977 = vrot.lane.b32.xlu0 %v432, 16
        %v1978 = vpop.permute.xlu0 %1977
        %1979 = vrot.lane.b32.xlu0 %v433, 16
        %v1980 = vpop.permute.xlu0 %1979
        %1981 = vrot.lane.b32.xlu0 %v434, 16
        %v1982 = vpop.permute.xlu0 %1981
        %1983 = vrot.lane.b32.xlu0 %v435, 16
        %v1984 = vpop.permute.xlu0 %1983
        %1985 = vrot.lane.b32.xlu0 %v436, 16
        %v1986 = vpop.permute.xlu0 %1985
        %1987 = vrot.lane.b32.xlu0 %v437, 16
        %v1988 = vpop.permute.xlu0 %1987
        %1989 = vrot.lane.b32.xlu0 %v438, 16
        %v1990 = vpop.permute.xlu0 %1989
        %1991 = vrot.lane.b32.xlu0 %v439, 16
        %v1992 = vpop.permute.xlu0 %1991
        %1993 = vrot.lane.b32.xlu0 %v440, 16
        %v1994 = vpop.permute.xlu0 %1993
        %1995 = vrot.lane.b32.xlu0 %v441, 16
        %v1996 = vpop.permute.xlu0 %1995
        %1997 = vrot.lane.b32.xlu0 %v442, 16
        %v1998 = vpop.permute.xlu0 %1997
        %1999 = vrot.lane.b32.xlu0 %v443, 16
        %v2000 = vpop.permute.xlu0 %1999
        %2001 = vrot.lane.b32.xlu0 %v444, 16
        %v2002 = vpop.permute.xlu0 %2001
        %2003 = vrot.lane.b32.xlu0 %v445, 16
        %v2004 = vpop.permute.xlu0 %2003
        %2005 = vrot.lane.b32.xlu0 %v446, 16
        %v2006 = vpop.permute.xlu0 %2005
        %2007 = vrot.lane.b32.xlu0 %v447, 16
        %v2008 = vpop.permute.xlu0 %2007
        %2009 = vrot.lane.b32.xlu0 %v448, 16
        %v2010 = vpop.permute.xlu0 %2009
        %2011 = vrot.lane.b32.xlu0 %v449, 16
        %v2012 = vpop.permute.xlu0 %2011
        %2013 = vrot.lane.b32.xlu0 %v450, 16
        %v2014 = vpop.permute.xlu0 %2013
        %2015 = vrot.lane.b32.xlu0 %v451, 16
        %v2016 = vpop.permute.xlu0 %2015
        %2017 = vrot.lane.b32.xlu0 %v452, 16
        %v2018 = vpop.permute.xlu0 %2017
        %2019 = vrot.lane.b32.xlu0 %v453, 16
        %v2020 = vpop.permute.xlu0 %2019
        %2021 = vrot.lane.b32.xlu0 %v454, 16
        %v2022 = vpop.permute.xlu0 %2021
        %2023 = vrot.lane.b32.xlu0 %v455, 16
        %v2024 = vpop.permute.xlu0 %2023
        %2025 = vrot.lane.b32.xlu0 %v456, 16
        %v2026 = vpop.permute.xlu0 %2025
        %2059 = vmatprep.subr.bf16.mxu0 0
        %2060 = vmatpush1.bf16.msra.mxu0 %v1978
        %2061 = vmatprep.subr.bf16.mxu0 0
        %2062 = vmatpush1.bf16.msra.mxu0 %v1976
        %2063 = vmatprep.subr.bf16.mxu0 0
        %2064 = vmatpush1.bf16.msra.mxu0 %v1974
        %2065 = vmatprep.subr.bf16.mxu0 0
        %2066 = vmatpush1.bf16.msra.mxu0 %v1972
        %2067 = vmatprep.subr.bf16.mxu0 0
        %2068 = vmatpush1.bf16.msra.mxu0 %v1970
        %2069 = vmatprep.subr.bf16.mxu0 0
        %2070 = vmatpush1.bf16.msra.mxu0 %v1968
        %2071 = vmatprep.subr.bf16.mxu0 0
        %2072 = vmatpush1.bf16.msra.mxu0 %v1966
        %2073 = vmatprep.subr.bf16.mxu0 0
        %2074 = vmatpush1.bf16.msra.mxu0 %v1964
        %2075 = vmatprep.subr.bf16.mxu0 0
        %2076 = vmatpush2.bf16.msra.mxu0 %v1994
        %2077 = vmatprep.subr.bf16.mxu0 0
        %2078 = vmatpush2.bf16.msra.mxu0 %v1992
        %2079 = vmatprep.subr.bf16.mxu0 0
        %2080 = vmatpush2.bf16.msra.mxu0 %v1990
        %2081 = vmatprep.subr.bf16.mxu0 0
        %2082 = vmatpush2.bf16.msra.mxu0 %v1988
        %2083 = vmatprep.subr.bf16.mxu0 0
        %2084 = vmatpush2.bf16.msra.mxu0 %v1986
        %2085 = vmatprep.subr.bf16.mxu0 0
        %2086 = vmatpush2.bf16.msra.mxu0 %v1984
        %2087 = vmatprep.subr.bf16.mxu0 0
        %2088 = vmatpush2.bf16.msra.mxu0 %v1982
        %2089 = vmatprep.subr.bf16.mxu0 0
        %2090 = vmatpush2.bf16.msra.mxu0 %v1980
        %2091 = vmatprep.mubr.bf16.mxu0 %v290
        %2092 = vmatmul.mubr.bf16.gmra.mxu0 %v289
        %v2093 = vpop.f32.mrf.mxu0
        %v2094 = vadd.f32 0.0, %v2093
        %v2095 = vpop.f32.mrf.mxu0
        %v2096 = vpop.f32.mrf.mxu0
        %v2097 = vadd.f32 0.0, %v2096
        %v2098 = vpop.f32.mrf.mxu0
        %2099 = vdwg.mxu0
        %2100 = vmatprep.subr.bf16.mxu0 0
        %2101 = vmatpush1.bf16.msra.mxu0 %v2010
        %2102 = vmatprep.subr.bf16.mxu0 0
        %2103 = vmatpush1.bf16.msra.mxu0 %v2008
        %2104 = vmatprep.subr.bf16.mxu0 0
        %2105 = vmatpush1.bf16.msra.mxu0 %v2006
        %2106 = vmatprep.subr.bf16.mxu0 0
        %2107 = vmatpush1.bf16.msra.mxu0 %v2004
        %2108 = vmatprep.subr.bf16.mxu0 0
        %2109 = vmatpush1.bf16.msra.mxu0 %v2002
        %2110 = vmatprep.subr.bf16.mxu0 0
        %2111 = vmatpush1.bf16.msra.mxu0 %v2000
        %2112 = vmatprep.subr.bf16.mxu0 0
        %2113 = vmatpush1.bf16.msra.mxu0 %v1998
        %2114 = vmatprep.subr.bf16.mxu0 0
        %2115 = vmatpush1.bf16.msra.mxu0 %v1996
        %2116 = vmatprep.subr.bf16.mxu0 0
        %2117 = vmatpush2.bf16.msra.mxu0 %v2026
        %2118 = vmatprep.subr.bf16.mxu0 0
        %2119 = vmatpush2.bf16.msra.mxu0 %v2024
        %2120 = vmatprep.subr.bf16.mxu0 0
        %2121 = vmatpush2.bf16.msra.mxu0 %v2022
        %2122 = vmatprep.subr.bf16.mxu0 0
        %2123 = vmatpush2.bf16.msra.mxu0 %v2020
        %2124 = vmatprep.subr.bf16.mxu0 0
        %2125 = vmatpush2.bf16.msra.mxu0 %v2018
        %2126 = vmatprep.subr.bf16.mxu0 0
        %2127 = vmatpush2.bf16.msra.mxu0 %v2016
        %2128 = vmatprep.subr.bf16.mxu0 0
        %2129 = vmatpush2.bf16.msra.mxu0 %v2014
        %2130 = vmatprep.subr.bf16.mxu0 0
        %2131 = vmatpush2.bf16.msra.mxu0 %v2012
        %2132 = vmatprep.mubr.bf16.mxu0 %v292
        %2133 = vmatmul.mubr.bf16.gmra.mxu0 %v291
        %v2134 = vpop.f32.mrf.mxu0
        %v2135 = vadd.f32 %v2094, %v2134
        %v2136 = vpop.f32.mrf.mxu0
        %v2137 = vpop.f32.mrf.mxu0
        %v2138 = vadd.f32 %v2097, %v2137
        %v2139 = vpop.f32.mrf.mxu0
        %2140 = vdwg.mxu0
        %v2142 = vrot.slane %v2138, 4
        %v2144 = vadd.f32 %v1962, %v2142
        %v2145 = vrot.slane %v2138, 5
        %2146 = vrot.lane.b32.xlu0 %v2145, 127
        %v2147 = vpop.permute.xlu0 %2146
        %v2149 = vadd.f32 %v2144, %v2147
        %v2150 = vrot.slane %v2138, 6
        %2151 = vrot.lane.b32.xlu0 %v2150, 126
        %v2152 = vpop.permute.xlu0 %2151
        %v2154 = vadd.f32 %v2149, %v2152
        %v2155 = vrot.slane %v2138, 7
        %2156 = vrot.lane.b32.xlu0 %v2155, 125
        %v2157 = vpop.permute.xlu0 %2156
        %v2159 = vadd.f32 %v2154, %v2157
        %v2160 = vrot.slane %v1641, 1
        %2161 = vrot.lane.b32.xlu0 %v2160, 127
        %v2162 = vpop.permute.xlu0 %2161
        %v2164 = vadd.f32 %v1641, %v2162
        %v2165 = vrot.slane %v1641, 2
        %2166 = vrot.lane.b32.xlu0 %v2165, 126
        %v2167 = vpop.permute.xlu0 %2166
        %v2169 = vadd.f32 %v2164, %v2167
        %v2170 = vrot.slane %v1641, 3
        %2171 = vrot.lane.b32.xlu0 %v2170, 125
        %v2172 = vpop.permute.xlu0 %2171
        %v2174 = vadd.f32 %v2169, %v2172
        %v2176 = vrot.slane %v1888, 4
        %v2178 = vadd.f32 %v2174, %v2176
        %v2179 = vrot.slane %v1888, 5
        %2180 = vrot.lane.b32.xlu0 %v2179, 127
        %v2181 = vpop.permute.xlu0 %2180
        %v2183 = vadd.f32 %v2178, %v2181
        %v2184 = vrot.slane %v1888, 6
        %2185 = vrot.lane.b32.xlu0 %v2184, 126
        %v2186 = vpop.permute.xlu0 %2185
        %v2188 = vadd.f32 %v2183, %v2186
        %v2189 = vrot.slane %v1888, 7
        %2190 = vrot.lane.b32.xlu0 %v2189, 125
        %v2191 = vpop.permute.xlu0 %2190
        %v2193 = vadd.f32 %v2188, %v2191
        %v2194 = vadd.f32 %v2193, %v2138
        %v2195 = vrot.slane %v2138, 1
        %2196 = vrot.lane.b32.xlu0 %v2195, 127
        %v2197 = vpop.permute.xlu0 %2196
        %v2199 = vadd.f32 %v2194, %v2197
        %v2200 = vrot.slane %v2138, 2
        %2201 = vrot.lane.b32.xlu0 %v2200, 126
        %v2202 = vpop.permute.xlu0 %2201
        %v2204 = vadd.f32 %v2199, %v2202
        %v2205 = vrot.slane %v2138, 3
        %2206 = vrot.lane.b32.xlu0 %v2205, 125
        %v2207 = vpop.permute.xlu0 %2206
        %v2209 = vadd.f32 %v2204, %v2207
        %v2210 = vld [vmem:[%s176 + $0x4] sm:$0xf]
        %v2211 = vld [vmem:[%s176 + $0xc] sm:$0xf]
        %v2212 = vld [vmem:[%s176 + $0x14] sm:$0xf]
        %v2213 = vld [vmem:[%s176 + $0x1c] sm:$0xf]
        %v2214 = vld [vmem:[%s176 + $0x24] sm:$0xf]
        %v2215 = vld [vmem:[%s176 + $0x2c] sm:$0xf]
        %v2216 = vld [vmem:[%s176 + $0x34] sm:$0xf]
        %v2217 = vld [vmem:[%s176 + $0x3c] sm:$0xf]
        %v2218 = vld [vmem:[%s176 + $0x44] sm:$0xf]
        %v2219 = vld [vmem:[%s176 + $0x4c] sm:$0xf]
        %v2220 = vld [vmem:[%s176 + $0x54] sm:$0xf]
        %v2221 = vld [vmem:[%s176 + $0x5c] sm:$0xf]
        %v2222 = vld [vmem:[%s176 + $0x64] sm:$0xf]
        %v2223 = vld [vmem:[%s176 + $0x6c] sm:$0xf]
        %v2224 = vld [vmem:[%s176 + $0x74] sm:$0xf]
        %v2225 = vld [vmem:[%s176 + $0x7c] sm:$0xf]
        %v2226 = vld [vmem:[%s176 + $0x84] sm:$0xf]
        %v2227 = vld [vmem:[%s176 + $0x8c] sm:$0xf]
        %v2228 = vld [vmem:[%s176 + $0x94] sm:$0xf]
        %v2229 = vld [vmem:[%s176 + $0x9c] sm:$0xf]
        %v2230 = vld [vmem:[%s176 + $0xa4] sm:$0xf]
        %v2231 = vld [vmem:[%s176 + $0xac] sm:$0xf]
        %v2232 = vld [vmem:[%s176 + $0xb4] sm:$0xf]
        %v2233 = vld [vmem:[%s176 + $0xbc] sm:$0xf]
        %v2234 = vld [vmem:[%s176 + $0xc4] sm:$0xf]
        %v2235 = vld [vmem:[%s176 + $0xcc] sm:$0xf]
        %v2236 = vld [vmem:[%s176 + $0xd4] sm:$0xf]
        %v2237 = vld [vmem:[%s176 + $0xdc] sm:$0xf]
        %v2238 = vld [vmem:[%s176 + $0xe4] sm:$0xf]
        %v2239 = vld [vmem:[%s176 + $0xec] sm:$0xf]
        %v2240 = vld [vmem:[%s176 + $0xf4] sm:$0xf]
        %v2241 = vld [vmem:[%s176 + $0xfc] sm:$0xf]
        %v2242 = vld [vmem:[%s176 + $0x104] sm:$0xf]
        %v2243 = vld [vmem:[%s176 + $0x10c] sm:$0xf]
        %v2244 = vld [vmem:[%s176 + $0x114] sm:$0xf]
        %v2245 = vld [vmem:[%s176 + $0x11c] sm:$0xf]
        %v2246 = vld [vmem:[%s176 + $0x124] sm:$0xf]
        %v2247 = vld [vmem:[%s176 + $0x12c] sm:$0xf]
        %v2248 = vld [vmem:[%s176 + $0x134] sm:$0xf]
        %v2249 = vld [vmem:[%s176 + $0x13c] sm:$0xf]
        %v2250 = vld [vmem:[%s176 + $0x144] sm:$0xf]
        %v2251 = vld [vmem:[%s176 + $0x14c] sm:$0xf]
        %v2252 = vld [vmem:[%s176 + $0x154] sm:$0xf]
        %v2253 = vld [vmem:[%s176 + $0x15c] sm:$0xf]
        %v2254 = vld [vmem:[%s176 + $0x164] sm:$0xf]
        %v2255 = vld [vmem:[%s176 + $0x16c] sm:$0xf]
        %v2256 = vld [vmem:[%s176 + $0x174] sm:$0xf]
        %v2257 = vld [vmem:[%s176 + $0x17c] sm:$0xf]
        %v2258 = vld [vmem:[%s176 + $0x184] sm:$0xf]
        %v2259 = vld [vmem:[%s176 + $0x18c] sm:$0xf]
        %v2260 = vld [vmem:[%s176 + $0x194] sm:$0xf]
        %v2261 = vld [vmem:[%s176 + $0x19c] sm:$0xf]
        %v2262 = vld [vmem:[%s176 + $0x1a4] sm:$0xf]
        %v2263 = vld [vmem:[%s176 + $0x1ac] sm:$0xf]
        %v2264 = vld [vmem:[%s176 + $0x1b4] sm:$0xf]
        %v2265 = vld [vmem:[%s176 + $0x1bc] sm:$0xf]
        %v2266 = vld [vmem:[%s176 + $0x1c4] sm:$0xf]
        %v2267 = vld [vmem:[%s176 + $0x1cc] sm:$0xf]
        %v2268 = vld [vmem:[%s176 + $0x1d4] sm:$0xf]
        %v2269 = vld [vmem:[%s176 + $0x1dc] sm:$0xf]
        %v2270 = vld [vmem:[%s176 + $0x1e4] sm:$0xf]
        %v2271 = vld [vmem:[%s176 + $0x1ec] sm:$0xf]
        %v2272 = vld [vmem:[%s176 + $0x1f4] sm:$0xf]
        %v2273 = vld [vmem:[%s176 + $0x1fc] sm:$0xf]
        %v2338 = vunpack.c.l.b16 %v2210
        %v2339 = vunpack.c.l.b16 %v2211
        %v2340 = vunpack.c.l.b16 %v2212
        %v2341 = vunpack.c.l.b16 %v2213
        %v2342 = vunpack.c.l.b16 %v2214
        %v2343 = vunpack.c.l.b16 %v2215
        %v2344 = vunpack.c.l.b16 %v2216
        %v2345 = vunpack.c.l.b16 %v2217
        %v2346 = vunpack.c.l.b16 %v2218
        %v2347 = vunpack.c.l.b16 %v2219
        %v2348 = vunpack.c.l.b16 %v2220
        %v2349 = vunpack.c.l.b16 %v2221
        %v2350 = vunpack.c.l.b16 %v2222
        %v2351 = vunpack.c.l.b16 %v2223
        %v2352 = vunpack.c.l.b16 %v2224
        %v2353 = vunpack.c.l.b16 %v2225
        %v2354 = vunpack.c.l.b16 %v2226
        %v2355 = vunpack.c.l.b16 %v2227
        %v2356 = vunpack.c.l.b16 %v2228
        %v2357 = vunpack.c.l.b16 %v2229
        %v2358 = vunpack.c.l.b16 %v2230
        %v2359 = vunpack.c.l.b16 %v2231
        %v2360 = vunpack.c.l.b16 %v2232
        %v2361 = vunpack.c.l.b16 %v2233
        %v2362 = vunpack.c.l.b16 %v2234
        %v2363 = vunpack.c.l.b16 %v2235
        %v2364 = vunpack.c.l.b16 %v2236
        %v2365 = vunpack.c.l.b16 %v2237
        %v2366 = vunpack.c.l.b16 %v2238
        %v2367 = vunpack.c.l.b16 %v2239
        %v2368 = vunpack.c.l.b16 %v2240
        %v2369 = vunpack.c.l.b16 %v2241
        %v2370 = vunpack.c.l.b16 %v2242
        %v2371 = vunpack.c.l.b16 %v2243
        %v2372 = vunpack.c.l.b16 %v2244
        %v2373 = vunpack.c.l.b16 %v2245
        %v2374 = vunpack.c.l.b16 %v2246
        %v2375 = vunpack.c.l.b16 %v2247
        %v2376 = vunpack.c.l.b16 %v2248
        %v2377 = vunpack.c.l.b16 %v2249
        %v2378 = vunpack.c.l.b16 %v2250
        %v2379 = vunpack.c.l.b16 %v2251
        %v2380 = vunpack.c.l.b16 %v2252
        %v2381 = vunpack.c.l.b16 %v2253
        %v2382 = vunpack.c.l.b16 %v2254
        %v2383 = vunpack.c.l.b16 %v2255
        %v2384 = vunpack.c.l.b16 %v2256
        %v2385 = vunpack.c.l.b16 %v2257
        %v2386 = vunpack.c.l.b16 %v2258
        %v2387 = vunpack.c.l.b16 %v2259
        %v2388 = vunpack.c.l.b16 %v2260
        %v2389 = vunpack.c.l.b16 %v2261
        %v2390 = vunpack.c.l.b16 %v2262
        %v2391 = vunpack.c.l.b16 %v2263
        %v2392 = vunpack.c.l.b16 %v2264
        %v2393 = vunpack.c.l.b16 %v2265
        %v2394 = vunpack.c.l.b16 %v2266
        %v2395 = vunpack.c.l.b16 %v2267
        %v2396 = vunpack.c.l.b16 %v2268
        %v2397 = vunpack.c.l.b16 %v2269
        %v2398 = vunpack.c.l.b16 %v2270
        %v2399 = vunpack.c.l.b16 %v2271
        %v2400 = vunpack.c.l.b16 %v2272
        %v2401 = vunpack.c.l.b16 %v2273
        %v2402 = vpack.c.b16 %v2339, %v2338
        %v2403 = vpack.c.b16 %v2341, %v2340
        %v2404 = vpack.c.b16 %v2343, %v2342
        %v2405 = vpack.c.b16 %v2345, %v2344
        %v2406 = vpack.c.b16 %v2347, %v2346
        %v2407 = vpack.c.b16 %v2349, %v2348
        %v2408 = vpack.c.b16 %v2351, %v2350
        %v2409 = vpack.c.b16 %v2353, %v2352
        %v2410 = vpack.c.b16 %v2355, %v2354
        %v2411 = vpack.c.b16 %v2357, %v2356
        %v2412 = vpack.c.b16 %v2359, %v2358
        %v2413 = vpack.c.b16 %v2361, %v2360
        %v2414 = vpack.c.b16 %v2363, %v2362
        %v2415 = vpack.c.b16 %v2365, %v2364
        %v2416 = vpack.c.b16 %v2367, %v2366
        %v2417 = vpack.c.b16 %v2369, %v2368
        %v2418 = vpack.c.b16 %v2371, %v2370
        %v2419 = vpack.c.b16 %v2373, %v2372
        %v2420 = vpack.c.b16 %v2375, %v2374
        %v2421 = vpack.c.b16 %v2377, %v2376
        %v2422 = vpack.c.b16 %v2379, %v2378
        %v2423 = vpack.c.b16 %v2381, %v2380
        %v2424 = vpack.c.b16 %v2383, %v2382
        %v2425 = vpack.c.b16 %v2385, %v2384
        %v2426 = vpack.c.b16 %v2387, %v2386
        %v2427 = vpack.c.b16 %v2389, %v2388
        %v2428 = vpack.c.b16 %v2391, %v2390
        %v2429 = vpack.c.b16 %v2393, %v2392
        %v2430 = vpack.c.b16 %v2395, %v2394
        %v2431 = vpack.c.b16 %v2397, %v2396
        %v2432 = vpack.c.b16 %v2399, %v2398
        %v2433 = vpack.c.b16 %v2401, %v2400
        %2466 = vmatprep.subr.bf16.mxu0 0
        %2467 = vmatpush1.bf16.msra.mxu0 %v2409
        %2468 = vmatprep.subr.bf16.mxu0 0
        %2469 = vmatpush1.bf16.msra.mxu0 %v2408
        %2470 = vmatprep.subr.bf16.mxu0 0
        %2471 = vmatpush1.bf16.msra.mxu0 %v2407
        %2472 = vmatprep.subr.bf16.mxu0 0
        %2473 = vmatpush1.bf16.msra.mxu0 %v2406
        %2474 = vmatprep.subr.bf16.mxu0 0
        %2475 = vmatpush1.bf16.msra.mxu0 %v2405
        %2476 = vmatprep.subr.bf16.mxu0 0
        %2477 = vmatpush1.bf16.msra.mxu0 %v2404
        %2478 = vmatprep.subr.bf16.mxu0 0
        %2479 = vmatpush1.bf16.msra.mxu0 %v2403
        %2480 = vmatprep.subr.bf16.mxu0 0
        %2481 = vmatpush1.bf16.msra.mxu0 %v2402
        %2482 = vmatprep.subr.bf16.mxu0 0
        %2483 = vmatpush2.bf16.msra.mxu0 %v2417
        %2484 = vmatprep.subr.bf16.mxu0 0
        %2485 = vmatpush2.bf16.msra.mxu0 %v2416
        %2486 = vmatprep.subr.bf16.mxu0 0
        %2487 = vmatpush2.bf16.msra.mxu0 %v2415
        %2488 = vmatprep.subr.bf16.mxu0 0
        %2489 = vmatpush2.bf16.msra.mxu0 %v2414
        %2490 = vmatprep.subr.bf16.mxu0 0
        %2491 = vmatpush2.bf16.msra.mxu0 %v2413
        %2492 = vmatprep.subr.bf16.mxu0 0
        %2493 = vmatpush2.bf16.msra.mxu0 %v2412
        %2494 = vmatprep.subr.bf16.mxu0 0
        %2495 = vmatpush2.bf16.msra.mxu0 %v2411
        %2496 = vmatprep.subr.bf16.mxu0 0
        %2497 = vmatpush2.bf16.msra.mxu0 %v2410
        %2498 = vmatprep.mubr.bf16.mxu0 %v290
        %2499 = vmatmul.mubr.bf16.gmra.mxu0 %v289
        %v2500 = vpop.f32.mrf.mxu0
        %v2501 = vadd.f32 0.0, %v2500
        %v2502 = vpop.f32.mrf.mxu0
        %v2503 = vpop.f32.mrf.mxu0
        %v2504 = vadd.f32 0.0, %v2503
        %v2505 = vpop.f32.mrf.mxu0
        %2506 = vdwg.mxu0
        %2507 = vmatprep.subr.bf16.mxu0 0
        %2508 = vmatpush1.bf16.msra.mxu0 %v2425
        %2509 = vmatprep.subr.bf16.mxu0 0
        %2510 = vmatpush1.bf16.msra.mxu0 %v2424
        %2511 = vmatprep.subr.bf16.mxu0 0
        %2512 = vmatpush1.bf16.msra.mxu0 %v2423
        %2513 = vmatprep.subr.bf16.mxu0 0
        %2514 = vmatpush1.bf16.msra.mxu0 %v2422
        %2515 = vmatprep.subr.bf16.mxu0 0
        %2516 = vmatpush1.bf16.msra.mxu0 %v2421
        %2517 = vmatprep.subr.bf16.mxu0 0
        %2518 = vmatpush1.bf16.msra.mxu0 %v2420
        %2519 = vmatprep.subr.bf16.mxu0 0
        %2520 = vmatpush1.bf16.msra.mxu0 %v2419
        %2521 = vmatprep.subr.bf16.mxu0 0
        %2522 = vmatpush1.bf16.msra.mxu0 %v2418
        %2523 = vmatprep.subr.bf16.mxu0 0
        %2524 = vmatpush2.bf16.msra.mxu0 %v2433
        %2525 = vmatprep.subr.bf16.mxu0 0
        %2526 = vmatpush2.bf16.msra.mxu0 %v2432
        %2527 = vmatprep.subr.bf16.mxu0 0
        %2528 = vmatpush2.bf16.msra.mxu0 %v2431
        %2529 = vmatprep.subr.bf16.mxu0 0
        %2530 = vmatpush2.bf16.msra.mxu0 %v2430
        %2531 = vmatprep.subr.bf16.mxu0 0
        %2532 = vmatpush2.bf16.msra.mxu0 %v2429
        %2533 = vmatprep.subr.bf16.mxu0 0
        %2534 = vmatpush2.bf16.msra.mxu0 %v2428
        %2535 = vmatprep.subr.bf16.mxu0 0
        %2536 = vmatpush2.bf16.msra.mxu0 %v2427
        %2537 = vmatprep.subr.bf16.mxu0 0
        %2538 = vmatpush2.bf16.msra.mxu0 %v2426
        %2539 = vmatprep.mubr.bf16.mxu0 %v292
        %2540 = vmatmul.mubr.bf16.gmra.mxu0 %v291
        %v2541 = vpop.f32.mrf.mxu0
        %v2542 = vadd.f32 %v2501, %v2541
        %v2543 = vpop.f32.mrf.mxu0
        %v2544 = vpop.f32.mrf.mxu0
        %v2545 = vadd.f32 %v2504, %v2544
        %v2546 = vpop.f32.mrf.mxu0
        %2547 = vdwg.mxu0
        %v2549 = vrot.slane %v2545, 4
        %v2551 = vadd.f32 %v2209, %v2549
        %v2552 = vrot.slane %v2545, 5
        %2553 = vrot.lane.b32.xlu0 %v2552, 127
        %v2554 = vpop.permute.xlu0 %2553
        %v2556 = vadd.f32 %v2551, %v2554
        %v2557 = vrot.slane %v2545, 6
        %2558 = vrot.lane.b32.xlu0 %v2557, 126
        %v2559 = vpop.permute.xlu0 %2558
        %v2561 = vadd.f32 %v2556, %v2559
        %v2562 = vrot.slane %v2545, 7
        %2563 = vrot.lane.b32.xlu0 %v2562, 125
        %v2564 = vpop.permute.xlu0 %2563
        %v2566 = vadd.f32 %v2561, %v2564
        %v2567 = vrot.slane %v1888, 1
        %2568 = vrot.lane.b32.xlu0 %v2567, 127
        %v2569 = vpop.permute.xlu0 %2568
        %v2571 = vadd.f32 %v1888, %v2569
        %v2572 = vrot.slane %v1888, 2
        %2573 = vrot.lane.b32.xlu0 %v2572, 126
        %v2574 = vpop.permute.xlu0 %2573
        %v2576 = vadd.f32 %v2571, %v2574
        %v2577 = vrot.slane %v1888, 3
        %2578 = vrot.lane.b32.xlu0 %v2577, 125
        %v2579 = vpop.permute.xlu0 %2578
        %v2581 = vadd.f32 %v2576, %v2579
        %v2583 = vrot.slane %v2135, 4
        %v2585 = vadd.f32 %v2581, %v2583
        %v2586 = vrot.slane %v2135, 5
        %2587 = vrot.lane.b32.xlu0 %v2586, 127
        %v2588 = vpop.permute.xlu0 %2587
        %v2590 = vadd.f32 %v2585, %v2588
        %v2591 = vrot.slane %v2135, 6
        %2592 = vrot.lane.b32.xlu0 %v2591, 126
        %v2593 = vpop.permute.xlu0 %2592
        %v2595 = vadd.f32 %v2590, %v2593
        %v2596 = vrot.slane %v2135, 7
        %2597 = vrot.lane.b32.xlu0 %v2596, 125
        %v2598 = vpop.permute.xlu0 %2597
        %v2600 = vadd.f32 %v2595, %v2598
        %v2601 = vadd.f32 %v2600, %v2545
        %v2602 = vrot.slane %v2545, 1
        %2603 = vrot.lane.b32.xlu0 %v2602, 127
        %v2604 = vpop.permute.xlu0 %2603
        %v2606 = vadd.f32 %v2601, %v2604
        %v2607 = vrot.slane %v2545, 2
        %2608 = vrot.lane.b32.xlu0 %v2607, 126
        %v2609 = vpop.permute.xlu0 %2608
        %v2611 = vadd.f32 %v2606, %v2609
        %v2612 = vrot.slane %v2545, 3
        %2613 = vrot.lane.b32.xlu0 %v2612, 125
        %v2614 = vpop.permute.xlu0 %2613
        %v2616 = vadd.f32 %v2611, %v2614
        %2617 = vrot.lane.b32.xlu0 %v2402, 112
        %v2618 = vpop.permute.xlu0 %2617
        %2619 = vrot.lane.b32.xlu0 %v2403, 112
        %v2620 = vpop.permute.xlu0 %2619
        %2621 = vrot.lane.b32.xlu0 %v2404, 112
        %v2622 = vpop.permute.xlu0 %2621
        %2623 = vrot.lane.b32.xlu0 %v2405, 112
        %v2624 = vpop.permute.xlu0 %2623
        %2625 = vrot.lane.b32.xlu0 %v2406, 112
        %v2626 = vpop.permute.xlu0 %2625
        %2627 = vrot.lane.b32.xlu0 %v2407, 112
        %v2628 = vpop.permute.xlu0 %2627
        %2629 = vrot.lane.b32.xlu0 %v2408, 112
        %v2630 = vpop.permute.xlu0 %2629
        %2631 = vrot.lane.b32.xlu0 %v2409, 112
        %v2632 = vpop.permute.xlu0 %2631
        %2633 = vrot.lane.b32.xlu0 %v2410, 112
        %v2634 = vpop.permute.xlu0 %2633
        %2635 = vrot.lane.b32.xlu0 %v2411, 112
        %v2636 = vpop.permute.xlu0 %2635
        %2637 = vrot.lane.b32.xlu0 %v2412, 112
        %v2638 = vpop.permute.xlu0 %2637
        %2639 = vrot.lane.b32.xlu0 %v2413, 112
        %v2640 = vpop.permute.xlu0 %2639
        %2641 = vrot.lane.b32.xlu0 %v2414, 112
        %v2642 = vpop.permute.xlu0 %2641
        %2643 = vrot.lane.b32.xlu0 %v2415, 112
        %v2644 = vpop.permute.xlu0 %2643
        %2645 = vrot.lane.b32.xlu0 %v2416, 112
        %v2646 = vpop.permute.xlu0 %2645
        %2647 = vrot.lane.b32.xlu0 %v2417, 112
        %v2648 = vpop.permute.xlu0 %2647
        %2649 = vrot.lane.b32.xlu0 %v2418, 112
        %v2650 = vpop.permute.xlu0 %2649
        %2651 = vrot.lane.b32.xlu0 %v2419, 112
        %v2652 = vpop.permute.xlu0 %2651
        %2653 = vrot.lane.b32.xlu0 %v2420, 112
        %v2654 = vpop.permute.xlu0 %2653
        %2655 = vrot.lane.b32.xlu0 %v2421, 112
        %v2656 = vpop.permute.xlu0 %2655
        %2657 = vrot.lane.b32.xlu0 %v2422, 112
        %v2658 = vpop.permute.xlu0 %2657
        %2659 = vrot.lane.b32.xlu0 %v2423, 112
        %v2660 = vpop.permute.xlu0 %2659
        %2661 = vrot.lane.b32.xlu0 %v2424, 112
        %v2662 = vpop.permute.xlu0 %2661
        %2663 = vrot.lane.b32.xlu0 %v2425, 112
        %v2664 = vpop.permute.xlu0 %2663
        %2665 = vrot.lane.b32.xlu0 %v2426, 112
        %v2666 = vpop.permute.xlu0 %2665
        %2667 = vrot.lane.b32.xlu0 %v2427, 112
        %v2668 = vpop.permute.xlu0 %2667
        %2669 = vrot.lane.b32.xlu0 %v2428, 112
        %v2670 = vpop.permute.xlu0 %2669
        %2671 = vrot.lane.b32.xlu0 %v2429, 112
        %v2672 = vpop.permute.xlu0 %2671
        %2673 = vrot.lane.b32.xlu0 %v2430, 112
        %v2674 = vpop.permute.xlu0 %2673
        %2675 = vrot.lane.b32.xlu0 %v2431, 112
        %v2676 = vpop.permute.xlu0 %2675
        %2677 = vrot.lane.b32.xlu0 %v2432, 112
        %v2678 = vpop.permute.xlu0 %2677
        %2679 = vrot.lane.b32.xlu0 %v2433, 112
        %v2680 = vpop.permute.xlu0 %2679
        %2713 = vmatprep.subr.bf16.mxu0 0
        %2714 = vmatpush1.bf16.msra.mxu0 %v2632
        %2715 = vmatprep.subr.bf16.mxu0 0
        %2716 = vmatpush1.bf16.msra.mxu0 %v2630
        %2717 = vmatprep.subr.bf16.mxu0 0
        %2718 = vmatpush1.bf16.msra.mxu0 %v2628
        %2719 = vmatprep.subr.bf16.mxu0 0
        %2720 = vmatpush1.bf16.msra.mxu0 %v2626
        %2721 = vmatprep.subr.bf16.mxu0 0
        %2722 = vmatpush1.bf16.msra.mxu0 %v2624
        %2723 = vmatprep.subr.bf16.mxu0 0
        %2724 = vmatpush1.bf16.msra.mxu0 %v2622
        %2725 = vmatprep.subr.bf16.mxu0 0
        %2726 = vmatpush1.bf16.msra.mxu0 %v2620
        %2727 = vmatprep.subr.bf16.mxu0 0
        %2728 = vmatpush1.bf16.msra.mxu0 %v2618
        %2729 = vmatprep.subr.bf16.mxu0 0
        %2730 = vmatpush2.bf16.msra.mxu0 %v2648
        %2731 = vmatprep.subr.bf16.mxu0 0
        %2732 = vmatpush2.bf16.msra.mxu0 %v2646
        %2733 = vmatprep.subr.bf16.mxu0 0
        %2734 = vmatpush2.bf16.msra.mxu0 %v2644
        %2735 = vmatprep.subr.bf16.mxu0 0
        %2736 = vmatpush2.bf16.msra.mxu0 %v2642
        %2737 = vmatprep.subr.bf16.mxu0 0
        %2738 = vmatpush2.bf16.msra.mxu0 %v2640
        %2739 = vmatprep.subr.bf16.mxu0 0
        %2740 = vmatpush2.bf16.msra.mxu0 %v2638
        %2741 = vmatprep.subr.bf16.mxu0 0
        %2742 = vmatpush2.bf16.msra.mxu0 %v2636
        %2743 = vmatprep.subr.bf16.mxu0 0
        %2744 = vmatpush2.bf16.msra.mxu0 %v2634
        %2745 = vmatprep.mubr.bf16.mxu0 %v290
        %2746 = vmatmul.mubr.bf16.gmra.mxu0 %v289
        %v2747 = vpop.f32.mrf.mxu0
        %v2748 = vadd.f32 0.0, %v2747
        %v2749 = vpop.f32.mrf.mxu0
        %v2750 = vpop.f32.mrf.mxu0
        %v2751 = vadd.f32 0.0, %v2750
        %v2752 = vpop.f32.mrf.mxu0
        %2753 = vdwg.mxu0
        %2754 = vmatprep.subr.bf16.mxu0 0
        %2755 = vmatpush1.bf16.msra.mxu0 %v2664
        %2756 = vmatprep.subr.bf16.mxu0 0
        %2757 = vmatpush1.bf16.msra.mxu0 %v2662
        %2758 = vmatprep.subr.bf16.mxu0 0
        %2759 = vmatpush1.bf16.msra.mxu0 %v2660
        %2760 = vmatprep.subr.bf16.mxu0 0
        %2761 = vmatpush1.bf16.msra.mxu0 %v2658
        %2762 = vmatprep.subr.bf16.mxu0 0
        %2763 = vmatpush1.bf16.msra.mxu0 %v2656
        %2764 = vmatprep.subr.bf16.mxu0 0
        %2765 = vmatpush1.bf16.msra.mxu0 %v2654
        %2766 = vmatprep.subr.bf16.mxu0 0
        %2767 = vmatpush1.bf16.msra.mxu0 %v2652
        %2768 = vmatprep.subr.bf16.mxu0 0
        %2769 = vmatpush1.bf16.msra.mxu0 %v2650
        %2770 = vmatprep.subr.bf16.mxu0 0
        %2771 = vmatpush2.bf16.msra.mxu0 %v2680
        %2772 = vmatprep.subr.bf16.mxu0 0
        %2773 = vmatpush2.bf16.msra.mxu0 %v2678
        %2774 = vmatprep.subr.bf16.mxu0 0
        %2775 = vmatpush2.bf16.msra.mxu0 %v2676
        %2776 = vmatprep.subr.bf16.mxu0 0
        %2777 = vmatpush2.bf16.msra.mxu0 %v2674
        %2778 = vmatprep.subr.bf16.mxu0 0
        %2779 = vmatpush2.bf16.msra.mxu0 %v2672
        %2780 = vmatprep.subr.bf16.mxu0 0
        %2781 = vmatpush2.bf16.msra.mxu0 %v2670
        %2782 = vmatprep.subr.bf16.mxu0 0
        %2783 = vmatpush2.bf16.msra.mxu0 %v2668
        %2784 = vmatprep.subr.bf16.mxu0 0
        %2785 = vmatpush2.bf16.msra.mxu0 %v2666
        %2786 = vmatprep.mubr.bf16.mxu0 %v292
        %2787 = vmatmul.mubr.bf16.gmra.mxu0 %v291
        %v2788 = vpop.f32.mrf.mxu0
        %v2789 = vadd.f32 %v2748, %v2788
        %v2790 = vpop.f32.mrf.mxu0
        %v2791 = vpop.f32.mrf.mxu0
        %v2792 = vadd.f32 %v2751, %v2791
        %v2793 = vpop.f32.mrf.mxu0
        %2794 = vdwg.mxu0
        %v2796 = vrot.slane %v2792, 4
        %v2798 = vadd.f32 %v2616, %v2796
        %v2799 = vrot.slane %v2792, 5
        %2800 = vrot.lane.b32.xlu0 %v2799, 127
        %v2801 = vpop.permute.xlu0 %2800
        %v2803 = vadd.f32 %v2798, %v2801
        %v2804 = vrot.slane %v2792, 6
        %2805 = vrot.lane.b32.xlu0 %v2804, 126
        %v2806 = vpop.permute.xlu0 %2805
        %v2808 = vadd.f32 %v2803, %v2806
        %v2809 = vrot.slane %v2792, 7
        %2810 = vrot.lane.b32.xlu0 %v2809, 125
        %v2811 = vpop.permute.xlu0 %2810
        %v2813 = vadd.f32 %v2808, %v2811
        %v2814 = vrot.slane %v2135, 1
        %2815 = vrot.lane.b32.xlu0 %v2814, 127
        %v2816 = vpop.permute.xlu0 %2815
        %v2818 = vadd.f32 %v2135, %v2816
        %v2819 = vrot.slane %v2135, 2
        %2820 = vrot.lane.b32.xlu0 %v2819, 126
        %v2821 = vpop.permute.xlu0 %2820
        %v2823 = vadd.f32 %v2818, %v2821
        %v2824 = vrot.slane %v2135, 3
        %2825 = vrot.lane.b32.xlu0 %v2824, 125
        %v2826 = vpop.permute.xlu0 %2825
        %v2828 = vadd.f32 %v2823, %v2826
        %v2830 = vrot.slane %v2542, 4
        %v2832 = vadd.f32 %v2828, %v2830
        %v2833 = vrot.slane %v2542, 5
        %2834 = vrot.lane.b32.xlu0 %v2833, 127
        %v2835 = vpop.permute.xlu0 %2834
        %v2837 = vadd.f32 %v2832, %v2835
        %v2838 = vrot.slane %v2542, 6
        %2839 = vrot.lane.b32.xlu0 %v2838, 126
        %v2840 = vpop.permute.xlu0 %2839
        %v2842 = vadd.f32 %v2837, %v2840
        %v2843 = vrot.slane %v2542, 7
        %2844 = vrot.lane.b32.xlu0 %v2843, 125
        %v2845 = vpop.permute.xlu0 %2844
        %v2847 = vadd.f32 %v2842, %v2845
        %v2848 = vadd.f32 %v2847, %v2792
        %v2849 = vrot.slane %v2792, 1
        %2850 = vrot.lane.b32.xlu0 %v2849, 127
        %v2851 = vpop.permute.xlu0 %2850
        %v2853 = vadd.f32 %v2848, %v2851
        %v2854 = vrot.slane %v2792, 2
        %2855 = vrot.lane.b32.xlu0 %v2854, 126
        %v2856 = vpop.permute.xlu0 %2855
        %v2858 = vadd.f32 %v2853, %v2856
        %v2859 = vrot.slane %v2792, 3
        %2860 = vrot.lane.b32.xlu0 %v2859, 125
        %v2861 = vpop.permute.xlu0 %2860
        %v2863 = vadd.f32 %v2858, %v2861
        %2864 = vrot.lane.b32.xlu0 %v2402, 96
        %v2865 = vpop.permute.xlu0 %2864
        %2866 = vrot.lane.b32.xlu0 %v2403, 96
        %v2867 = vpop.permute.xlu0 %2866
        %2868 = vrot.lane.b32.xlu0 %v2404, 96
        %v2869 = vpop.permute.xlu0 %2868
        %2870 = vrot.lane.b32.xlu0 %v2405, 96
        %v2871 = vpop.permute.xlu0 %2870
        %2872 = vrot.lane.b32.xlu0 %v2406, 96
        %v2873 = vpop.permute.xlu0 %2872
        %2874 = vrot.lane.b32.xlu0 %v2407, 96
        %v2875 = vpop.permute.xlu0 %2874
        %2876 = vrot.lane.b32.xlu0 %v2408, 96
        %v2877 = vpop.permute.xlu0 %2876
        %2878 = vrot.lane.b32.xlu0 %v2409, 96
        %v2879 = vpop.permute.xlu0 %2878
        %2880 = vrot.lane.b32.xlu0 %v2410, 96
        %v2881 = vpop.permute.xlu0 %2880
        %2882 = vrot.lane.b32.xlu0 %v2411, 96
        %v2883 = vpop.permute.xlu0 %2882
        %2884 = vrot.lane.b32.xlu0 %v2412, 96
        %v2885 = vpop.permute.xlu0 %2884
        %2886 = vrot.lane.b32.xlu0 %v2413, 96
        %v2887 = vpop.permute.xlu0 %2886
        %2888 = vrot.lane.b32.xlu0 %v2414, 96
        %v2889 = vpop.permute.xlu0 %2888
        %2890 = vrot.lane.b32.xlu0 %v2415, 96
        %v2891 = vpop.permute.xlu0 %2890
        %2892 = vrot.lane.b32.xlu0 %v2416, 96
        %v2893 = vpop.permute.xlu0 %2892
        %2894 = vrot.lane.b32.xlu0 %v2417, 96
        %v2895 = vpop.permute.xlu0 %2894
        %2896 = vrot.lane.b32.xlu0 %v2418, 96
        %v2897 = vpop.permute.xlu0 %2896
        %2898 = vrot.lane.b32.xlu0 %v2419, 96
        %v2899 = vpop.permute.xlu0 %2898
        %2900 = vrot.lane.b32.xlu0 %v2420, 96
        %v2901 = vpop.permute.xlu0 %2900
        %2902 = vrot.lane.b32.xlu0 %v2421, 96
        %v2903 = vpop.permute.xlu0 %2902
        %2904 = vrot.lane.b32.xlu0 %v2422, 96
        %v2905 = vpop.permute.xlu0 %2904
        %2906 = vrot.lane.b32.xlu0 %v2423, 96
        %v2907 = vpop.permute.xlu0 %2906
        %2908 = vrot.lane.b32.xlu0 %v2424, 96
        %v2909 = vpop.permute.xlu0 %2908
        %2910 = vrot.lane.b32.xlu0 %v2425, 96
        %v2911 = vpop.permute.xlu0 %2910
        %2912 = vrot.lane.b32.xlu0 %v2426, 96
        %v2913 = vpop.permute.xlu0 %2912
        %2914 = vrot.lane.b32.xlu0 %v2427, 96
        %v2915 = vpop.permute.xlu0 %2914
        %2916 = vrot.lane.b32.xlu0 %v2428, 96
        %v2917 = vpop.permute.xlu0 %2916
        %2918 = vrot.lane.b32.xlu0 %v2429, 96
        %v2919 = vpop.permute.xlu0 %2918
        %2920 = vrot.lane.b32.xlu0 %v2430, 96
        %v2921 = vpop.permute.xlu0 %2920
        %2922 = vrot.lane.b32.xlu0 %v2431, 96
        %v2923 = vpop.permute.xlu0 %2922
        %2924 = vrot.lane.b32.xlu0 %v2432, 96
        %v2925 = vpop.permute.xlu0 %2924
        %2926 = vrot.lane.b32.xlu0 %v2433, 96
        %v2927 = vpop.permute.xlu0 %2926
        %2960 = vmatprep.subr.bf16.mxu0 0
        %2961 = vmatpush1.bf16.msra.mxu0 %v2879
        %2962 = vmatprep.subr.bf16.mxu0 0
        %2963 = vmatpush1.bf16.msra.mxu0 %v2877
        %2964 = vmatprep.subr.bf16.mxu0 0
        %2965 = vmatpush1.bf16.msra.mxu0 %v2875
        %2966 = vmatprep.subr.bf16.mxu0 0
        %2967 = vmatpush1.bf16.msra.mxu0 %v2873
        %2968 = vmatprep.subr.bf16.mxu0 0
        %2969 = vmatpush1.bf16.msra.mxu0 %v2871
        %2970 = vmatprep.subr.bf16.mxu0 0
        %2971 = vmatpush1.bf16.msra.mxu0 %v2869
        %2972 = vmatprep.subr.bf16.mxu0 0
        %2973 = vmatpush1.bf16.msra.mxu0 %v2867
        %2974 = vmatprep.subr.bf16.mxu0 0
        %2975 = vmatpush1.bf16.msra.mxu0 %v2865
        %2976 = vmatprep.subr.bf16.mxu0 0
        %2977 = vmatpush2.bf16.msra.mxu0 %v2895
        %2978 = vmatprep.subr.bf16.mxu0 0
        %2979 = vmatpush2.bf16.msra.mxu0 %v2893
        %2980 = vmatprep.subr.bf16.mxu0 0
        %2981 = vmatpush2.bf16.msra.mxu0 %v2891
        %2982 = vmatprep.subr.bf16.mxu0 0
        %2983 = vmatpush2.bf16.msra.mxu0 %v2889
        %2984 = vmatprep.subr.bf16.mxu0 0
        %2985 = vmatpush2.bf16.msra.mxu0 %v2887
        %2986 = vmatprep.subr.bf16.mxu0 0
        %2987 = vmatpush2.bf16.msra.mxu0 %v2885
        %2988 = vmatprep.subr.bf16.mxu0 0
        %2989 = vmatpush2.bf16.msra.mxu0 %v2883
        %2990 = vmatprep.subr.bf16.mxu0 0
        %2991 = vmatpush2.bf16.msra.mxu0 %v2881
        %2992 = vmatprep.mubr.bf16.mxu0 %v290
        %2993 = vmatmul.mubr.bf16.gmra.mxu0 %v289
        %v2994 = vpop.f32.mrf.mxu0
        %v2995 = vadd.f32 0.0, %v2994
        %v2996 = vpop.f32.mrf.mxu0
        %v2997 = vpop.f32.mrf.mxu0
        %v2998 = vadd.f32 0.0, %v2997
        %v2999 = vpop.f32.mrf.mxu0
        %3000 = vdwg.mxu0
        %3001 = vmatprep.subr.bf16.mxu0 0
        %3002 = vmatpush1.bf16.msra.mxu0 %v2911
        %3003 = vmatprep.subr.bf16.mxu0 0
        %3004 = vmatpush1.bf16.msra.mxu0 %v2909
        %3005 = vmatprep.subr.bf16.mxu0 0
        %3006 = vmatpush1.bf16.msra.mxu0 %v2907
        %3007 = vmatprep.subr.bf16.mxu0 0
        %3008 = vmatpush1.bf16.msra.mxu0 %v2905
        %3009 = vmatprep.subr.bf16.mxu0 0
        %3010 = vmatpush1.bf16.msra.mxu0 %v2903
        %3011 = vmatprep.subr.bf16.mxu0 0
        %3012 = vmatpush1.bf16.msra.mxu0 %v2901
        %3013 = vmatprep.subr.bf16.mxu0 0
        %3014 = vmatpush1.bf16.msra.mxu0 %v2899
        %3015 = vmatprep.subr.bf16.mxu0 0
        %3016 = vmatpush1.bf16.msra.mxu0 %v2897
        %3017 = vmatprep.subr.bf16.mxu0 0
        %3018 = vmatpush2.bf16.msra.mxu0 %v2927
        %3019 = vmatprep.subr.bf16.mxu0 0
        %3020 = vmatpush2.bf16.msra.mxu0 %v2925
        %3021 = vmatprep.subr.bf16.mxu0 0
        %3022 = vmatpush2.bf16.msra.mxu0 %v2923
        %3023 = vmatprep.subr.bf16.mxu0 0
        %3024 = vmatpush2.bf16.msra.mxu0 %v2921
        %3025 = vmatprep.subr.bf16.mxu0 0
        %3026 = vmatpush2.bf16.msra.mxu0 %v2919
        %3027 = vmatprep.subr.bf16.mxu0 0
        %3028 = vmatpush2.bf16.msra.mxu0 %v2917
        %3029 = vmatprep.subr.bf16.mxu0 0
        %3030 = vmatpush2.bf16.msra.mxu0 %v2915
        %3031 = vmatprep.subr.bf16.mxu0 0
        %3032 = vmatpush2.bf16.msra.mxu0 %v2913
        %3033 = vmatprep.mubr.bf16.mxu0 %v292
        %3034 = vmatmul.mubr.bf16.gmra.mxu0 %v291
        %v3035 = vpop.f32.mrf.mxu0
        %v3036 = vadd.f32 %v2995, %v3035
        %v3037 = vpop.f32.mrf.mxu0
        %v3038 = vpop.f32.mrf.mxu0
        %v3039 = vadd.f32 %v2998, %v3038
        %v3040 = vpop.f32.mrf.mxu0
        %3041 = vdwg.mxu0
        %v3043 = vrot.slane %v3039, 4
        %v3045 = vadd.f32 %v2863, %v3043
        %v3046 = vrot.slane %v3039, 5
        %3047 = vrot.lane.b32.xlu0 %v3046, 127
        %v3048 = vpop.permute.xlu0 %3047
        %v3050 = vadd.f32 %v3045, %v3048
        %v3051 = vrot.slane %v3039, 6
        %3052 = vrot.lane.b32.xlu0 %v3051, 126
        %v3053 = vpop.permute.xlu0 %3052
        %v3055 = vadd.f32 %v3050, %v3053
        %v3056 = vrot.slane %v3039, 7
        %3057 = vrot.lane.b32.xlu0 %v3056, 125
        %v3058 = vpop.permute.xlu0 %3057
        %v3060 = vadd.f32 %v3055, %v3058
        %v3061 = vrot.slane %v2542, 1
        %3062 = vrot.lane.b32.xlu0 %v3061, 127
        %v3063 = vpop.permute.xlu0 %3062
        %v3065 = vadd.f32 %v2542, %v3063
        %v3066 = vrot.slane %v2542, 2
        %3067 = vrot.lane.b32.xlu0 %v3066, 126
        %v3068 = vpop.permute.xlu0 %3067
        %v3070 = vadd.f32 %v3065, %v3068
        %v3071 = vrot.slane %v2542, 3
        %3072 = vrot.lane.b32.xlu0 %v3071, 125
        %v3073 = vpop.permute.xlu0 %3072
        %v3075 = vadd.f32 %v3070, %v3073
        %v3077 = vrot.slane %v2789, 4
        %v3079 = vadd.f32 %v3075, %v3077
        %v3080 = vrot.slane %v2789, 5
        %3081 = vrot.lane.b32.xlu0 %v3080, 127
        %v3082 = vpop.permute.xlu0 %3081
        %v3084 = vadd.f32 %v3079, %v3082
        %v3085 = vrot.slane %v2789, 6
        %3086 = vrot.lane.b32.xlu0 %v3085, 126
        %v3087 = vpop.permute.xlu0 %3086
        %v3089 = vadd.f32 %v3084, %v3087
        %v3090 = vrot.slane %v2789, 7
        %3091 = vrot.lane.b32.xlu0 %v3090, 125
        %v3092 = vpop.permute.xlu0 %3091
        %v3094 = vadd.f32 %v3089, %v3092
        %v3095 = vadd.f32 %v3094, %v3039
        %v3096 = vrot.slane %v3039, 1
        %3097 = vrot.lane.b32.xlu0 %v3096, 127
        %v3098 = vpop.permute.xlu0 %3097
        %v3100 = vadd.f32 %v3095, %v3098
        %v3101 = vrot.slane %v3039, 2
        %3102 = vrot.lane.b32.xlu0 %v3101, 126
        %v3103 = vpop.permute.xlu0 %3102
        %v3105 = vadd.f32 %v3100, %v3103
        %v3106 = vrot.slane %v3039, 3
        %3107 = vrot.lane.b32.xlu0 %v3106, 125
        %v3108 = vpop.permute.xlu0 %3107
        %v3110 = vadd.f32 %v3105, %v3108
        %3111 = vrot.lane.b32.xlu0 %v2402, 80
        %v3112 = vpop.permute.xlu0 %3111
        %3113 = vrot.lane.b32.xlu0 %v2403, 80
        %v3114 = vpop.permute.xlu0 %3113
        %3115 = vrot.lane.b32.xlu0 %v2404, 80
        %v3116 = vpop.permute.xlu0 %3115
        %3117 = vrot.lane.b32.xlu0 %v2405, 80
        %v3118 = vpop.permute.xlu0 %3117
        %3119 = vrot.lane.b32.xlu0 %v2406, 80
        %v3120 = vpop.permute.xlu0 %3119
        %3121 = vrot.lane.b32.xlu0 %v2407, 80
        %v3122 = vpop.permute.xlu0 %3121
        %3123 = vrot.lane.b32.xlu0 %v2408, 80
        %v3124 = vpop.permute.xlu0 %3123
        %3125 = vrot.lane.b32.xlu0 %v2409, 80
        %v3126 = vpop.permute.xlu0 %3125
        %3127 = vrot.lane.b32.xlu0 %v2410, 80
        %v3128 = vpop.permute.xlu0 %3127
        %3129 = vrot.lane.b32.xlu0 %v2411, 80
        %v3130 = vpop.permute.xlu0 %3129
        %3131 = vrot.lane.b32.xlu0 %v2412, 80
        %v3132 = vpop.permute.xlu0 %3131
        %3133 = vrot.lane.b32.xlu0 %v2413, 80
        %v3134 = vpop.permute.xlu0 %3133
        %3135 = vrot.lane.b32.xlu0 %v2414, 80
        %v3136 = vpop.permute.xlu0 %3135
        %3137 = vrot.lane.b32.xlu0 %v2415, 80
        %v3138 = vpop.permute.xlu0 %3137
        %3139 = vrot.lane.b32.xlu0 %v2416, 80
        %v3140 = vpop.permute.xlu0 %3139
        %3141 = vrot.lane.b32.xlu0 %v2417, 80
        %v3142 = vpop.permute.xlu0 %3141
        %3143 = vrot.lane.b32.xlu0 %v2418, 80
        %v3144 = vpop.permute.xlu0 %3143
        %3145 = vrot.lane.b32.xlu0 %v2419, 80
        %v3146 = vpop.permute.xlu0 %3145
        %3147 = vrot.lane.b32.xlu0 %v2420, 80
        %v3148 = vpop.permute.xlu0 %3147
        %3149 = vrot.lane.b32.xlu0 %v2421, 80
        %v3150 = vpop.permute.xlu0 %3149
        %3151 = vrot.lane.b32.xlu0 %v2422, 80
        %v3152 = vpop.permute.xlu0 %3151
        %3153 = vrot.lane.b32.xlu0 %v2423, 80
        %v3154 = vpop.permute.xlu0 %3153
        %3155 = vrot.lane.b32.xlu0 %v2424, 80
        %v3156 = vpop.permute.xlu0 %3155
        %3157 = vrot.lane.b32.xlu0 %v2425, 80
        %v3158 = vpop.permute.xlu0 %3157
        %3159 = vrot.lane.b32.xlu0 %v2426, 80
        %v3160 = vpop.permute.xlu0 %3159
        %3161 = vrot.lane.b32.xlu0 %v2427, 80
        %v3162 = vpop.permute.xlu0 %3161
        %3163 = vrot.lane.b32.xlu0 %v2428, 80
        %v3164 = vpop.permute.xlu0 %3163
        %3165 = vrot.lane.b32.xlu0 %v2429, 80
        %v3166 = vpop.permute.xlu0 %3165
        %3167 = vrot.lane.b32.xlu0 %v2430, 80
        %v3168 = vpop.permute.xlu0 %3167
        %3169 = vrot.lane.b32.xlu0 %v2431, 80
        %v3170 = vpop.permute.xlu0 %3169
        %3171 = vrot.lane.b32.xlu0 %v2432, 80
        %v3172 = vpop.permute.xlu0 %3171
        %3173 = vrot.lane.b32.xlu0 %v2433, 80
        %v3174 = vpop.permute.xlu0 %3173
        %3207 = vmatprep.subr.bf16.mxu0 0
        %3208 = vmatpush1.bf16.msra.mxu0 %v3126
        %3209 = vmatprep.subr.bf16.mxu0 0
        %3210 = vmatpush1.bf16.msra.mxu0 %v3124
        %3211 = vmatprep.subr.bf16.mxu0 0
        %3212 = vmatpush1.bf16.msra.mxu0 %v3122
        %3213 = vmatprep.subr.bf16.mxu0 0
        %3214 = vmatpush1.bf16.msra.mxu0 %v3120
        %3215 = vmatprep.subr.bf16.mxu0 0
        %3216 = vmatpush1.bf16.msra.mxu0 %v3118
        %3217 = vmatprep.subr.bf16.mxu0 0
        %3218 = vmatpush1.bf16.msra.mxu0 %v3116
        %3219 = vmatprep.subr.bf16.mxu0 0
        %3220 = vmatpush1.bf16.msra.mxu0 %v3114
        %3221 = vmatprep.subr.bf16.mxu0 0
        %3222 = vmatpush1.bf16.msra.mxu0 %v3112
        %3223 = vmatprep.subr.bf16.mxu0 0
        %3224 = vmatpush2.bf16.msra.mxu0 %v3142
        %3225 = vmatprep.subr.bf16.mxu0 0
        %3226 = vmatpush2.bf16.msra.mxu0 %v3140
        %3227 = vmatprep.subr.bf16.mxu0 0
        %3228 = vmatpush2.bf16.msra.mxu0 %v3138
        %3229 = vmatprep.subr.bf16.mxu0 0
        %3230 = vmatpush2.bf16.msra.mxu0 %v3136
        %3231 = vmatprep.subr.bf16.mxu0 0
        %3232 = vmatpush2.bf16.msra.mxu0 %v3134
        %3233 = vmatprep.subr.bf16.mxu0 0
        %3234 = vmatpush2.bf16.msra.mxu0 %v3132
        %3235 = vmatprep.subr.bf16.mxu0 0
        %3236 = vmatpush2.bf16.msra.mxu0 %v3130
        %3237 = vmatprep.subr.bf16.mxu0 0
        %3238 = vmatpush2.bf16.msra.mxu0 %v3128
        %3239 = vmatprep.mubr.bf16.mxu0 %v290
        %3240 = vmatmul.mubr.bf16.gmra.mxu0 %v289
        %v3241 = vpop.f32.mrf.mxu0
        %v3242 = vadd.f32 0.0, %v3241
        %v3243 = vpop.f32.mrf.mxu0
        %v3244 = vpop.f32.mrf.mxu0
        %v3245 = vadd.f32 0.0, %v3244
        %v3246 = vpop.f32.mrf.mxu0
        %3247 = vdwg.mxu0
        %3248 = vmatprep.subr.bf16.mxu0 0
        %3249 = vmatpush1.bf16.msra.mxu0 %v3158
        %3250 = vmatprep.subr.bf16.mxu0 0
        %3251 = vmatpush1.bf16.msra.mxu0 %v3156
        %3252 = vmatprep.subr.bf16.mxu0 0
        %3253 = vmatpush1.bf16.msra.mxu0 %v3154
        %3254 = vmatprep.subr.bf16.mxu0 0
        %3255 = vmatpush1.bf16.msra.mxu0 %v3152
        %3256 = vmatprep.subr.bf16.mxu0 0
        %3257 = vmatpush1.bf16.msra.mxu0 %v3150
        %3258 = vmatprep.subr.bf16.mxu0 0
        %3259 = vmatpush1.bf16.msra.mxu0 %v3148
        %3260 = vmatprep.subr.bf16.mxu0 0
        %3261 = vmatpush1.bf16.msra.mxu0 %v3146
        %3262 = vmatprep.subr.bf16.mxu0 0
        %3263 = vmatpush1.bf16.msra.mxu0 %v3144
        %3264 = vmatprep.subr.bf16.mxu0 0
        %3265 = vmatpush2.bf16.msra.mxu0 %v3174
        %3266 = vmatprep.subr.bf16.mxu0 0
        %3267 = vmatpush2.bf16.msra.mxu0 %v3172
        %3268 = vmatprep.subr.bf16.mxu0 0
        %3269 = vmatpush2.bf16.msra.mxu0 %v3170
        %3270 = vmatprep.subr.bf16.mxu0 0
        %3271 = vmatpush2.bf16.msra.mxu0 %v3168
        %3272 = vmatprep.subr.bf16.mxu0 0
        %3273 = vmatpush2.bf16.msra.mxu0 %v3166
        %3274 = vmatprep.subr.bf16.mxu0 0
        %3275 = vmatpush2.bf16.msra.mxu0 %v3164
        %3276 = vmatprep.subr.bf16.mxu0 0
        %3277 = vmatpush2.bf16.msra.mxu0 %v3162
        %3278 = vmatprep.subr.bf16.mxu0 0
        %3279 = vmatpush2.bf16.msra.mxu0 %v3160
        %3280 = vmatprep.mubr.bf16.mxu0 %v292
        %3281 = vmatmul.mubr.bf16.gmra.mxu0 %v291
        %v3282 = vpop.f32.mrf.mxu0
        %v3283 = vadd.f32 %v3242, %v3282
        %v3284 = vpop.f32.mrf.mxu0
        %v3285 = vpop.f32.mrf.mxu0
        %v3286 = vadd.f32 %v3245, %v3285
        %v3287 = vpop.f32.mrf.mxu0
        %3288 = vdwg.mxu0
        %v3290 = vrot.slane %v3286, 4
        %v3292 = vadd.f32 %v3110, %v3290
        %v3293 = vrot.slane %v3286, 5
        %3294 = vrot.lane.b32.xlu0 %v3293, 127
        %v3295 = vpop.permute.xlu0 %3294
        %v3297 = vadd.f32 %v3292, %v3295
        %v3298 = vrot.slane %v3286, 6
        %3299 = vrot.lane.b32.xlu0 %v3298, 126
        %v3300 = vpop.permute.xlu0 %3299
        %v3302 = vadd.f32 %v3297, %v3300
        %v3303 = vrot.slane %v3286, 7
        %3304 = vrot.lane.b32.xlu0 %v3303, 125
        %v3305 = vpop.permute.xlu0 %3304
        %v3307 = vadd.f32 %v3302, %v3305
        %v3308 = vrot.slane %v2789, 1
        %3309 = vrot.lane.b32.xlu0 %v3308, 127
        %v3310 = vpop.permute.xlu0 %3309
        %v3312 = vadd.f32 %v2789, %v3310
        %v3313 = vrot.slane %v2789, 2
        %3314 = vrot.lane.b32.xlu0 %v3313, 126
        %v3315 = vpop.permute.xlu0 %3314
        %v3317 = vadd.f32 %v3312, %v3315
        %v3318 = vrot.slane %v2789, 3
        %3319 = vrot.lane.b32.xlu0 %v3318, 125
        %v3320 = vpop.permute.xlu0 %3319
        %v3322 = vadd.f32 %v3317, %v3320
        %v3324 = vrot.slane %v3036, 4
        %v3326 = vadd.f32 %v3322, %v3324
        %v3327 = vrot.slane %v3036, 5
        %3328 = vrot.lane.b32.xlu0 %v3327, 127
        %v3329 = vpop.permute.xlu0 %3328
        %v3331 = vadd.f32 %v3326, %v3329
        %v3332 = vrot.slane %v3036, 6
        %3333 = vrot.lane.b32.xlu0 %v3332, 126
        %v3334 = vpop.permute.xlu0 %3333
        %v3336 = vadd.f32 %v3331, %v3334
        %v3337 = vrot.slane %v3036, 7
        %3338 = vrot.lane.b32.xlu0 %v3337, 125
        %v3339 = vpop.permute.xlu0 %3338
        %v3341 = vadd.f32 %v3336, %v3339
        %v3342 = vadd.f32 %v3341, %v3286
        %v3343 = vrot.slane %v3286, 1
        %3344 = vrot.lane.b32.xlu0 %v3343, 127
        %v3345 = vpop.permute.xlu0 %3344
        %v3347 = vadd.f32 %v3342, %v3345
        %v3348 = vrot.slane %v3286, 2
        %3349 = vrot.lane.b32.xlu0 %v3348, 126
        %v3350 = vpop.permute.xlu0 %3349
        %v3352 = vadd.f32 %v3347, %v3350
        %v3353 = vrot.slane %v3286, 3
        %3354 = vrot.lane.b32.xlu0 %v3353, 125
        %v3355 = vpop.permute.xlu0 %3354
        %v3357 = vadd.f32 %v3352, %v3355
        %3358 = vrot.lane.b32.xlu0 %v2402, 64
        %v3359 = vpop.permute.xlu0 %3358
        %3360 = vrot.lane.b32.xlu0 %v2403, 64
        %v3361 = vpop.permute.xlu0 %3360
        %3362 = vrot.lane.b32.xlu0 %v2404, 64
        %v3363 = vpop.permute.xlu0 %3362
        %3364 = vrot.lane.b32.xlu0 %v2405, 64
        %v3365 = vpop.permute.xlu0 %3364
        %3366 = vrot.lane.b32.xlu0 %v2406, 64
        %v3367 = vpop.permute.xlu0 %3366
        %3368 = vrot.lane.b32.xlu0 %v2407, 64
        %v3369 = vpop.permute.xlu0 %3368
        %3370 = vrot.lane.b32.xlu0 %v2408, 64
        %v3371 = vpop.permute.xlu0 %3370
        %3372 = vrot.lane.b32.xlu0 %v2409, 64
        %v3373 = vpop.permute.xlu0 %3372
        %3374 = vrot.lane.b32.xlu0 %v2410, 64
        %v3375 = vpop.permute.xlu0 %3374
        %3376 = vrot.lane.b32.xlu0 %v2411, 64
        %v3377 = vpop.permute.xlu0 %3376
        %3378 = vrot.lane.b32.xlu0 %v2412, 64
        %v3379 = vpop.permute.xlu0 %3378
        %3380 = vrot.lane.b32.xlu0 %v2413, 64
        %v3381 = vpop.permute.xlu0 %3380
        %3382 = vrot.lane.b32.xlu0 %v2414, 64
        %v3383 = vpop.permute.xlu0 %3382
        %3384 = vrot.lane.b32.xlu0 %v2415, 64
        %v3385 = vpop.permute.xlu0 %3384
        %3386 = vrot.lane.b32.xlu0 %v2416, 64
        %v3387 = vpop.permute.xlu0 %3386
        %3388 = vrot.lane.b32.xlu0 %v2417, 64
        %v3389 = vpop.permute.xlu0 %3388
        %3390 = vrot.lane.b32.xlu0 %v2418, 64
        %v3391 = vpop.permute.xlu0 %3390
        %3392 = vrot.lane.b32.xlu0 %v2419, 64
        %v3393 = vpop.permute.xlu0 %3392
        %3394 = vrot.lane.b32.xlu0 %v2420, 64
        %v3395 = vpop.permute.xlu0 %3394
        %3396 = vrot.lane.b32.xlu0 %v2421, 64
        %v3397 = vpop.permute.xlu0 %3396
        %3398 = vrot.lane.b32.xlu0 %v2422, 64
        %v3399 = vpop.permute.xlu0 %3398
        %3400 = vrot.lane.b32.xlu0 %v2423, 64
        %v3401 = vpop.permute.xlu0 %3400
        %3402 = vrot.lane.b32.xlu0 %v2424, 64
        %v3403 = vpop.permute.xlu0 %3402
        %3404 = vrot.lane.b32.xlu0 %v2425, 64
        %v3405 = vpop.permute.xlu0 %3404
        %3406 = vrot.lane.b32.xlu0 %v2426, 64
        %v3407 = vpop.permute.xlu0 %3406
        %3408 = vrot.lane.b32.xlu0 %v2427, 64
        %v3409 = vpop.permute.xlu0 %3408
        %3410 = vrot.lane.b32.xlu0 %v2428, 64
        %v3411 = vpop.permute.xlu0 %3410
        %3412 = vrot.lane.b32.xlu0 %v2429, 64
        %v3413 = vpop.permute.xlu0 %3412
        %3414 = vrot.lane.b32.xlu0 %v2430, 64
        %v3415 = vpop.permute.xlu0 %3414
        %3416 = vrot.lane.b32.xlu0 %v2431, 64
        %v3417 = vpop.permute.xlu0 %3416
        %3418 = vrot.lane.b32.xlu0 %v2432, 64
        %v3419 = vpop.permute.xlu0 %3418
        %3420 = vrot.lane.b32.xlu0 %v2433, 64
        %v3421 = vpop.permute.xlu0 %3420
        %3454 = vmatprep.subr.bf16.mxu0 0
        %3455 = vmatpush1.bf16.msra.mxu0 %v3373
        %3456 = vmatprep.subr.bf16.mxu0 0
        %3457 = vmatpush1.bf16.msra.mxu0 %v3371
        %3458 = vmatprep.subr.bf16.mxu0 0
        %3459 = vmatpush1.bf16.msra.mxu0 %v3369
        %3460 = vmatprep.subr.bf16.mxu0 0
        %3461 = vmatpush1.bf16.msra.mxu0 %v3367
        %3462 = vmatprep.subr.bf16.mxu0 0
        %3463 = vmatpush1.bf16.msra.mxu0 %v3365
        %3464 = vmatprep.subr.bf16.mxu0 0
        %3465 = vmatpush1.bf16.msra.mxu0 %v3363
        %3466 = vmatprep.subr.bf16.mxu0 0
        %3467 = vmatpush1.bf16.msra.mxu0 %v3361
        %3468 = vmatprep.subr.bf16.mxu0 0
        %3469 = vmatpush1.bf16.msra.mxu0 %v3359
        %3470 = vmatprep.subr.bf16.mxu0 0
        %3471 = vmatpush2.bf16.msra.mxu0 %v3389
        %3472 = vmatprep.subr.bf16.mxu0 0
        %3473 = vmatpush2.bf16.msra.mxu0 %v3387
        %3474 = vmatprep.subr.bf16.mxu0 0
        %3475 = vmatpush2.bf16.msra.mxu0 %v3385
        %3476 = vmatprep.subr.bf16.mxu0 0
        %3477 = vmatpush2.bf16.msra.mxu0 %v3383
        %3478 = vmatprep.subr.bf16.mxu0 0
        %3479 = vmatpush2.bf16.msra.mxu0 %v3381
        %3480 = vmatprep.subr.bf16.mxu0 0
        %3481 = vmatpush2.bf16.msra.mxu0 %v3379
        %3482 = vmatprep.subr.bf16.mxu0 0
        %3483 = vmatpush2.bf16.msra.mxu0 %v3377
        %3484 = vmatprep.subr.bf16.mxu0 0
        %3485 = vmatpush2.bf16.msra.mxu0 %v3375
        %3486 = vmatprep.mubr.bf16.mxu0 %v290
        %3487 = vmatmul.mubr.bf16.gmra.mxu0 %v289
        %v3488 = vpop.f32.mrf.mxu0
        %v3489 = vadd.f32 0.0, %v3488
        %v3490 = vpop.f32.mrf.mxu0
        %v3491 = vpop.f32.mrf.mxu0
        %v3492 = vadd.f32 0.0, %v3491
        %v3493 = vpop.f32.mrf.mxu0
        %3494 = vdwg.mxu0
        %3495 = vmatprep.subr.bf16.mxu0 0
        %3496 = vmatpush1.bf16.msra.mxu0 %v3405
        %3497 = vmatprep.subr.bf16.mxu0 0
        %3498 = vmatpush1.bf16.msra.mxu0 %v3403
        %3499 = vmatprep.subr.bf16.mxu0 0
        %3500 = vmatpush1.bf16.msra.mxu0 %v3401
        %3501 = vmatprep.subr.bf16.mxu0 0
        %3502 = vmatpush1.bf16.msra.mxu0 %v3399
        %3503 = vmatprep.subr.bf16.mxu0 0
        %3504 = vmatpush1.bf16.msra.mxu0 %v3397
        %3505 = vmatprep.subr.bf16.mxu0 0
        %3506 = vmatpush1.bf16.msra.mxu0 %v3395
        %3507 = vmatprep.subr.bf16.mxu0 0
        %3508 = vmatpush1.bf16.msra.mxu0 %v3393
        %3509 = vmatprep.subr.bf16.mxu0 0
        %3510 = vmatpush1.bf16.msra.mxu0 %v3391
        %3511 = vmatprep.subr.bf16.mxu0 0
        %3512 = vmatpush2.bf16.msra.mxu0 %v3421
        %3513 = vmatprep.subr.bf16.mxu0 0
        %3514 = vmatpush2.bf16.msra.mxu0 %v3419
        %3515 = vmatprep.subr.bf16.mxu0 0
        %3516 = vmatpush2.bf16.msra.mxu0 %v3417
        %3517 = vmatprep.subr.bf16.mxu0 0
        %3518 = vmatpush2.bf16.msra.mxu0 %v3415
        %3519 = vmatprep.subr.bf16.mxu0 0
        %3520 = vmatpush2.bf16.msra.mxu0 %v3413
        %3521 = vmatprep.subr.bf16.mxu0 0
        %3522 = vmatpush2.bf16.msra.mxu0 %v3411
        %3523 = vmatprep.subr.bf16.mxu0 0
        %3524 = vmatpush2.bf16.msra.mxu0 %v3409
        %3525 = vmatprep.subr.bf16.mxu0 0
        %3526 = vmatpush2.bf16.msra.mxu0 %v3407
        %3527 = vmatprep.mubr.bf16.mxu0 %v292
        %3528 = vmatmul.mubr.bf16.gmra.mxu0 %v291
        %v3529 = vpop.f32.mrf.mxu0
        %v3530 = vadd.f32 %v3489, %v3529
        %v3531 = vpop.f32.mrf.mxu0
        %v3532 = vpop.f32.mrf.mxu0
        %v3533 = vadd.f32 %v3492, %v3532
        %v3534 = vpop.f32.mrf.mxu0
        %3535 = vdwg.mxu0
        %v3537 = vrot.slane %v3533, 4
        %v3539 = vadd.f32 %v3357, %v3537
        %v3540 = vrot.slane %v3533, 5
        %3541 = vrot.lane.b32.xlu0 %v3540, 127
        %v3542 = vpop.permute.xlu0 %3541
        %v3544 = vadd.f32 %v3539, %v3542
        %v3545 = vrot.slane %v3533, 6
        %3546 = vrot.lane.b32.xlu0 %v3545, 126
        %v3547 = vpop.permute.xlu0 %3546
        %v3549 = vadd.f32 %v3544, %v3547
        %v3550 = vrot.slane %v3533, 7
        %3551 = vrot.lane.b32.xlu0 %v3550, 125
        %v3552 = vpop.permute.xlu0 %3551
        %v3554 = vadd.f32 %v3549, %v3552
        %v3555 = vrot.slane %v3036, 1
        %3556 = vrot.lane.b32.xlu0 %v3555, 127
        %v3557 = vpop.permute.xlu0 %3556
        %v3559 = vadd.f32 %v3036, %v3557
        %v3560 = vrot.slane %v3036, 2
        %3561 = vrot.lane.b32.xlu0 %v3560, 126
        %v3562 = vpop.permute.xlu0 %3561
        %v3564 = vadd.f32 %v3559, %v3562
        %v3565 = vrot.slane %v3036, 3
        %3566 = vrot.lane.b32.xlu0 %v3565, 125
        %v3567 = vpop.permute.xlu0 %3566
        %v3569 = vadd.f32 %v3564, %v3567
        %v3571 = vrot.slane %v3283, 4
        %v3573 = vadd.f32 %v3569, %v3571
        %v3574 = vrot.slane %v3283, 5
        %3575 = vrot.lane.b32.xlu0 %v3574, 127
        %v3576 = vpop.permute.xlu0 %3575
        %v3578 = vadd.f32 %v3573, %v3576
        %v3579 = vrot.slane %v3283, 6
        %3580 = vrot.lane.b32.xlu0 %v3579, 126
        %v3581 = vpop.permute.xlu0 %3580
        %v3583 = vadd.f32 %v3578, %v3581
        %v3584 = vrot.slane %v3283, 7
        %3585 = vrot.lane.b32.xlu0 %v3584, 125
        %v3586 = vpop.permute.xlu0 %3585
        %v3588 = vadd.f32 %v3583, %v3586
        %v3589 = vadd.f32 %v3588, %v3533
        %v3590 = vrot.slane %v3533, 1
        %3591 = vrot.lane.b32.xlu0 %v3590, 127
        %v3592 = vpop.permute.xlu0 %3591
        %v3594 = vadd.f32 %v3589, %v3592
        %v3595 = vrot.slane %v3533, 2
        %3596 = vrot.lane.b32.xlu0 %v3595, 126
        %v3597 = vpop.permute.xlu0 %3596
        %v3599 = vadd.f32 %v3594, %v3597
        %v3600 = vrot.slane %v3533, 3
        %3601 = vrot.lane.b32.xlu0 %v3600, 125
        %v3602 = vpop.permute.xlu0 %3601
        %v3604 = vadd.f32 %v3599, %v3602
        %3605 = vrot.lane.b32.xlu0 %v2402, 48
        %v3606 = vpop.permute.xlu0 %3605
        %3607 = vrot.lane.b32.xlu0 %v2403, 48
        %v3608 = vpop.permute.xlu0 %3607
        %3609 = vrot.lane.b32.xlu0 %v2404, 48
        %v3610 = vpop.permute.xlu0 %3609
        %3611 = vrot.lane.b32.xlu0 %v2405, 48
        %v3612 = vpop.permute.xlu0 %3611
        %3613 = vrot.lane.b32.xlu0 %v2406, 48
        %v3614 = vpop.permute.xlu0 %3613
        %3615 = vrot.lane.b32.xlu0 %v2407, 48
        %v3616 = vpop.permute.xlu0 %3615
        %3617 = vrot.lane.b32.xlu0 %v2408, 48
        %v3618 = vpop.permute.xlu0 %3617
        %3619 = vrot.lane.b32.xlu0 %v2409, 48
        %v3620 = vpop.permute.xlu0 %3619
        %3621 = vrot.lane.b32.xlu0 %v2410, 48
        %v3622 = vpop.permute.xlu0 %3621
        %3623 = vrot.lane.b32.xlu0 %v2411, 48
        %v3624 = vpop.permute.xlu0 %3623
        %3625 = vrot.lane.b32.xlu0 %v2412, 48
        %v3626 = vpop.permute.xlu0 %3625
        %3627 = vrot.lane.b32.xlu0 %v2413, 48
        %v3628 = vpop.permute.xlu0 %3627
        %3629 = vrot.lane.b32.xlu0 %v2414, 48
        %v3630 = vpop.permute.xlu0 %3629
        %3631 = vrot.lane.b32.xlu0 %v2415, 48
        %v3632 = vpop.permute.xlu0 %3631
        %3633 = vrot.lane.b32.xlu0 %v2416, 48
        %v3634 = vpop.permute.xlu0 %3633
        %3635 = vrot.lane.b32.xlu0 %v2417, 48
        %v3636 = vpop.permute.xlu0 %3635
        %3637 = vrot.lane.b32.xlu0 %v2418, 48
        %v3638 = vpop.permute.xlu0 %3637
        %3639 = vrot.lane.b32.xlu0 %v2419, 48
        %v3640 = vpop.permute.xlu0 %3639
        %3641 = vrot.lane.b32.xlu0 %v2420, 48
        %v3642 = vpop.permute.xlu0 %3641
        %3643 = vrot.lane.b32.xlu0 %v2421, 48
        %v3644 = vpop.permute.xlu0 %3643
        %3645 = vrot.lane.b32.xlu0 %v2422, 48
        %v3646 = vpop.permute.xlu0 %3645
        %3647 = vrot.lane.b32.xlu0 %v2423, 48
        %v3648 = vpop.permute.xlu0 %3647
        %3649 = vrot.lane.b32.xlu0 %v2424, 48
        %v3650 = vpop.permute.xlu0 %3649
        %3651 = vrot.lane.b32.xlu0 %v2425, 48
        %v3652 = vpop.permute.xlu0 %3651
        %3653 = vrot.lane.b32.xlu0 %v2426, 48
        %v3654 = vpop.permute.xlu0 %3653
        %3655 = vrot.lane.b32.xlu0 %v2427, 48
        %v3656 = vpop.permute.xlu0 %3655
        %3657 = vrot.lane.b32.xlu0 %v2428, 48
        %v3658 = vpop.permute.xlu0 %3657
        %3659 = vrot.lane.b32.xlu0 %v2429, 48
        %v3660 = vpop.permute.xlu0 %3659
        %3661 = vrot.lane.b32.xlu0 %v2430, 48
        %v3662 = vpop.permute.xlu0 %3661
        %3663 = vrot.lane.b32.xlu0 %v2431, 48
        %v3664 = vpop.permute.xlu0 %3663
        %3665 = vrot.lane.b32.xlu0 %v2432, 48
        %v3666 = vpop.permute.xlu0 %3665
        %3667 = vrot.lane.b32.xlu0 %v2433, 48
        %v3668 = vpop.permute.xlu0 %3667
        %3701 = vmatprep.subr.bf16.mxu0 0
        %3702 = vmatpush1.bf16.msra.mxu0 %v3620
        %3703 = vmatprep.subr.bf16.mxu0 0
        %3704 = vmatpush1.bf16.msra.mxu0 %v3618
        %3705 = vmatprep.subr.bf16.mxu0 0
        %3706 = vmatpush1.bf16.msra.mxu0 %v3616
        %3707 = vmatprep.subr.bf16.mxu0 0
        %3708 = vmatpush1.bf16.msra.mxu0 %v3614
        %3709 = vmatprep.subr.bf16.mxu0 0
        %3710 = vmatpush1.bf16.msra.mxu0 %v3612
        %3711 = vmatprep.subr.bf16.mxu0 0
        %3712 = vmatpush1.bf16.msra.mxu0 %v3610
        %3713 = vmatprep.subr.bf16.mxu0 0
        %3714 = vmatpush1.bf16.msra.mxu0 %v3608
        %3715 = vmatprep.subr.bf16.mxu0 0
        %3716 = vmatpush1.bf16.msra.mxu0 %v3606
        %3717 = vmatprep.subr.bf16.mxu0 0
        %3718 = vmatpush2.bf16.msra.mxu0 %v3636
        %3719 = vmatprep.subr.bf16.mxu0 0
        %3720 = vmatpush2.bf16.msra.mxu0 %v3634
        %3721 = vmatprep.subr.bf16.mxu0 0
        %3722 = vmatpush2.bf16.msra.mxu0 %v3632
        %3723 = vmatprep.subr.bf16.mxu0 0
        %3724 = vmatpush2.bf16.msra.mxu0 %v3630
        %3725 = vmatprep.subr.bf16.mxu0 0
        %3726 = vmatpush2.bf16.msra.mxu0 %v3628
        %3727 = vmatprep.subr.bf16.mxu0 0
        %3728 = vmatpush2.bf16.msra.mxu0 %v3626
        %3729 = vmatprep.subr.bf16.mxu0 0
        %3730 = vmatpush2.bf16.msra.mxu0 %v3624
        %3731 = vmatprep.subr.bf16.mxu0 0
        %3732 = vmatpush2.bf16.msra.mxu0 %v3622
        %3733 = vmatprep.mubr.bf16.mxu0 %v290
        %3734 = vmatmul.mubr.bf16.gmra.mxu0 %v289
        %v3735 = vpop.f32.mrf.mxu0
        %v3736 = vadd.f32 0.0, %v3735
        %v3737 = vpop.f32.mrf.mxu0
        %v3738 = vpop.f32.mrf.mxu0
        %v3739 = vadd.f32 0.0, %v3738
        %v3740 = vpop.f32.mrf.mxu0
        %3741 = vdwg.mxu0
        %3742 = vmatprep.subr.bf16.mxu0 0
        %3743 = vmatpush1.bf16.msra.mxu0 %v3652
        %3744 = vmatprep.subr.bf16.mxu0 0
        %3745 = vmatpush1.bf16.msra.mxu0 %v3650
        %3746 = vmatprep.subr.bf16.mxu0 0
        %3747 = vmatpush1.bf16.msra.mxu0 %v3648
        %3748 = vmatprep.subr.bf16.mxu0 0
        %3749 = vmatpush1.bf16.msra.mxu0 %v3646
        %3750 = vmatprep.subr.bf16.mxu0 0
        %3751 = vmatpush1.bf16.msra.mxu0 %v3644
        %3752 = vmatprep.subr.bf16.mxu0 0
        %3753 = vmatpush1.bf16.msra.mxu0 %v3642
        %3754 = vmatprep.subr.bf16.mxu0 0
        %3755 = vmatpush1.bf16.msra.mxu0 %v3640
        %3756 = vmatprep.subr.bf16.mxu0 0
        %3757 = vmatpush1.bf16.msra.mxu0 %v3638
        %3758 = vmatprep.subr.bf16.mxu0 0
        %3759 = vmatpush2.bf16.msra.mxu0 %v3668
        %3760 = vmatprep.subr.bf16.mxu0 0
        %3761 = vmatpush2.bf16.msra.mxu0 %v3666
        %3762 = vmatprep.subr.bf16.mxu0 0
        %3763 = vmatpush2.bf16.msra.mxu0 %v3664
        %3764 = vmatprep.subr.bf16.mxu0 0
        %3765 = vmatpush2.bf16.msra.mxu0 %v3662
        %3766 = vmatprep.subr.bf16.mxu0 0
        %3767 = vmatpush2.bf16.msra.mxu0 %v3660
        %3768 = vmatprep.subr.bf16.mxu0 0
        %3769 = vmatpush2.bf16.msra.mxu0 %v3658
        %3770 = vmatprep.subr.bf16.mxu0 0
        %3771 = vmatpush2.bf16.msra.mxu0 %v3656
        %3772 = vmatprep.subr.bf16.mxu0 0
        %3773 = vmatpush2.bf16.msra.mxu0 %v3654
        %3774 = vmatprep.mubr.bf16.mxu0 %v292
        %3775 = vmatmul.mubr.bf16.gmra.mxu0 %v291
        %v3776 = vpop.f32.mrf.mxu0
        %v3777 = vadd.f32 %v3736, %v3776
        %v3778 = vpop.f32.mrf.mxu0
        %v3779 = vpop.f32.mrf.mxu0
        %v3780 = vadd.f32 %v3739, %v3779
        %v3781 = vpop.f32.mrf.mxu0
        %3782 = vdwg.mxu0
        %v3784 = vrot.slane %v3780, 4
        %v3786 = vadd.f32 %v3604, %v3784
        %v3787 = vrot.slane %v3780, 5
        %3788 = vrot.lane.b32.xlu0 %v3787, 127
        %v3789 = vpop.permute.xlu0 %3788
        %v3791 = vadd.f32 %v3786, %v3789
        %v3792 = vrot.slane %v3780, 6
        %3793 = vrot.lane.b32.xlu0 %v3792, 126
        %v3794 = vpop.permute.xlu0 %3793
        %v3796 = vadd.f32 %v3791, %v3794
        %v3797 = vrot.slane %v3780, 7
        %3798 = vrot.lane.b32.xlu0 %v3797, 125
        %v3799 = vpop.permute.xlu0 %3798
        %v3801 = vadd.f32 %v3796, %v3799
        %v3802 = vrot.slane %v3283, 1
        %3803 = vrot.lane.b32.xlu0 %v3802, 127
        %v3804 = vpop.permute.xlu0 %3803
        %v3806 = vadd.f32 %v3283, %v3804
        %v3807 = vrot.slane %v3283, 2
        %3808 = vrot.lane.b32.xlu0 %v3807, 126
        %v3809 = vpop.permute.xlu0 %3808
        %v3811 = vadd.f32 %v3806, %v3809
        %v3812 = vrot.slane %v3283, 3
        %3813 = vrot.lane.b32.xlu0 %v3812, 125
        %v3814 = vpop.permute.xlu0 %3813
        %v3816 = vadd.f32 %v3811, %v3814
        %v3818 = vrot.slane %v3530, 4
        %v3820 = vadd.f32 %v3816, %v3818
        %v3821 = vrot.slane %v3530, 5
        %3822 = vrot.lane.b32.xlu0 %v3821, 127
        %v3823 = vpop.permute.xlu0 %3822
        %v3825 = vadd.f32 %v3820, %v3823
        %v3826 = vrot.slane %v3530, 6
        %3827 = vrot.lane.b32.xlu0 %v3826, 126
        %v3828 = vpop.permute.xlu0 %3827
        %v3830 = vadd.f32 %v3825, %v3828
        %v3831 = vrot.slane %v3530, 7
        %3832 = vrot.lane.b32.xlu0 %v3831, 125
        %v3833 = vpop.permute.xlu0 %3832
        %v3835 = vadd.f32 %v3830, %v3833
        %v3836 = vadd.f32 %v3835, %v3780
        %v3837 = vrot.slane %v3780, 1
        %3838 = vrot.lane.b32.xlu0 %v3837, 127
        %v3839 = vpop.permute.xlu0 %3838
        %v3841 = vadd.f32 %v3836, %v3839
        %v3842 = vrot.slane %v3780, 2
        %3843 = vrot.lane.b32.xlu0 %v3842, 126
        %v3844 = vpop.permute.xlu0 %3843
        %v3846 = vadd.f32 %v3841, %v3844
        %v3847 = vrot.slane %v3780, 3
        %3848 = vrot.lane.b32.xlu0 %v3847, 125
        %v3849 = vpop.permute.xlu0 %3848
        %v3851 = vadd.f32 %v3846, %v3849
        %3852 = vrot.lane.b32.xlu0 %v2402, 32
        %v3853 = vpop.permute.xlu0 %3852
        %3854 = vrot.lane.b32.xlu0 %v2403, 32
        %v3855 = vpop.permute.xlu0 %3854
        %3856 = vrot.lane.b32.xlu0 %v2404, 32
        %v3857 = vpop.permute.xlu0 %3856
        %3858 = vrot.lane.b32.xlu0 %v2405, 32
        %v3859 = vpop.permute.xlu0 %3858
        %3860 = vrot.lane.b32.xlu0 %v2406, 32
        %v3861 = vpop.permute.xlu0 %3860
        %3862 = vrot.lane.b32.xlu0 %v2407, 32
        %v3863 = vpop.permute.xlu0 %3862
        %3864 = vrot.lane.b32.xlu0 %v2408, 32
        %v3865 = vpop.permute.xlu0 %3864
        %3866 = vrot.lane.b32.xlu0 %v2409, 32
        %v3867 = vpop.permute.xlu0 %3866
        %3868 = vrot.lane.b32.xlu0 %v2410, 32
        %v3869 = vpop.permute.xlu0 %3868
        %3870 = vrot.lane.b32.xlu0 %v2411, 32
        %v3871 = vpop.permute.xlu0 %3870
        %3872 = vrot.lane.b32.xlu0 %v2412, 32
        %v3873 = vpop.permute.xlu0 %3872
        %3874 = vrot.lane.b32.xlu0 %v2413, 32
        %v3875 = vpop.permute.xlu0 %3874
        %3876 = vrot.lane.b32.xlu0 %v2414, 32
        %v3877 = vpop.permute.xlu0 %3876
        %3878 = vrot.lane.b32.xlu0 %v2415, 32
        %v3879 = vpop.permute.xlu0 %3878
        %3880 = vrot.lane.b32.xlu0 %v2416, 32
        %v3881 = vpop.permute.xlu0 %3880
        %3882 = vrot.lane.b32.xlu0 %v2417, 32
        %v3883 = vpop.permute.xlu0 %3882
        %3884 = vrot.lane.b32.xlu0 %v2418, 32
        %v3885 = vpop.permute.xlu0 %3884
        %3886 = vrot.lane.b32.xlu0 %v2419, 32
        %v3887 = vpop.permute.xlu0 %3886
        %3888 = vrot.lane.b32.xlu0 %v2420, 32
        %v3889 = vpop.permute.xlu0 %3888
        %3890 = vrot.lane.b32.xlu0 %v2421, 32
        %v3891 = vpop.permute.xlu0 %3890
        %3892 = vrot.lane.b32.xlu0 %v2422, 32
        %v3893 = vpop.permute.xlu0 %3892
        %3894 = vrot.lane.b32.xlu0 %v2423, 32
        %v3895 = vpop.permute.xlu0 %3894
        %3896 = vrot.lane.b32.xlu0 %v2424, 32
        %v3897 = vpop.permute.xlu0 %3896
        %3898 = vrot.lane.b32.xlu0 %v2425, 32
        %v3899 = vpop.permute.xlu0 %3898
        %3900 = vrot.lane.b32.xlu0 %v2426, 32
        %v3901 = vpop.permute.xlu0 %3900
        %3902 = vrot.lane.b32.xlu0 %v2427, 32
        %v3903 = vpop.permute.xlu0 %3902
        %3904 = vrot.lane.b32.xlu0 %v2428, 32
        %v3905 = vpop.permute.xlu0 %3904
        %3906 = vrot.lane.b32.xlu0 %v2429, 32
        %v3907 = vpop.permute.xlu0 %3906
        %3908 = vrot.lane.b32.xlu0 %v2430, 32
        %v3909 = vpop.permute.xlu0 %3908
        %3910 = vrot.lane.b32.xlu0 %v2431, 32
        %v3911 = vpop.permute.xlu0 %3910
        %3912 = vrot.lane.b32.xlu0 %v2432, 32
        %v3913 = vpop.permute.xlu0 %3912
        %3914 = vrot.lane.b32.xlu0 %v2433, 32
        %v3915 = vpop.permute.xlu0 %3914
        %3948 = vmatprep.subr.bf16.mxu0 0
        %3949 = vmatpush1.bf16.msra.mxu0 %v3867
        %3950 = vmatprep.subr.bf16.mxu0 0
        %3951 = vmatpush1.bf16.msra.mxu0 %v3865
        %3952 = vmatprep.subr.bf16.mxu0 0
        %3953 = vmatpush1.bf16.msra.mxu0 %v3863
        %3954 = vmatprep.subr.bf16.mxu0 0
        %3955 = vmatpush1.bf16.msra.mxu0 %v3861
        %3956 = vmatprep.subr.bf16.mxu0 0
        %3957 = vmatpush1.bf16.msra.mxu0 %v3859
        %3958 = vmatprep.subr.bf16.mxu0 0
        %3959 = vmatpush1.bf16.msra.mxu0 %v3857
        %3960 = vmatprep.subr.bf16.mxu0 0
        %3961 = vmatpush1.bf16.msra.mxu0 %v3855
        %3962 = vmatprep.subr.bf16.mxu0 0
        %3963 = vmatpush1.bf16.msra.mxu0 %v3853
        %3964 = vmatprep.subr.bf16.mxu0 0
        %3965 = vmatpush2.bf16.msra.mxu0 %v3883
        %3966 = vmatprep.subr.bf16.mxu0 0
        %3967 = vmatpush2.bf16.msra.mxu0 %v3881
        %3968 = vmatprep.subr.bf16.mxu0 0
        %3969 = vmatpush2.bf16.msra.mxu0 %v3879
        %3970 = vmatprep.subr.bf16.mxu0 0
        %3971 = vmatpush2.bf16.msra.mxu0 %v3877
        %3972 = vmatprep.subr.bf16.mxu0 0
        %3973 = vmatpush2.bf16.msra.mxu0 %v3875
        %3974 = vmatprep.subr.bf16.mxu0 0
        %3975 = vmatpush2.bf16.msra.mxu0 %v3873
        %3976 = vmatprep.subr.bf16.mxu0 0
        %3977 = vmatpush2.bf16.msra.mxu0 %v3871
        %3978 = vmatprep.subr.bf16.mxu0 0
        %3979 = vmatpush2.bf16.msra.mxu0 %v3869
        %3980 = vmatprep.mubr.bf16.mxu0 %v290
        %3981 = vmatmul.mubr.bf16.gmra.mxu0 %v289
        %v3982 = vpop.f32.mrf.mxu0
        %v3983 = vpop.f32.mrf.mxu0
        %v3984 = vpop.f32.mrf.mxu0
        %v3985 = vadd.f32 0.0, %v3984
        %v3986 = vpop.f32.mrf.mxu0
        %3987 = vdwg.mxu0
        %3988 = vmatprep.subr.bf16.mxu0 0
        %3989 = vmatpush1.bf16.msra.mxu0 %v3899
        %3990 = vmatprep.subr.bf16.mxu0 0
        %3991 = vmatpush1.bf16.msra.mxu0 %v3897
        %3992 = vmatprep.subr.bf16.mxu0 0
        %3993 = vmatpush1.bf16.msra.mxu0 %v3895
        %3994 = vmatprep.subr.bf16.mxu0 0
        %3995 = vmatpush1.bf16.msra.mxu0 %v3893
        %3996 = vmatprep.subr.bf16.mxu0 0
        %3997 = vmatpush1.bf16.msra.mxu0 %v3891
        %3998 = vmatprep.subr.bf16.mxu0 0
        %3999 = vmatpush1.bf16.msra.mxu0 %v3889
        %4000 = vmatprep.subr.bf16.mxu0 0
        %4001 = vmatpush1.bf16.msra.mxu0 %v3887
        %4002 = vmatprep.subr.bf16.mxu0 0
        %4003 = vmatpush1.bf16.msra.mxu0 %v3885
        %4004 = vmatprep.subr.bf16.mxu0 0
        %4005 = vmatpush2.bf16.msra.mxu0 %v3915
        %4006 = vmatprep.subr.bf16.mxu0 0
        %4007 = vmatpush2.bf16.msra.mxu0 %v3913
        %4008 = vmatprep.subr.bf16.mxu0 0
        %4009 = vmatpush2.bf16.msra.mxu0 %v3911
        %4010 = vmatprep.subr.bf16.mxu0 0
        %4011 = vmatpush2.bf16.msra.mxu0 %v3909
        %4012 = vmatprep.subr.bf16.mxu0 0
        %4013 = vmatpush2.bf16.msra.mxu0 %v3907
        %4014 = vmatprep.subr.bf16.mxu0 0
        %4015 = vmatpush2.bf16.msra.mxu0 %v3905
        %4016 = vmatprep.subr.bf16.mxu0 0
        %4017 = vmatpush2.bf16.msra.mxu0 %v3903
        %4018 = vmatprep.subr.bf16.mxu0 0
        %4019 = vmatpush2.bf16.msra.mxu0 %v3901
        %4020 = vmatprep.mubr.bf16.mxu0 %v292
        %4021 = vmatmul.mubr.bf16.gmra.mxu0 %v291
        %v4022 = vpop.f32.mrf.mxu0
        %v4023 = vpop.f32.mrf.mxu0
        %v4024 = vpop.f32.mrf.mxu0
        %v4025 = vadd.f32 %v3985, %v4024
        %v4026 = vpop.f32.mrf.mxu0
        %4027 = vdwg.mxu0
        %v4029 = vrot.slane %v4025, 4
        %v4031 = vadd.f32 %v3851, %v4029
        %v4032 = vrot.slane %v4025, 5
        %4033 = vrot.lane.b32.xlu0 %v4032, 127
        %v4034 = vpop.permute.xlu0 %4033
        %v4036 = vadd.f32 %v4031, %v4034
        %v4037 = vrot.slane %v4025, 6
        %4038 = vrot.lane.b32.xlu0 %v4037, 126
        %v4039 = vpop.permute.xlu0 %4038
        %v4041 = vadd.f32 %v4036, %v4039
        %v4042 = vrot.slane %v4025, 7
        %4043 = vrot.lane.b32.xlu0 %v4042, 125
        %v4044 = vpop.permute.xlu0 %4043
        %v4046 = vadd.f32 %v4041, %v4044
        %v4047 = vrot.slane %v3530, 1
        %4048 = vrot.lane.b32.xlu0 %v4047, 127
        %v4049 = vpop.permute.xlu0 %4048
        %v4051 = vadd.f32 %v3530, %v4049
        %v4052 = vrot.slane %v3530, 2
        %4053 = vrot.lane.b32.xlu0 %v4052, 126
        %v4054 = vpop.permute.xlu0 %4053
        %v4056 = vadd.f32 %v4051, %v4054
        %v4057 = vrot.slane %v3530, 3
        %4058 = vrot.lane.b32.xlu0 %v4057, 125
        %v4059 = vpop.permute.xlu0 %4058
        %v4061 = vadd.f32 %v4056, %v4059
        %v4063 = vrot.slane %v3777, 4
        %v4065 = vadd.f32 %v4061, %v4063
        %v4066 = vrot.slane %v3777, 5
        %4067 = vrot.lane.b32.xlu0 %v4066, 127
        %v4068 = vpop.permute.xlu0 %4067
        %v4070 = vadd.f32 %v4065, %v4068
        %v4071 = vrot.slane %v3777, 6
        %4072 = vrot.lane.b32.xlu0 %v4071, 126
        %v4073 = vpop.permute.xlu0 %4072
        %v4075 = vadd.f32 %v4070, %v4073
        %v4076 = vrot.slane %v3777, 7
        %4077 = vrot.lane.b32.xlu0 %v4076, 125
        %v4078 = vpop.permute.xlu0 %4077
        %v4080 = vadd.f32 %v4075, %v4078
        %v4081 = vadd.f32 %v4080, %v4025
        %v4082 = vrot.slane %v4025, 1
        %4083 = vrot.lane.b32.xlu0 %v4082, 127
        %v4084 = vpop.permute.xlu0 %4083
        %v4086 = vadd.f32 %v4081, %v4084
        %v4087 = vrot.slane %v4025, 2
        %4088 = vrot.lane.b32.xlu0 %v4087, 126
        %v4089 = vpop.permute.xlu0 %4088
        %v4091 = vadd.f32 %v4086, %v4089
        %v4092 = vrot.slane %v4025, 3
        %4093 = vrot.lane.b32.xlu0 %v4092, 125
        %v4094 = vpop.permute.xlu0 %4093
        %v4096 = vadd.f32 %v4091, %v4094
        %4097 = vrot.lane.b32.xlu0 %v2402, 16
        %v4098 = vpop.permute.xlu0 %4097
        %4099 = vrot.lane.b32.xlu0 %v2403, 16
        %v4100 = vpop.permute.xlu0 %4099
        %4101 = vrot.lane.b32.xlu0 %v2404, 16
        %v4102 = vpop.permute.xlu0 %4101
        %4103 = vrot.lane.b32.xlu0 %v2405, 16
        %v4104 = vpop.permute.xlu0 %4103
        %4105 = vrot.lane.b32.xlu0 %v2406, 16
        %v4106 = vpop.permute.xlu0 %4105
        %4107 = vrot.lane.b32.xlu0 %v2407, 16
        %v4108 = vpop.permute.xlu0 %4107
        %4109 = vrot.lane.b32.xlu0 %v2408, 16
        %v4110 = vpop.permute.xlu0 %4109
        %4111 = vrot.lane.b32.xlu0 %v2409, 16
        %v4112 = vpop.permute.xlu0 %4111
        %4113 = vrot.lane.b32.xlu0 %v2410, 16
        %v4114 = vpop.permute.xlu0 %4113
        %4115 = vrot.lane.b32.xlu0 %v2411, 16
        %v4116 = vpop.permute.xlu0 %4115
        %4117 = vrot.lane.b32.xlu0 %v2412, 16
        %v4118 = vpop.permute.xlu0 %4117
        %4119 = vrot.lane.b32.xlu0 %v2413, 16
        %v4120 = vpop.permute.xlu0 %4119
        %4121 = vrot.lane.b32.xlu0 %v2414, 16
        %v4122 = vpop.permute.xlu0 %4121
        %4123 = vrot.lane.b32.xlu0 %v2415, 16
        %v4124 = vpop.permute.xlu0 %4123
        %4125 = vrot.lane.b32.xlu0 %v2416, 16
        %v4126 = vpop.permute.xlu0 %4125
        %4127 = vrot.lane.b32.xlu0 %v2417, 16
        %v4128 = vpop.permute.xlu0 %4127
        %4129 = vrot.lane.b32.xlu0 %v2418, 16
        %v4130 = vpop.permute.xlu0 %4129
        %4131 = vrot.lane.b32.xlu0 %v2419, 16
        %v4132 = vpop.permute.xlu0 %4131
        %4133 = vrot.lane.b32.xlu0 %v2420, 16
        %v4134 = vpop.permute.xlu0 %4133
        %4135 = vrot.lane.b32.xlu0 %v2421, 16
        %v4136 = vpop.permute.xlu0 %4135
        %4137 = vrot.lane.b32.xlu0 %v2422, 16
        %v4138 = vpop.permute.xlu0 %4137
        %4139 = vrot.lane.b32.xlu0 %v2423, 16
        %v4140 = vpop.permute.xlu0 %4139
        %4141 = vrot.lane.b32.xlu0 %v2424, 16
        %v4142 = vpop.permute.xlu0 %4141
        %4143 = vrot.lane.b32.xlu0 %v2425, 16
        %v4144 = vpop.permute.xlu0 %4143
        %4145 = vrot.lane.b32.xlu0 %v2426, 16
        %v4146 = vpop.permute.xlu0 %4145
        %4147 = vrot.lane.b32.xlu0 %v2427, 16
        %v4148 = vpop.permute.xlu0 %4147
        %4149 = vrot.lane.b32.xlu0 %v2428, 16
        %v4150 = vpop.permute.xlu0 %4149
        %4151 = vrot.lane.b32.xlu0 %v2429, 16
        %v4152 = vpop.permute.xlu0 %4151
        %4153 = vrot.lane.b32.xlu0 %v2430, 16
        %v4154 = vpop.permute.xlu0 %4153
        %4155 = vrot.lane.b32.xlu0 %v2431, 16
        %v4156 = vpop.permute.xlu0 %4155
        %4157 = vrot.lane.b32.xlu0 %v2432, 16
        %v4158 = vpop.permute.xlu0 %4157
        %4159 = vrot.lane.b32.xlu0 %v2433, 16
        %v4160 = vpop.permute.xlu0 %4159
        %4193 = vmatprep.subr.bf16.mxu0 0
        %4194 = vmatpush1.bf16.msra.mxu0 %v4112
        %4195 = vmatprep.subr.bf16.mxu0 0
        %4196 = vmatpush1.bf16.msra.mxu0 %v4110
        %4197 = vmatprep.subr.bf16.mxu0 0
        %4198 = vmatpush1.bf16.msra.mxu0 %v4108
        %4199 = vmatprep.subr.bf16.mxu0 0
        %4200 = vmatpush1.bf16.msra.mxu0 %v4106
        %4201 = vmatprep.subr.bf16.mxu0 0
        %4202 = vmatpush1.bf16.msra.mxu0 %v4104
        %4203 = vmatprep.subr.bf16.mxu0 0
        %4204 = vmatpush1.bf16.msra.mxu0 %v4102
        %4205 = vmatprep.subr.bf16.mxu0 0
        %4206 = vmatpush1.bf16.msra.mxu0 %v4100
        %4207 = vmatprep.subr.bf16.mxu0 0
        %4208 = vmatpush1.bf16.msra.mxu0 %v4098
        %4209 = vmatprep.subr.bf16.mxu0 0
        %4210 = vmatpush2.bf16.msra.mxu0 %v4128
        %4211 = vmatprep.subr.bf16.mxu0 0
        %4212 = vmatpush2.bf16.msra.mxu0 %v4126
        %4213 = vmatprep.subr.bf16.mxu0 0
        %4214 = vmatpush2.bf16.msra.mxu0 %v4124
        %4215 = vmatprep.subr.bf16.mxu0 0
        %4216 = vmatpush2.bf16.msra.mxu0 %v4122
        %4217 = vmatprep.subr.bf16.mxu0 0
        %4218 = vmatpush2.bf16.msra.mxu0 %v4120
        %4219 = vmatprep.subr.bf16.mxu0 0
        %4220 = vmatpush2.bf16.msra.mxu0 %v4118
        %4221 = vmatprep.subr.bf16.mxu0 0
        %4222 = vmatpush2.bf16.msra.mxu0 %v4116
        %4223 = vmatprep.subr.bf16.mxu0 0
        %4224 = vmatpush2.bf16.msra.mxu0 %v4114
        %4225 = vmatprep.mubr.bf16.mxu0 %v290
        %4226 = vmatmul.mubr.bf16.gmra.mxu0 %v289
        %v4227 = vpop.f32.mrf.mxu0
        %v4228 = vpop.f32.mrf.mxu0
        %v4229 = vpop.f32.mrf.mxu0
        %v4230 = vadd.f32 0.0, %v4229
        %v4231 = vpop.f32.mrf.mxu0
        %4232 = vdwg.mxu0
        %4233 = vmatprep.subr.bf16.mxu0 0
        %4234 = vmatpush1.bf16.msra.mxu0 %v4144
        %4235 = vmatprep.subr.bf16.mxu0 0
        %4236 = vmatpush1.bf16.msra.mxu0 %v4142
        %4237 = vmatprep.subr.bf16.mxu0 0
        %4238 = vmatpush1.bf16.msra.mxu0 %v4140
        %4239 = vmatprep.subr.bf16.mxu0 0
        %4240 = vmatpush1.bf16.msra.mxu0 %v4138
        %4241 = vmatprep.subr.bf16.mxu0 0
        %4242 = vmatpush1.bf16.msra.mxu0 %v4136
        %4243 = vmatprep.subr.bf16.mxu0 0
        %4244 = vmatpush1.bf16.msra.mxu0 %v4134
        %4245 = vmatprep.subr.bf16.mxu0 0
        %4246 = vmatpush1.bf16.msra.mxu0 %v4132
        %4247 = vmatprep.subr.bf16.mxu0 0
        %4248 = vmatpush1.bf16.msra.mxu0 %v4130
        %4249 = vmatprep.subr.bf16.mxu0 0
        %4250 = vmatpush2.bf16.msra.mxu0 %v4160
        %4251 = vmatprep.subr.bf16.mxu0 0
        %4252 = vmatpush2.bf16.msra.mxu0 %v4158
        %4253 = vmatprep.subr.bf16.mxu0 0
        %4254 = vmatpush2.bf16.msra.mxu0 %v4156
        %4255 = vmatprep.subr.bf16.mxu0 0
        %4256 = vmatpush2.bf16.msra.mxu0 %v4154
        %4257 = vmatprep.subr.bf16.mxu0 0
        %4258 = vmatpush2.bf16.msra.mxu0 %v4152
        %4259 = vmatprep.subr.bf16.mxu0 0
        %4260 = vmatpush2.bf16.msra.mxu0 %v4150
        %4261 = vmatprep.subr.bf16.mxu0 0
        %4262 = vmatpush2.bf16.msra.mxu0 %v4148
        %4263 = vmatprep.subr.bf16.mxu0 0
        %4264 = vmatpush2.bf16.msra.mxu0 %v4146
        %4265 = vmatprep.mubr.bf16.mxu0 %v292
        %4266 = vmatmul.mubr.bf16.gmra.mxu0 %v291
        %v4267 = vpop.f32.mrf.mxu0
        %v4268 = vpop.f32.mrf.mxu0
        %v4269 = vpop.f32.mrf.mxu0
        %v4270 = vadd.f32 %v4230, %v4269
        %v4271 = vpop.f32.mrf.mxu0
        %4272 = vdwg.mxu0
        %v4274 = vrot.slane %v4270, 4
        %v4276 = vadd.f32 %v4096, %v4274
        %v4277 = vrot.slane %v4270, 5
        %4278 = vrot.lane.b32.xlu0 %v4277, 127
        %v4279 = vpop.permute.xlu0 %4278
        %v4281 = vadd.f32 %v4276, %v4279
        %v4282 = vrot.slane %v4270, 6
        %4283 = vrot.lane.b32.xlu0 %v4282, 126
        %v4284 = vpop.permute.xlu0 %4283
        %v4286 = vadd.f32 %v4281, %v4284
        %v4287 = vrot.slane %v4270, 7
        %4288 = vrot.lane.b32.xlu0 %v4287, 125
        %v4289 = vpop.permute.xlu0 %4288
        %v4291 = vadd.f32 %v4286, %v4289
        %v4293 = vrot.slane %v1418, 7
        %v4296 = vrot.slane %v1665, 6
        %v4299 = vrot.slane %v1912, 5
        %v4302 = vrot.slane %v2159, 4
        %v4305 = vrot.slane %v2566, 3
        %v4308 = vrot.slane %v2813, 2
        %v4311 = vrot.slane %v3060, 1
        %v4314 = vrot.slane %v3554, 7
        %v4317 = vrot.slane %v3801, 6
        %v4320 = vrot.slane %v4046, 5
        %v4323 = vrot.slane %v4291, 4
        %vm4325 = vcmask 1040384
        %v4326 = vsel %vm4325, %v1171, %v4293
        %vm4327 = vcmask 1041408
        %v4328 = vsel %vm4327, %v4326, %v4296
        %vm4329 = vcmask 1042432
        %v4330 = vsel %vm4329, %v4328, %v4299
        %vm4331 = vcmask 1043456
        %v4332 = vsel %vm4331, %v4330, %v4302
        %vm4333 = vcmask 1044480
        %v4334 = vsel %vm4333, %v4332, %v4305
        %vm4335 = vcmask 1045504
        %v4336 = vsel %vm4335, %v4334, %v4308
        %vm4337 = vcmask 1046528
        %v4338 = vsel %vm4337, %v4336, %v4311
        %v4339 = vsel %vm4325, %v3307, %v4314
        %v4340 = vsel %vm4327, %v4339, %v4317
        %v4341 = vsel %vm4329, %v4340, %v4320
        %v4342 = vsel %vm4331, %v4341, %v4323
        %v4343 = vld [vmem:[#allocation2] sm:$0x1]
        %v4345 = vlaneseq
        %v4346 = vshrl.u32 %v4345, 7
        %v4347 = vsub.s32 0, %v4346
        %v4348 = vrot.slane %v4343, %v4347
        %4349 = vset.pattern.permute.xlu0 0
        %4350 = vperm.xlu0 %4349, %v4348
        %v4351 = vpop.permute.xlu0 %4350
        %v4353 = vadd.f32 %v4338, %v4351
        %v4354 = vadd.f32 %v4342, %v4351
        %vm4355 = vcmask 105472
        %4356 = vst.msk [vmem:[%s207] sm:$0xff] %vm4355, %v4353
        %vm4357 = vcmask 102400
        %4358 = vst.msk [vmem:[%s207 + $0x8] sm:$0x1f] %vm4357, %v4354
        %p4359 = scmp.lt.s32.totalorder %s20, 1
        %s4360 = scalar_select %p4359, %s20, 1
        %s4361 = smul.addr %s4360, 2
        %s4362 = smul.addr %s4361, 8
        %s4363 = scalar_lea.vmem %s3, %s4362
        // Predicated region
        $region41: #{tpu_custom_call.1} parent=31 // pred_check
          %p4364 = pneg %p106
        $region42: #{tpu_custom_call.1} parent=31 // pred_check_branch
          %4366 = sbr.rel (%p4364) target = $region44
        $region43: #{tpu_custom_call.1} parent=31 // pred_region
          _
        $region44: #{tpu_custom_call.1} parent=31 // pred_fallthru
          _
      $region32: #{tpu_custom_call.1} parent=5 // pred_fallthru
        _
      %p4367 = scmp.le.s32.totalorder 2, %s15
      // Predicated region
      $region45: #{tpu_custom_call.1} parent=5 // pred_check
        %p4368 = pneg %p4367
      $region46: #{tpu_custom_call.1} parent=5 // pred_check_branch
        %4370 = sbr.rel (%p4368) target = $region48
      $region47: #{tpu_custom_call.1} parent=5 // pred_region
        %s4371 = ssub.s32 %s15, 2
        // Predicated region
        $region49: #{tpu_custom_call.1} parent=47 // pred_check
          %p4372 = pneg %p112
        $region50: #{tpu_custom_call.1} parent=47 // pred_check_branch
          %4374 = sbr.rel (%p4372) target = $region52
        $region51: #{tpu_custom_call.1} parent=47 // pred_region
          %p4375 = scmp.lt.s32.totalorder %s21, 1
          %s4376 = scalar_select %p4375, %s21, 1
          %s4377 = smul.addr %s4376, 2
          %s4378 = smul.addr %s4377, 8
          %s4379 = scalar_lea.vmem %s3, %s4378
        $region52: #{tpu_custom_call.1} parent=47 // pred_fallthru
          _
      $region48: #{tpu_custom_call.1} parent=5 // pred_fallthru
        _
    $region6: #{tpu_custom_call.1} parent=1 // loop_footer
      %s19 = sadd.s32 1, %s15
    $region7: #{tpu_custom_call.1} parent=1 // loop_footer_branch
      %14 = sbr.rel target = $region3
    $region8: #{tpu_custom_call.1} parent=1 // loop_exit
      _
    %4380 = vsyncpa [#allocation4], 1
    %s4381 = scalar_lea.sflag [#allocation4], 1
    %4382 = vsyncpa %s4381, 1
    %4383 = vsyncpa [#allocation6], 1

</llo_original>
